<compile_context>
chip_gen: v5e
topology: v5e:2x2
jax: 0.10.0
libtpu: 0.0.40
codegen_flags: <defaults>
</compile_context>

<pallas_src>
import jax
import jax.numpy as jnp
from jax import lax
from jax.experimental import pallas as pl
from jax.experimental.pallas import tpu as pltpu


def _project_kernel(src_ref, idx_ref, dlt_ref, x_ref, out_ref):
    """One (row-block, edge-block) step: gather, weight by delta, scatter-add."""
    r_blk = pl.program_id(0)
    e_blk = pl.program_id(1)

    tile_r, _ = out_ref.shape
    n_src = x_ref.shape[0]
    edge_tile = src_ref.shape[1]

    # The output block is resident across the whole edge (reduction) axis:
    # zero it on the first edge block and accumulate directly into it.
    @pl.when(e_blk == 0)
    def _init():
        out_ref[...] = jnp.zeros_like(out_ref)

    # ---- Gather: splat[e, :] = x[src[e], :] via one-hot matmul on the MXU. ----
    src = src_ref[...]                                               # [1, TE] int32
    n_iota = lax.broadcasted_iota(jnp.int32, (n_src, edge_tile), 0)
    gather_t = (src == n_iota).astype(jnp.float32)                   # [N, TE] one-hot^T
    splat = lax.dot_general(                                         # [TE, H]
        gather_t, x_ref[...],
        dimension_numbers=(((0,), (0,)), ((), ())),                  # contract over N
        preferred_element_type=jnp.float32,
        precision=lax.Precision.HIGHEST)

    # ---- Scatter matrix for this row block:
    #      scat[r, e] = sum_k delta[k, e] * (index[k, e] == row_base + r). ----
    row_base = r_blk * tile_r
    idx = idx_ref[...]                                               # [4, TE] int32
    dlt = dlt_ref[...]                                               # [4, TE] f32
    r_iota = lax.broadcasted_iota(jnp.int32, (tile_r, edge_tile), 0) + row_base
    scat = jnp.zeros((tile_r, edge_tile), jnp.float32)
    for k in range(4):                                               # static unroll
        scat = scat + jnp.where(idx[k:k + 1, :] == r_iota, dlt[k:k + 1, :], 0.0)

    # ---- Weighted scatter-add, accumulated in the resident output block. ----
    out_ref[...] += jnp.dot(scat, splat,
                            preferred_element_type=jnp.float32,
                            precision=lax.Precision.HIGHEST)


def project_lat_long_sphere(x, length, index, delta, source_edge_index,
                            sphere_size_lat, sphere_size_long,
                            *, edge_tile=512, row_tile=256):
    """JAX/Pallas equivalent of ProjectLatLongSphere.forward."""
    n_src, hidden = x.shape
    n_edges = source_edge_index.shape[0]
    n_rows = length * sphere_size_lat * sphere_size_long

    x = x.astype(jnp.float32)
    index = index.astype(jnp.int32)
    delta = delta.astype(jnp.float32)
    source_edge_index = source_edge_index.astype(jnp.int32)

    # Pad only the tiny per-edge arrays (padded edges have delta == 0, so they
    # contribute nothing).  The big tensors (x, x_proj) are never copied/padded
    # beyond the row-tile rounding below.
    e_pad = pl.cdiv(n_edges, edge_tile) * edge_tile
    if e_pad != n_edges:
        pad = e_pad - n_edges
        source_edge_index = jnp.pad(source_edge_index, (0, pad))
        index = jnp.pad(index, ((0, 0), (0, pad)))
        delta = jnp.pad(delta, ((0, 0), (0, pad)))
    src2d = source_edge_index.reshape(1, e_pad)       # lane-dense [1, E] block

    # Tile output rows: keeps the resident block small (fits v7x's 64 MiB VMEM
    # for realistic shapes) and gives the "parallel" axis core-level parallelism.
    tile_r = min(row_tile, pl.cdiv(n_rows, 8) * 8)
    r_pad = pl.cdiv(n_rows, tile_r) * tile_r

    grid = (r_pad // tile_r, e_pad // edge_tile)      # (parallel rows, edge reduction)

    x_proj = pl.pallas_call(
        _project_kernel,
        out_shape=jax.ShapeDtypeStruct((r_pad, hidden), jnp.float32),
        grid_spec=pltpu.PrefetchScalarGridSpec(
            num_scalar_prefetch=0,
            grid=grid,
            in_specs=[
                pl.BlockSpec((1, edge_tile), lambda r, e: (0, e)),     # source_edge_index
                pl.BlockSpec((4, edge_tile), lambda r, e: (0, e)),     # index
                pl.BlockSpec((4, edge_tile), lambda r, e: (0, e)),     # delta
                # x is VMEM-resident; constant index_map -> DMA'd once, never refetched.
                pl.BlockSpec((n_src, hidden), lambda r, e: (0, 0)),
            ],
            out_specs=pl.BlockSpec((tile_r, hidden), lambda r, e: (r, 0)),
        ),
        compiler_params=pltpu.CompilerParams(
            # Row blocks are independent (parallel, usable by both v7x TCs);
            # the edge axis is a reduction into the resident output block.
            dimension_semantics=("parallel", "arbitrary"),
            # Tiles are sized so 32 MiB is ample on v5e/v6e/v7x alike.
            vmem_limit_bytes=32 * 1024 * 1024,
        ),
    )(src2d, index, delta, x)

    # Module epilogue (pure layout); lat*long here (32) is not lane-dense, so the
    # transpose stays in XLA rather than in-kernel.
    x_proj = x_proj[:n_rows]
    out = x_proj.reshape(length, sphere_size_lat * sphere_size_long, hidden)
    out = jnp.transpose(out, (0, 2, 1))
    return out.reshape(length, hidden, sphere_size_lat, sphere_size_long)


def project_ref(x, length, index, delta, source_edge_index,
                sphere_size_lat, sphere_size_long):
    """Pure-JAX reference matching the PyTorch forward exactly."""
    n_rows = length * sphere_size_lat * sphere_size_long
    hidden = x.shape[1]
    splat = x[source_edge_index]                                  # [E, H]
    x_proj = jnp.zeros((n_rows, hidden), jnp.float32)
    for k in range(4):
        x_proj = x_proj.at[index[k]].add(splat * delta[k][:, None])
    x_proj = x_proj.reshape(length, sphere_size_lat * sphere_size_long, hidden)
    x_proj = jnp.transpose(x_proj, (0, 2, 1))
    return x_proj.reshape(length, hidden, sphere_size_lat, sphere_size_long)


if __name__ == "__main__":
    key = jax.random.PRNGKey(0)
    k1, k2, k3, k4 = jax.random.split(key, 4)

    # Small shapes consistent with the module's usage.
    sphere_size_lat, sphere_size_long = 4, 8
    length = 2
    hidden = 128           # lane-dense hidden dim
    n_src = 16             # rows of x (messages indexed by source_edge_index)
    n_edges = 384
    n_rows = length * sphere_size_lat * sphere_size_long

    # Values quantized to power-of-two fractions so sums are exactly
    # representable; combined with precision=HIGHEST the kernel matches the
    # f32 reference to tight tolerance regardless of reduction order.
    x = jax.random.randint(k1, (n_src, hidden), -8, 8).astype(jnp.float32) / 8.0
    source_edge_index = jax.random.randint(k2, (n_edges,), 0, n_src, dtype=jnp.int32)
    index = jax.random.randint(k3, (4, n_edges), 0, n_rows, dtype=jnp.int32)
    delta = jax.random.randint(k4, (4, n_edges), 0, 16).astype(jnp.float32) / 16.0

    out = project_lat_long_sphere(
        x, length, index, delta, source_edge_index,
        sphere_size_lat, sphere_size_long)
    out = jax.block_until_ready(out)

    ref = project_ref(
        x, length, index, delta, source_edge_index,
        sphere_size_lat, sphere_size_long)

    assert out.shape == (length, hidden, sphere_size_lat, sphere_size_long)
    assert out.dtype == jnp.float32
    assert jnp.allclose(out, ref, atol=1e-5, rtol=1e-5), "mismatch vs reference"

    print("KERNEL_OK")
</pallas_src>

<mosaic_0001>
module attributes {stable_mosaic.version = 11 : i64} {
  func.func @_project_kernel(%arg0: i32, %arg1: i32, %arg2: memref<1x512xi32, #tpu.memory_space<vmem>>, %arg3: memref<4x512xi32, #tpu.memory_space<vmem>>, %arg4: memref<4x512xf32, #tpu.memory_space<vmem>>, %arg5: memref<16x128xf32, #tpu.memory_space<vmem>>, %arg6: memref<64x128xf32, #tpu.memory_space<vmem>>) attributes {dimension_semantics = [#tpu.dimension_semantics<parallel>, #tpu.dimension_semantics<arbitrary>], iteration_bounds = array<i64: 1, 1>, scalar_prefetch = 0 : i64, scratch_operands = 0 : i64, tpu.core_type = #tpu.core_type<tc>, window_params = [{transform_indices = @transform_0, window_bounds = array<i64: 1, 512>}, {transform_indices = @transform_1, window_bounds = array<i64: 4, 512>}, {transform_indices = @transform_2, window_bounds = array<i64: 4, 512>}, {pipeline_mode = #tpu.pipeline_mode<synchronous>, transform_indices = @transform_3, window_bounds = array<i64: 16, 128>}, {transform_indices = @transform_4, window_bounds = array<i64: 64, 128>}]} {
    %c0_i32 = arith.constant 0 : i32
    %0 = arith.cmpi eq, %arg1, %c0_i32 : i32
    %1 = arith.extui %0 : i1 to i32
    %c0_i32_0 = arith.constant 0 : i32
    %2 = arith.cmpi ne, %1, %c0_i32_0 : i32
    scf.if %2 {
      %cst_18 = arith.constant 0.000000e+00 : f32
      %58 = vector.broadcast %cst_18 : f32 to vector<64x128xf32>
      %c0_19 = arith.constant 0 : index
      %c0_20 = arith.constant 0 : index
      %59 = vector.load %arg6[%c0_19, %c0_20] : memref<64x128xf32, #tpu.memory_space<vmem>>, vector<64x128xf32>
      tpu.vector_store %arg6[%c0_19, %c0_20], %58 {strides = array<i32>} : memref<64x128xf32, #tpu.memory_space<vmem>>, vector<64x128xf32>,
    } else {
    }
    %c0 = arith.constant 0 : index
    %c0_1 = arith.constant 0 : index
    %3 = vector.load %arg2[%c0, %c0_1] : memref<1x512xi32, #tpu.memory_space<vmem>>, vector<1x512xi32>
    %4 = tpu.iota {dimensions = array<i32: 0>} : vector<16x512xi32>
    %5 = vector.broadcast %3 : vector<1x512xi32> to vector<16x512xi32>
    %6 = arith.cmpi eq, %5, %4 : vector<16x512xi32>
    %7 = arith.extui %6 : vector<16x512xi1> to vector<16x512xi32>
    %8 = arith.sitofp %7 : vector<16x512xi32> to vector<16x512xf32>
    %c0_2 = arith.constant 0 : index
    %c0_3 = arith.constant 0 : index
    %9 = vector.load %arg5[%c0_2, %c0_3] : memref<16x128xf32, #tpu.memory_space<vmem>>, vector<16x128xf32>
    %cst = arith.constant dense<0.000000e+00> : vector<512x128xf32>
    %10 = tpu.matmul %8, %9, %cst {dimension_numbers = #tpu.dot_dimension_numbers<[0], [0], [1], [1], [0, 1, 1, 1], [], []>, precision = #tpu.contract_precision<fp32>} : vector<16x512xf32>, vector<16x128xf32>, vector<512x128xf32> -> vector<512x128xf32>
    %c64_i32 = arith.constant 64 : i32
    %11 = arith.muli %arg0, %c64_i32 : i32
    %c0_4 = arith.constant 0 : index
    %c0_5 = arith.constant 0 : index
    %12 = vector.load %arg3[%c0_4, %c0_5] : memref<4x512xi32, #tpu.memory_space<vmem>>, vector<4x512xi32>
    %c0_6 = arith.constant 0 : index
    %c0_7 = arith.constant 0 : index
    %13 = vector.load %arg4[%c0_6, %c0_7] : memref<4x512xf32, #tpu.memory_space<vmem>>, vector<4x512xf32>
    %14 = tpu.iota {dimensions = array<i32: 0>} : vector<64x512xi32>
    %15 = vector.broadcast %11 : i32 to vector<64x512xi32>
    %16 = arith.addi %14, %15 : vector<64x512xi32>
    %cst_8 = arith.constant 0.000000e+00 : f32
    %17 = vector.broadcast %cst_8 : f32 to vector<64x512xf32>
    %18 = vector.extract_strided_slice %12 {offsets = [0, 0], sizes = [1, 512], strides = [1, 1]} : vector<4x512xi32> to vector<1x512xi32>
    %19 = vector.broadcast %18 : vector<1x512xi32> to vector<64x512xi32>
    %20 = arith.cmpi eq, %19, %16 : vector<64x512xi32>
    %21 = vector.extract_strided_slice %13 {offsets = [0, 0], sizes = [1, 512], strides = [1, 1]} : vector<4x512xf32> to vector<1x512xf32>
    %cst_9 = arith.constant 0.000000e+00 : f32
    %22 = vector.shape_cast %21 : vector<1x512xf32> to vector<1x512xf32>
    %23 = vector.broadcast %22 : vector<1x512xf32> to vector<64x512xf32>
    %24 = vector.broadcast %cst_9 : f32 to vector<64x512xf32>
    %25 = arith.select %20, %23, %24 : vector<64x512xi1>, vector<64x512xf32>
    %26 = arith.addf %17, %25 : vector<64x512xf32>
    %27 = vector.extract_strided_slice %12 {offsets = [1, 0], sizes = [1, 512], strides = [1, 1]} : vector<4x512xi32> to vector<1x512xi32>
    %28 = vector.broadcast %27 : vector<1x512xi32> to vector<64x512xi32>
    %29 = arith.cmpi eq, %28, %16 : vector<64x512xi32>
    %30 = vector.extract_strided_slice %13 {offsets = [1, 0], sizes = [1, 512], strides = [1, 1]} : vector<4x512xf32> to vector<1x512xf32>
    %cst_10 = arith.constant 0.000000e+00 : f32
    %31 = vector.shape_cast %30 : vector<1x512xf32> to vector<1x512xf32>
    %32 = vector.broadcast %31 : vector<1x512xf32> to vector<64x512xf32>
    %33 = vector.broadcast %cst_10 : f32 to vector<64x512xf32>
    %34 = arith.select %29, %32, %33 : vector<64x512xi1>, vector<64x512xf32>
    %35 = arith.addf %26, %34 : vector<64x512xf32>
    %36 = vector.extract_strided_slice %12 {offsets = [2, 0], sizes = [1, 512], strides = [1, 1]} : vector<4x512xi32> to vector<1x512xi32>
    %37 = vector.broadcast %36 : vector<1x512xi32> to vector<64x512xi32>
    %38 = arith.cmpi eq, %37, %16 : vector<64x512xi32>
    %39 = vector.extract_strided_slice %13 {offsets = [2, 0], sizes = [1, 512], strides = [1, 1]} : vector<4x512xf32> to vector<1x512xf32>
    %cst_11 = arith.constant 0.000000e+00 : f32
    %40 = vector.shape_cast %39 : vector<1x512xf32> to vector<1x512xf32>
    %41 = vector.broadcast %40 : vector<1x512xf32> to vector<64x512xf32>
    %42 = vector.broadcast %cst_11 : f32 to vector<64x512xf32>
    %43 = arith.select %38, %41, %42 : vector<64x512xi1>, vector<64x512xf32>
    %44 = arith.addf %35, %43 : vector<64x512xf32>
    %45 = vector.extract_strided_slice %12 {offsets = [3, 0], sizes = [1, 512], strides = [1, 1]} : vector<4x512xi32> to vector<1x512xi32>
    %46 = vector.broadcast %45 : vector<1x512xi32> to vector<64x512xi32>
    %47 = arith.cmpi eq, %46, %16 : vector<64x512xi32>
    %48 = vector.extract_strided_slice %13 {offsets = [3, 0], sizes = [1, 512], strides = [1, 1]} : vector<4x512xf32> to vector<1x512xf32>
    %cst_12 = arith.constant 0.000000e+00 : f32
    %49 = vector.shape_cast %48 : vector<1x512xf32> to vector<1x512xf32>
    %50 = vector.broadcast %49 : vector<1x512xf32> to vector<64x512xf32>
    %51 = vector.broadcast %cst_12 : f32 to vector<64x512xf32>
    %52 = arith.select %47, %50, %51 : vector<64x512xi1>, vector<64x512xf32>
    %53 = arith.addf %44, %52 : vector<64x512xf32>
    %c0_13 = arith.constant 0 : index
    %c0_14 = arith.constant 0 : index
    %54 = vector.load %arg6[%c0_13, %c0_14] : memref<64x128xf32, #tpu.memory_space<vmem>>, vector<64x128xf32>
    %cst_15 = arith.constant dense<0.000000e+00> : vector<64x128xf32>
    %55 = tpu.matmul %53, %10, %cst_15 {dimension_numbers = #tpu.dot_dimension_numbers<[1], [0], [0], [1], [0, 0, 1, 1], [], []>, precision = #tpu.contract_precision<fp32>} : vector<64x512xf32>, vector<512x128xf32>, vector<64x128xf32> -> vector<64x128xf32>
    %56 = arith.addf %54, %55 : vector<64x128xf32>
    %c0_16 = arith.constant 0 : index
    %c0_17 = arith.constant 0 : index
    %57 = vector.load %arg6[%c0_16, %c0_17] : memref<64x128xf32, #tpu.memory_space<vmem>>, vector<64x128xf32>
    tpu.vector_store %arg6[%c0_16, %c0_17], %56 {strides = array<i32>} : memref<64x128xf32, #tpu.memory_space<vmem>>, vector<64x128xf32>,
    return
  }
  func.func @transform_0(%arg0: i32, %arg1: i32) -> (i32, i32) {
    %c0_i32 = arith.constant 0 : i32
    %c0_i32_0 = arith.constant 0 : i32
    return %c0_i32, %arg1 : i32, i32
  }
  func.func @transform_1(%arg0: i32, %arg1: i32) -> (i32, i32) {
    %c0_i32 = arith.constant 0 : i32
    %c0_i32_0 = arith.constant 0 : i32
    return %c0_i32, %arg1 : i32, i32
  }
  func.func @transform_2(%arg0: i32, %arg1: i32) -> (i32, i32) {
    %c0_i32 = arith.constant 0 : i32
    %c0_i32_0 = arith.constant 0 : i32
    return %c0_i32, %arg1 : i32, i32
  }
  func.func @transform_3(%arg0: i32, %arg1: i32) -> (i32, i32) {
    %c0_i32 = arith.constant 0 : i32
    %c0_i32_0 = arith.constant 0 : i32
    %c0_i32_1 = arith.constant 0 : i32
    return %c0_i32, %c0_i32_0 : i32, i32
  }
  func.func @transform_4(%arg0: i32, %arg1: i32) -> (i32, i32) {
    %c0_i32 = arith.constant 0 : i32
    %c0_i32_0 = arith.constant 0 : i32
    return %arg0, %c0_i32 : i32, i32
  }
}

</mosaic_0001>

<llo_original>
// kernel: tpu_custom_call.1
$region0: #{tpu_custom_call.1}
  #allocation0 [shape = 'u32[]', space=smem, size = 0x4, offset = 0x4, fixed_abs, tag = 'smem constant byte address 0x4 - core index']
  #allocation1 [shape = 'u32[72,128]{1,0:T(1,128)}', space=vmem, size = 0x9000, scoped, tag = 'internal scratch']
  %s0 = inlined_call_operand.hbm [shape: s32[1,512], index: 0, kind: input, shape index: {}]
  %s1 = inlined_call_operand.hbm [shape: s32[4,512], index: 1, kind: input, shape index: {}]
  %s2 = inlined_call_operand.hbm [shape: f32[4,512], index: 2, kind: input, shape index: {}]
  %s3 = inlined_call_operand.hbm [shape: f32[16,128], index: 3, kind: input, shape index: {}]
  %s4 = inlined_call_operand.hbm [shape: f32[64,128], index: 4, kind: output, shape index: {}]
  %s5 = sld [smem:[#allocation0]]
  $region46: #{tpu_custom_call.1} parent=0
    _
  %s7 = ssub.s32 1, %s5
  %s8 = scalar_select 0, %s7, %s5
  $region1: #{tpu_custom_call.1} parent=0
    #allocation2 [shape = 'u8[2048]{0}', space=vmem, size = 0x800, scoped, tag = 'input window, operand 0, single buffered']
    #allocation3 [shape = 's32[1]{0}', space=sflag, size = 0x4, scoped, tag = 'scoped memory for tpu_custom_call.1']
    #allocation4 [shape = 's32[1]{0}', space=sflag, size = 0x4, scoped, tag = 'scoped memory for tpu_custom_call.1']
    #allocation5 [shape = 'u8[8192]{0}', space=vmem, size = 0x2000, scoped, tag = 'input window, operand 1, single buffered']
    #allocation6 [shape = 's32[1]{0}', space=sflag, size = 0x4, scoped, tag = 'scoped memory for tpu_custom_call.1']
    #allocation7 [shape = 'u8[8192]{0}', space=vmem, size = 0x2000, scoped, tag = 'input window, operand 2, single buffered']
    #allocation8 [shape = 'u8[8192]{0}', space=vmem, size = 0x2000, scoped, tag = 'input window, operand 3, single buffered']
    #allocation9 [shape = 's32[1]{0}', space=sflag, size = 0x4, scoped, tag = 'scoped memory for tpu_custom_call.1']
    #allocation10 [shape = 'u8[32768]{0}', space=vmem, size = 0x8000, scoped, tag = 'output window, operand 0, single buffered']
    %9 = vsyncpa [#allocation3], 0
    %10 = vsyncpa [#allocation6], 0
    %11 = vsyncpa [#allocation9], 0
    %12 = vsyncpa [#allocation4], 0
    // Predicated region
    $region2: #{tpu_custom_call.1} parent=1 // pred_check
      _
    $region3: #{tpu_custom_call.1} parent=1 // pred_check_branch
      %14 = sbr.rel (0) target = $region5
    $region4: #{tpu_custom_call.1} parent=1 // pred_region
      %16 = vsyncadd [#allocation3], 0
      %s18 = sshll.u32 %s0, 4
      %s19 = int_to_ptr.hbm [resolvable:$true] %s18
      %s20 = sshll.u32 [#allocation2], 4
      %s21 = int_to_ptr.vmem [resolvable:$true] %s20
      %23 = dma.hbm_to_vmem [thread:$0]  %s19, 64, %s21, [#allocation3]
    $region5: #{tpu_custom_call.1} parent=1 // pred_fallthru
      _
    // Predicated region
    $region6: #{tpu_custom_call.1} parent=1 // pred_check
      _
    $region7: #{tpu_custom_call.1} parent=1 // pred_check_branch
      %25 = sbr.rel (0) target = $region9
    $region8: #{tpu_custom_call.1} parent=1 // pred_region
      %27 = vsyncadd [#allocation6], 0
      %s29 = sshll.u32 %s1, 4
      %s30 = int_to_ptr.hbm [resolvable:$true] %s29
      %s31 = sshll.u32 [#allocation5], 4
      %s32 = int_to_ptr.vmem [resolvable:$true] %s31
      %34 = dma.hbm_to_vmem [thread:$0]  %s30, 256, %s32, [#allocation6]
    $region9: #{tpu_custom_call.1} parent=1 // pred_fallthru
      _
    // Predicated region
    $region10: #{tpu_custom_call.1} parent=1 // pred_check
      _
    $region11: #{tpu_custom_call.1} parent=1 // pred_check_branch
      %36 = sbr.rel (0) target = $region13
    $region12: #{tpu_custom_call.1} parent=1 // pred_region
      %38 = vsyncadd [#allocation6], 0
      %s40 = sshll.u32 %s2, 4
      %s41 = int_to_ptr.hbm [resolvable:$true] %s40
      %s42 = sshll.u32 [#allocation7], 4
      %s43 = int_to_ptr.vmem [resolvable:$true] %s42
      %45 = dma.hbm_to_vmem [thread:$0]  %s41, 256, %s43, [#allocation6]
    $region13: #{tpu_custom_call.1} parent=1 // pred_fallthru
      _
    // Predicated region
    $region14: #{tpu_custom_call.1} parent=1 // pred_check
      _
    $region15: #{tpu_custom_call.1} parent=1 // pred_check_branch
      %47 = sbr.rel (0) target = $region17
    $region16: #{tpu_custom_call.1} parent=1 // pred_region
      %49 = vsyncadd [#allocation9], 0
      %s50 = sshll.u32 %s3, 4
      %s51 = int_to_ptr.hbm [resolvable:$true] %s50
      %s52 = sshll.u32 [#allocation8], 4
      %s53 = int_to_ptr.vmem [resolvable:$true] %s52
      %58 = dma.hbm_to_vmem [thread:$0]  %s51, 256, %s53, [#allocation9], 128, 128, 8
    $region17: #{tpu_custom_call.1} parent=1 // pred_fallthru
      _
    // Predicated region
    $region18: #{tpu_custom_call.1} parent=1 // pred_check
      _
    $region19: #{tpu_custom_call.1} parent=1 // pred_check_branch
      %60 = sbr.rel (0) target = $region21
    $region20: #{tpu_custom_call.1} parent=1 // pred_region
      %62 = dma.done [#allocation3], 64
    $region21: #{tpu_custom_call.1} parent=1 // pred_fallthru
      _
    // Predicated region
    $region22: #{tpu_custom_call.1} parent=1 // pred_check
      _
    $region23: #{tpu_custom_call.1} parent=1 // pred_check_branch
      %64 = sbr.rel (0) target = $region25
    $region24: #{tpu_custom_call.1} parent=1 // pred_region
      %66 = dma.done [#allocation6], 256
    $region25: #{tpu_custom_call.1} parent=1 // pred_fallthru
      _
    // Predicated region
    $region26: #{tpu_custom_call.1} parent=1 // pred_check
      _
    $region27: #{tpu_custom_call.1} parent=1 // pred_check_branch
      %68 = sbr.rel (0) target = $region29
    $region28: #{tpu_custom_call.1} parent=1 // pred_region
      %70 = dma.done [#allocation6], 256
    $region29: #{tpu_custom_call.1} parent=1 // pred_fallthru
      _
    // Predicated region
    $region30: #{tpu_custom_call.1} parent=1 // pred_check
      _
    $region31: #{tpu_custom_call.1} parent=1 // pred_check_branch
      %72 = sbr.rel (0) target = $region33
    $region32: #{tpu_custom_call.1} parent=1 // pred_region
      %74 = dma.done [#allocation9], 256
    $region33: #{tpu_custom_call.1} parent=1 // pred_fallthru
      _
    %p75 = scmp.eq.s32.totalorder 0, 0
    // Predicated region
    $region34: #{tpu_custom_call.1} parent=1 // pred_check
      %p76 = pneg %p75
    $region35: #{tpu_custom_call.1} parent=1 // pred_check_branch
      %78 = sbr.rel (%p76) target = $region37
    $region36: #{tpu_custom_call.1} parent=1 // pred_region
      %79 = vst [vmem:[#allocation10] sm:$0xff] 0.0
      %80 = vst [vmem:[#allocation10 + $0x8] sm:$0xff] 0.0
      %81 = vst [vmem:[#allocation10 + $0x10] sm:$0xff] 0.0
      %82 = vst [vmem:[#allocation10 + $0x18] sm:$0xff] 0.0
      %83 = vst [vmem:[#allocation10 + $0x20] sm:$0xff] 0.0
      %84 = vst [vmem:[#allocation10 + $0x28] sm:$0xff] 0.0
      %85 = vst [vmem:[#allocation10 + $0x30] sm:$0xff] 0.0
      %86 = vst [vmem:[#allocation10 + $0x38] sm:$0xff] 0.0
    $region37: #{tpu_custom_call.1} parent=1 // pred_fallthru
      _
    %v87 = vld [vmem:[#allocation2] sm:$0xf]
    %v88 = vlaneseq
    %v89 = vshrl.u32 %v88, 7
    %v90 = vadd.s32 %v89, 8
    %v91 = vperm.slane %v87, 0
    %v92 = vperm.slane %v87, 1
    %v93 = vperm.slane %v87, 2
    %v94 = vperm.slane %v87, 3
    %vm95 = vcmp.eq.s32.totalorder %v91, %v89
    %vm96 = vcmp.eq.s32.totalorder %v92, %v89
    %vm97 = vcmp.eq.s32.totalorder %v93, %v89
    %vm98 = vcmp.eq.s32.totalorder %v94, %v89
    %vm99 = vcmp.eq.s32.totalorder %v91, %v90
    %vm100 = vcmp.eq.s32.totalorder %v92, %v90
    %vm101 = vcmp.eq.s32.totalorder %v93, %v90
    %vm102 = vcmp.eq.s32.totalorder %v94, %v90
    %v103 = vsel %vm95, 1, 0
    %v104 = vsel %vm96, 1, 0
    %v105 = vsel %vm97, 1, 0
    %v106 = vsel %vm98, 1, 0
    %v107 = vsel %vm99, 1, 0
    %v108 = vsel %vm100, 1, 0
    %v109 = vsel %vm101, 1, 0
    %v110 = vsel %vm102, 1, 0
    %v111 = vcvt.s32.f32 %v103
    %v112 = vcvt.s32.f32 %v104
    %v113 = vcvt.s32.f32 %v105
    %v114 = vcvt.s32.f32 %v106
    %v115 = vcvt.s32.f32 %v107
    %v116 = vcvt.s32.f32 %v108
    %v117 = vcvt.s32.f32 %v109
    %v118 = vcvt.s32.f32 %v110
    %v119 = vld [vmem:[#allocation8] sm:$0xff]
    %v120 = vld [vmem:[#allocation8 + $0x8] sm:$0xff]
    %121 = vxpose.xlu0.b32.start [1/16] %v111, 128
    %122 = vxpose.xlu0.b32.cont [2/16] %v115, 128
    %123 = vxpose.xlu0.b32.cont [3/16] 0.0, 128
    %124 = vxpose.xlu0.b32.cont [4/16] 0.0, 128
    %125 = vxpose.xlu0.b32.cont [5/16] 0.0, 128
    %126 = vxpose.xlu0.b32.cont [6/16] 0.0, 128
    %127 = vxpose.xlu0.b32.cont [7/16] 0.0, 128
    %128 = vxpose.xlu0.b32.cont [8/16] 0.0, 128
    %129 = vxpose.xlu0.b32.cont [9/16] 0.0, 128
    %130 = vxpose.xlu0.b32.cont [10/16] 0.0, 128
    %131 = vxpose.xlu0.b32.cont [11/16] 0.0, 128
    %132 = vxpose.xlu0.b32.cont [12/16] 0.0, 128
    %133 = vxpose.xlu0.b32.cont [13/16] 0.0, 128
    %134 = vxpose.xlu0.b32.cont [14/16] 0.0, 128
    %135 = vxpose.xlu0.b32.cont [15/16] 0.0, 128
    %136 = vxpose.xlu0.b32.end [16/16] 0.0, 128
    %v137 = vpop.trf.xlu0
    %v138 = vpop.trf.xlu0
    %v139 = vpop.trf.xlu0
    %v140 = vpop.trf.xlu0
    %v141 = vpop.trf.xlu0
    %v142 = vpop.trf.xlu0
    %v143 = vpop.trf.xlu0
    %v144 = vpop.trf.xlu0
    %v145 = vpop.trf.xlu0
    %v146 = vpop.trf.xlu0
    %v147 = vpop.trf.xlu0
    %v148 = vpop.trf.xlu0
    %v149 = vpop.trf.xlu0
    %v150 = vpop.trf.xlu0
    %v151 = vpop.trf.xlu0
    %v152 = vpop.trf.xlu0
    %153 = vxpose.xlu0.b32.start [1/16] %v112, 128
    %154 = vxpose.xlu0.b32.cont [2/16] %v116, 128
    %155 = vxpose.xlu0.b32.cont [3/16] 0.0, 128
    %156 = vxpose.xlu0.b32.cont [4/16] 0.0, 128
    %157 = vxpose.xlu0.b32.cont [5/16] 0.0, 128
    %158 = vxpose.xlu0.b32.cont [6/16] 0.0, 128
    %159 = vxpose.xlu0.b32.cont [7/16] 0.0, 128
    %160 = vxpose.xlu0.b32.cont [8/16] 0.0, 128
    %161 = vxpose.xlu0.b32.cont [9/16] 0.0, 128
    %162 = vxpose.xlu0.b32.cont [10/16] 0.0, 128
    %163 = vxpose.xlu0.b32.cont [11/16] 0.0, 128
    %164 = vxpose.xlu0.b32.cont [12/16] 0.0, 128
    %165 = vxpose.xlu0.b32.cont [13/16] 0.0, 128
    %166 = vxpose.xlu0.b32.cont [14/16] 0.0, 128
    %167 = vxpose.xlu0.b32.cont [15/16] 0.0, 128
    %168 = vxpose.xlu0.b32.end [16/16] 0.0, 128
    %v169 = vpop.trf.xlu0
    %v170 = vpop.trf.xlu0
    %v171 = vpop.trf.xlu0
    %v172 = vpop.trf.xlu0
    %v173 = vpop.trf.xlu0
    %v174 = vpop.trf.xlu0
    %v175 = vpop.trf.xlu0
    %v176 = vpop.trf.xlu0
    %v177 = vpop.trf.xlu0
    %v178 = vpop.trf.xlu0
    %v179 = vpop.trf.xlu0
    %v180 = vpop.trf.xlu0
    %v181 = vpop.trf.xlu0
    %v182 = vpop.trf.xlu0
    %v183 = vpop.trf.xlu0
    %v184 = vpop.trf.xlu0
    %185 = vxpose.xlu0.b32.start [1/16] %v113, 128
    %186 = vxpose.xlu0.b32.cont [2/16] %v117, 128
    %187 = vxpose.xlu0.b32.cont [3/16] 0.0, 128
    %188 = vxpose.xlu0.b32.cont [4/16] 0.0, 128
    %189 = vxpose.xlu0.b32.cont [5/16] 0.0, 128
    %190 = vxpose.xlu0.b32.cont [6/16] 0.0, 128
    %191 = vxpose.xlu0.b32.cont [7/16] 0.0, 128
    %192 = vxpose.xlu0.b32.cont [8/16] 0.0, 128
    %193 = vxpose.xlu0.b32.cont [9/16] 0.0, 128
    %194 = vxpose.xlu0.b32.cont [10/16] 0.0, 128
    %195 = vxpose.xlu0.b32.cont [11/16] 0.0, 128
    %196 = vxpose.xlu0.b32.cont [12/16] 0.0, 128
    %197 = vxpose.xlu0.b32.cont [13/16] 0.0, 128
    %198 = vxpose.xlu0.b32.cont [14/16] 0.0, 128
    %199 = vxpose.xlu0.b32.cont [15/16] 0.0, 128
    %200 = vxpose.xlu0.b32.end [16/16] 0.0, 128
    %v201 = vpop.trf.xlu0
    %v202 = vpop.trf.xlu0
    %v203 = vpop.trf.xlu0
    %v204 = vpop.trf.xlu0
    %v205 = vpop.trf.xlu0
    %v206 = vpop.trf.xlu0
    %v207 = vpop.trf.xlu0
    %v208 = vpop.trf.xlu0
    %v209 = vpop.trf.xlu0
    %v210 = vpop.trf.xlu0
    %v211 = vpop.trf.xlu0
    %v212 = vpop.trf.xlu0
    %v213 = vpop.trf.xlu0
    %v214 = vpop.trf.xlu0
    %v215 = vpop.trf.xlu0
    %v216 = vpop.trf.xlu0
    %217 = vxpose.xlu0.b32.start [1/16] %v114, 128
    %218 = vxpose.xlu0.b32.cont [2/16] %v118, 128
    %219 = vxpose.xlu0.b32.cont [3/16] 0.0, 128
    %220 = vxpose.xlu0.b32.cont [4/16] 0.0, 128
    %221 = vxpose.xlu0.b32.cont [5/16] 0.0, 128
    %222 = vxpose.xlu0.b32.cont [6/16] 0.0, 128
    %223 = vxpose.xlu0.b32.cont [7/16] 0.0, 128
    %224 = vxpose.xlu0.b32.cont [8/16] 0.0, 128
    %225 = vxpose.xlu0.b32.cont [9/16] 0.0, 128
    %226 = vxpose.xlu0.b32.cont [10/16] 0.0, 128
    %227 = vxpose.xlu0.b32.cont [11/16] 0.0, 128
    %228 = vxpose.xlu0.b32.cont [12/16] 0.0, 128
    %229 = vxpose.xlu0.b32.cont [13/16] 0.0, 128
    %230 = vxpose.xlu0.b32.cont [14/16] 0.0, 128
    %231 = vxpose.xlu0.b32.cont [15/16] 0.0, 128
    %232 = vxpose.xlu0.b32.end [16/16] 0.0, 128
    %v233 = vpop.trf.xlu0
    %v234 = vpop.trf.xlu0
    %v235 = vpop.trf.xlu0
    %v236 = vpop.trf.xlu0
    %v237 = vpop.trf.xlu0
    %v238 = vpop.trf.xlu0
    %v239 = vpop.trf.xlu0
    %v240 = vpop.trf.xlu0
    %v241 = vpop.trf.xlu0
    %v242 = vpop.trf.xlu0
    %v243 = vpop.trf.xlu0
    %v244 = vpop.trf.xlu0
    %v245 = vpop.trf.xlu0
    %v246 = vpop.trf.xlu0
    %v247 = vpop.trf.xlu0
    %v248 = vpop.trf.xlu0
    %vm249 = vcmask 130048
    %v251 = vsel %vm249, %v137, 0
    %v254 = vsel %vm249, %v138, 0
    %v257 = vsel %vm249, %v139, 0
    %v260 = vsel %vm249, %v140, 0
    %v263 = vsel %vm249, %v141, 0
    %v266 = vsel %vm249, %v142, 0
    %v269 = vsel %vm249, %v143, 0
    %v272 = vsel %vm249, %v144, 0
    %v275 = vsel %vm249, %v145, 0
    %v278 = vsel %vm249, %v146, 0
    %v281 = vsel %vm249, %v147, 0
    %v284 = vsel %vm249, %v148, 0
    %v287 = vsel %vm249, %v149, 0
    %v290 = vsel %vm249, %v150, 0
    %v293 = vsel %vm249, %v151, 0
    %v296 = vsel %vm249, %v152, 0
    %v299 = vsel %vm249, %v169, 0
    %v302 = vsel %vm249, %v170, 0
    %v305 = vsel %vm249, %v171, 0
    %v308 = vsel %vm249, %v172, 0
    %v311 = vsel %vm249, %v173, 0
    %v314 = vsel %vm249, %v174, 0
    %v317 = vsel %vm249, %v175, 0
    %v320 = vsel %vm249, %v176, 0
    %v323 = vsel %vm249, %v177, 0
    %v326 = vsel %vm249, %v178, 0
    %v329 = vsel %vm249, %v179, 0
    %v332 = vsel %vm249, %v180, 0
    %v335 = vsel %vm249, %v181, 0
    %v338 = vsel %vm249, %v182, 0
    %v341 = vsel %vm249, %v183, 0
    %v344 = vsel %vm249, %v184, 0
    %v347 = vsel %vm249, %v201, 0
    %v350 = vsel %vm249, %v202, 0
    %v353 = vsel %vm249, %v203, 0
    %v356 = vsel %vm249, %v204, 0
    %v359 = vsel %vm249, %v205, 0
    %v362 = vsel %vm249, %v206, 0
    %v365 = vsel %vm249, %v207, 0
    %v368 = vsel %vm249, %v208, 0
    %v371 = vsel %vm249, %v209, 0
    %v374 = vsel %vm249, %v210, 0
    %v377 = vsel %vm249, %v211, 0
    %v380 = vsel %vm249, %v212, 0
    %v383 = vsel %vm249, %v213, 0
    %v386 = vsel %vm249, %v214, 0
    %v389 = vsel %vm249, %v215, 0
    %v392 = vsel %vm249, %v216, 0
    %v395 = vsel %vm249, %v233, 0
    %v398 = vsel %vm249, %v234, 0
    %v401 = vsel %vm249, %v235, 0
    %v404 = vsel %vm249, %v236, 0
    %v407 = vsel %vm249, %v237, 0
    %v410 = vsel %vm249, %v238, 0
    %v413 = vsel %vm249, %v239, 0
    %v416 = vsel %vm249, %v240, 0
    %v419 = vsel %vm249, %v241, 0
    %v422 = vsel %vm249, %v242, 0
    %v425 = vsel %vm249, %v243, 0
    %v428 = vsel %vm249, %v244, 0
    %v431 = vsel %vm249, %v245, 0
    %v434 = vsel %vm249, %v246, 0
    %v437 = vsel %vm249, %v247, 0
    %v440 = vsel %vm249, %v248, 0
    %442 = vmatpush.msra.mxu0 0.0
    %443 = vmatpush.msra.mxu0 0.0
    %444 = vmatpush.msra.mxu0 0.0
    %445 = vmatpush.msra.mxu0 0.0
    %446 = vmatpush.msra.mxu0 0.0
    %447 = vmatpush.msra.mxu0 0.0
    %448 = vmatpush.msra.mxu0 0.0
    %449 = vmatpush.msra.mxu0 0.0
    %450 = vmatpush.msra.mxu0 0.0
    %451 = vmatpush.msra.mxu0 0.0
    %452 = vmatpush.msra.mxu0 0.0
    %453 = vmatpush.msra.mxu0 0.0
    %454 = vmatpush.msra.mxu0 0.0
    %455 = vmatpush.msra.mxu0 0.0
    %v456 = vand.u32 %v120, 4294901760
    %457 = vmatpush.msra.mxu0 %v456
    %v458 = vand.u32 %v119, 4294901760
    %459 = vmatpush.msra.mxu0 %v458
    %v460 = vand.u32 %v251, 4294901760
    %v461 = vsub.f32 %v251, %v460
    %v462 = vand.u32 %v461, 4294901760
    %v463 = vsub.f32 %v461, %v462
    %v464 = vand.u32 %v463, 4294901760
    %465 = vmatmul.f32.gmra.mxu0 %v464
    %v466 = vpop.f32.mrf.mxu0
    %v467 = vadd.f32 0.0, %v466
    %v468 = vand.u32 %v254, 4294901760
    %v469 = vsub.f32 %v254, %v468
    %v470 = vand.u32 %v469, 4294901760
    %v471 = vsub.f32 %v469, %v470
    %v472 = vand.u32 %v471, 4294901760
    %473 = vmatmul.f32.gmra.mxu0 %v472
    %v474 = vpop.f32.mrf.mxu0
    %v475 = vadd.f32 0.0, %v474
    %v476 = vand.u32 %v257, 4294901760
    %v477 = vsub.f32 %v257, %v476
    %v478 = vand.u32 %v477, 4294901760
    %v479 = vsub.f32 %v477, %v478
    %v480 = vand.u32 %v479, 4294901760
    %481 = vmatmul.f32.gmra.mxu0 %v480
    %v482 = vpop.f32.mrf.mxu0
    %v483 = vadd.f32 0.0, %v482
    %v484 = vand.u32 %v260, 4294901760
    %v485 = vsub.f32 %v260, %v484
    %v486 = vand.u32 %v485, 4294901760
    %v487 = vsub.f32 %v485, %v486
    %v488 = vand.u32 %v487, 4294901760
    %489 = vmatmul.f32.gmra.mxu0 %v488
    %v490 = vpop.f32.mrf.mxu0
    %v491 = vadd.f32 0.0, %v490
    %v492 = vand.u32 %v263, 4294901760
    %v493 = vsub.f32 %v263, %v492
    %v494 = vand.u32 %v493, 4294901760
    %v495 = vsub.f32 %v493, %v494
    %v496 = vand.u32 %v495, 4294901760
    %497 = vmatmul.f32.gmra.mxu0 %v496
    %v498 = vpop.f32.mrf.mxu0
    %v499 = vadd.f32 0.0, %v498
    %v500 = vand.u32 %v266, 4294901760
    %v501 = vsub.f32 %v266, %v500
    %v502 = vand.u32 %v501, 4294901760
    %v503 = vsub.f32 %v501, %v502
    %v504 = vand.u32 %v503, 4294901760
    %505 = vmatmul.f32.gmra.mxu0 %v504
    %v506 = vpop.f32.mrf.mxu0
    %v507 = vadd.f32 0.0, %v506
    %v508 = vand.u32 %v269, 4294901760
    %v509 = vsub.f32 %v269, %v508
    %v510 = vand.u32 %v509, 4294901760
    %v511 = vsub.f32 %v509, %v510
    %v512 = vand.u32 %v511, 4294901760
    %513 = vmatmul.f32.gmra.mxu0 %v512
    %v514 = vpop.f32.mrf.mxu0
    %v515 = vadd.f32 0.0, %v514
    %v516 = vand.u32 %v272, 4294901760
    %v517 = vsub.f32 %v272, %v516
    %v518 = vand.u32 %v517, 4294901760
    %v519 = vsub.f32 %v517, %v518
    %v520 = vand.u32 %v519, 4294901760
    %521 = vmatmul.f32.gmra.mxu0 %v520
    %v522 = vpop.f32.mrf.mxu0
    %v523 = vadd.f32 0.0, %v522
    %v524 = vand.u32 %v275, 4294901760
    %v525 = vsub.f32 %v275, %v524
    %v526 = vand.u32 %v525, 4294901760
    %v527 = vsub.f32 %v525, %v526
    %v528 = vand.u32 %v527, 4294901760
    %529 = vmatmul.f32.gmra.mxu0 %v528
    %v530 = vpop.f32.mrf.mxu0
    %v531 = vadd.f32 0.0, %v530
    %v532 = vand.u32 %v278, 4294901760
    %v533 = vsub.f32 %v278, %v532
    %v534 = vand.u32 %v533, 4294901760
    %v535 = vsub.f32 %v533, %v534
    %v536 = vand.u32 %v535, 4294901760
    %537 = vmatmul.f32.gmra.mxu0 %v536
    %v538 = vpop.f32.mrf.mxu0
    %v539 = vadd.f32 0.0, %v538
    %v540 = vand.u32 %v281, 4294901760
    %v541 = vsub.f32 %v281, %v540
    %v542 = vand.u32 %v541, 4294901760
    %v543 = vsub.f32 %v541, %v542
    %v544 = vand.u32 %v543, 4294901760
    %545 = vmatmul.f32.gmra.mxu0 %v544
    %v546 = vpop.f32.mrf.mxu0
    %v547 = vadd.f32 0.0, %v546
    %v548 = vand.u32 %v284, 4294901760
    %v549 = vsub.f32 %v284, %v548
    %v550 = vand.u32 %v549, 4294901760
    %v551 = vsub.f32 %v549, %v550
    %v552 = vand.u32 %v551, 4294901760
    %553 = vmatmul.f32.gmra.mxu0 %v552
    %v554 = vpop.f32.mrf.mxu0
    %v555 = vadd.f32 0.0, %v554
    %v556 = vand.u32 %v287, 4294901760
    %v557 = vsub.f32 %v287, %v556
    %v558 = vand.u32 %v557, 4294901760
    %v559 = vsub.f32 %v557, %v558
    %v560 = vand.u32 %v559, 4294901760
    %561 = vmatmul.f32.gmra.mxu0 %v560
    %v562 = vpop.f32.mrf.mxu0
    %v563 = vadd.f32 0.0, %v562
    %v564 = vand.u32 %v290, 4294901760
    %v565 = vsub.f32 %v290, %v564
    %v566 = vand.u32 %v565, 4294901760
    %v567 = vsub.f32 %v565, %v566
    %v568 = vand.u32 %v567, 4294901760
    %569 = vmatmul.f32.gmra.mxu0 %v568
    %v570 = vpop.f32.mrf.mxu0
    %v571 = vadd.f32 0.0, %v570
    %v572 = vand.u32 %v293, 4294901760
    %v573 = vsub.f32 %v293, %v572
    %v574 = vand.u32 %v573, 4294901760
    %v575 = vsub.f32 %v573, %v574
    %v576 = vand.u32 %v575, 4294901760
    %577 = vmatmul.f32.gmra.mxu0 %v576
    %v578 = vpop.f32.mrf.mxu0
    %v579 = vadd.f32 0.0, %v578
    %v580 = vand.u32 %v296, 4294901760
    %v581 = vsub.f32 %v296, %v580
    %v582 = vand.u32 %v581, 4294901760
    %v583 = vsub.f32 %v581, %v582
    %v584 = vand.u32 %v583, 4294901760
    %585 = vmatmul.f32.gmra.mxu0 %v584
    %v586 = vpop.f32.mrf.mxu0
    %v587 = vadd.f32 0.0, %v586
    %v588 = vand.u32 %v299, 4294901760
    %v589 = vsub.f32 %v299, %v588
    %v590 = vand.u32 %v589, 4294901760
    %v591 = vsub.f32 %v589, %v590
    %v592 = vand.u32 %v591, 4294901760
    %593 = vmatmul.f32.gmra.mxu0 %v592
    %v594 = vpop.f32.mrf.mxu0
    %v595 = vadd.f32 0.0, %v594
    %v596 = vand.u32 %v302, 4294901760
    %v597 = vsub.f32 %v302, %v596
    %v598 = vand.u32 %v597, 4294901760
    %v599 = vsub.f32 %v597, %v598
    %v600 = vand.u32 %v599, 4294901760
    %601 = vmatmul.f32.gmra.mxu0 %v600
    %v602 = vpop.f32.mrf.mxu0
    %v603 = vadd.f32 0.0, %v602
    %v604 = vand.u32 %v305, 4294901760
    %v605 = vsub.f32 %v305, %v604
    %v606 = vand.u32 %v605, 4294901760
    %v607 = vsub.f32 %v605, %v606
    %v608 = vand.u32 %v607, 4294901760
    %609 = vmatmul.f32.gmra.mxu0 %v608
    %v610 = vpop.f32.mrf.mxu0
    %v611 = vadd.f32 0.0, %v610
    %v612 = vand.u32 %v308, 4294901760
    %v613 = vsub.f32 %v308, %v612
    %v614 = vand.u32 %v613, 4294901760
    %v615 = vsub.f32 %v613, %v614
    %v616 = vand.u32 %v615, 4294901760
    %617 = vmatmul.f32.gmra.mxu0 %v616
    %v618 = vpop.f32.mrf.mxu0
    %v619 = vadd.f32 0.0, %v618
    %v620 = vand.u32 %v311, 4294901760
    %v621 = vsub.f32 %v311, %v620
    %v622 = vand.u32 %v621, 4294901760
    %v623 = vsub.f32 %v621, %v622
    %v624 = vand.u32 %v623, 4294901760
    %625 = vmatmul.f32.gmra.mxu0 %v624
    %v626 = vpop.f32.mrf.mxu0
    %v627 = vadd.f32 0.0, %v626
    %v628 = vand.u32 %v314, 4294901760
    %v629 = vsub.f32 %v314, %v628
    %v630 = vand.u32 %v629, 4294901760
    %v631 = vsub.f32 %v629, %v630
    %v632 = vand.u32 %v631, 4294901760
    %633 = vmatmul.f32.gmra.mxu0 %v632
    %v634 = vpop.f32.mrf.mxu0
    %v635 = vadd.f32 0.0, %v634
    %v636 = vand.u32 %v317, 4294901760
    %v637 = vsub.f32 %v317, %v636
    %v638 = vand.u32 %v637, 4294901760
    %v639 = vsub.f32 %v637, %v638
    %v640 = vand.u32 %v639, 4294901760
    %641 = vmatmul.f32.gmra.mxu0 %v640
    %v642 = vpop.f32.mrf.mxu0
    %v643 = vadd.f32 0.0, %v642
    %v644 = vand.u32 %v320, 4294901760
    %v645 = vsub.f32 %v320, %v644
    %v646 = vand.u32 %v645, 4294901760
    %v647 = vsub.f32 %v645, %v646
    %v648 = vand.u32 %v647, 4294901760
    %649 = vmatmul.f32.gmra.mxu0 %v648
    %v650 = vpop.f32.mrf.mxu0
    %v651 = vadd.f32 0.0, %v650
    %v652 = vand.u32 %v323, 4294901760
    %v653 = vsub.f32 %v323, %v652
    %v654 = vand.u32 %v653, 4294901760
    %v655 = vsub.f32 %v653, %v654
    %v656 = vand.u32 %v655, 4294901760
    %657 = vmatmul.f32.gmra.mxu0 %v656
    %v658 = vpop.f32.mrf.mxu0
    %v659 = vadd.f32 0.0, %v658
    %v660 = vand.u32 %v326, 4294901760
    %v661 = vsub.f32 %v326, %v660
    %v662 = vand.u32 %v661, 4294901760
    %v663 = vsub.f32 %v661, %v662
    %v664 = vand.u32 %v663, 4294901760
    %665 = vmatmul.f32.gmra.mxu0 %v664
    %v666 = vpop.f32.mrf.mxu0
    %v667 = vadd.f32 0.0, %v666
    %v668 = vand.u32 %v329, 4294901760
    %v669 = vsub.f32 %v329, %v668
    %v670 = vand.u32 %v669, 4294901760
    %v671 = vsub.f32 %v669, %v670
    %v672 = vand.u32 %v671, 4294901760
    %673 = vmatmul.f32.gmra.mxu0 %v672
    %v674 = vpop.f32.mrf.mxu0
    %v675 = vadd.f32 0.0, %v674
    %v676 = vand.u32 %v332, 4294901760
    %v677 = vsub.f32 %v332, %v676
    %v678 = vand.u32 %v677, 4294901760
    %v679 = vsub.f32 %v677, %v678
    %v680 = vand.u32 %v679, 4294901760
    %681 = vmatmul.f32.gmra.mxu0 %v680
    %v682 = vpop.f32.mrf.mxu0
    %v683 = vadd.f32 0.0, %v682
    %v684 = vand.u32 %v335, 4294901760
    %v685 = vsub.f32 %v335, %v684
    %v686 = vand.u32 %v685, 4294901760
    %v687 = vsub.f32 %v685, %v686
    %v688 = vand.u32 %v687, 4294901760
    %689 = vmatmul.f32.gmra.mxu0 %v688
    %v690 = vpop.f32.mrf.mxu0
    %v691 = vadd.f32 0.0, %v690
    %v692 = vand.u32 %v338, 4294901760
    %v693 = vsub.f32 %v338, %v692
    %v694 = vand.u32 %v693, 4294901760
    %v695 = vsub.f32 %v693, %v694
    %v696 = vand.u32 %v695, 4294901760
    %697 = vmatmul.f32.gmra.mxu0 %v696
    %v698 = vpop.f32.mrf.mxu0
    %v699 = vadd.f32 0.0, %v698
    %v700 = vand.u32 %v341, 4294901760
    %v701 = vsub.f32 %v341, %v700
    %v702 = vand.u32 %v701, 4294901760
    %v703 = vsub.f32 %v701, %v702
    %v704 = vand.u32 %v703, 4294901760
    %705 = vmatmul.f32.gmra.mxu0 %v704
    %v706 = vpop.f32.mrf.mxu0
    %v707 = vadd.f32 0.0, %v706
    %v708 = vand.u32 %v344, 4294901760
    %v709 = vsub.f32 %v344, %v708
    %v710 = vand.u32 %v709, 4294901760
    %v711 = vsub.f32 %v709, %v710
    %v712 = vand.u32 %v711, 4294901760
    %713 = vmatmul.f32.gmra.mxu0 %v712
    %v714 = vpop.f32.mrf.mxu0
    %v715 = vadd.f32 0.0, %v714
    %v716 = vand.u32 %v347, 4294901760
    %v717 = vsub.f32 %v347, %v716
    %v718 = vand.u32 %v717, 4294901760
    %v719 = vsub.f32 %v717, %v718
    %v720 = vand.u32 %v719, 4294901760
    %721 = vmatmul.f32.gmra.mxu0 %v720
    %v722 = vpop.f32.mrf.mxu0
    %v723 = vadd.f32 0.0, %v722
    %v724 = vand.u32 %v350, 4294901760
    %v725 = vsub.f32 %v350, %v724
    %v726 = vand.u32 %v725, 4294901760
    %v727 = vsub.f32 %v725, %v726
    %v728 = vand.u32 %v727, 4294901760
    %729 = vmatmul.f32.gmra.mxu0 %v728
    %v730 = vpop.f32.mrf.mxu0
    %v731 = vadd.f32 0.0, %v730
    %v732 = vand.u32 %v353, 4294901760
    %v733 = vsub.f32 %v353, %v732
    %v734 = vand.u32 %v733, 4294901760
    %v735 = vsub.f32 %v733, %v734
    %v736 = vand.u32 %v735, 4294901760
    %737 = vmatmul.f32.gmra.mxu0 %v736
    %v738 = vpop.f32.mrf.mxu0
    %v739 = vadd.f32 0.0, %v738
    %v740 = vand.u32 %v356, 4294901760
    %v741 = vsub.f32 %v356, %v740
    %v742 = vand.u32 %v741, 4294901760
    %v743 = vsub.f32 %v741, %v742
    %v744 = vand.u32 %v743, 4294901760
    %745 = vmatmul.f32.gmra.mxu0 %v744
    %v746 = vpop.f32.mrf.mxu0
    %v747 = vadd.f32 0.0, %v746
    %v748 = vand.u32 %v359, 4294901760
    %v749 = vsub.f32 %v359, %v748
    %v750 = vand.u32 %v749, 4294901760
    %v751 = vsub.f32 %v749, %v750
    %v752 = vand.u32 %v751, 4294901760
    %753 = vmatmul.f32.gmra.mxu0 %v752
    %v754 = vpop.f32.mrf.mxu0
    %v755 = vadd.f32 0.0, %v754
    %v756 = vand.u32 %v362, 4294901760
    %v757 = vsub.f32 %v362, %v756
    %v758 = vand.u32 %v757, 4294901760
    %v759 = vsub.f32 %v757, %v758
    %v760 = vand.u32 %v759, 4294901760
    %761 = vmatmul.f32.gmra.mxu0 %v760
    %v762 = vpop.f32.mrf.mxu0
    %v763 = vadd.f32 0.0, %v762
    %v764 = vand.u32 %v365, 4294901760
    %v765 = vsub.f32 %v365, %v764
    %v766 = vand.u32 %v765, 4294901760
    %v767 = vsub.f32 %v765, %v766
    %v768 = vand.u32 %v767, 4294901760
    %769 = vmatmul.f32.gmra.mxu0 %v768
    %v770 = vpop.f32.mrf.mxu0
    %v771 = vadd.f32 0.0, %v770
    %v772 = vand.u32 %v368, 4294901760
    %v773 = vsub.f32 %v368, %v772
    %v774 = vand.u32 %v773, 4294901760
    %v775 = vsub.f32 %v773, %v774
    %v776 = vand.u32 %v775, 4294901760
    %777 = vmatmul.f32.gmra.mxu0 %v776
    %v778 = vpop.f32.mrf.mxu0
    %v779 = vadd.f32 0.0, %v778
    %v780 = vand.u32 %v371, 4294901760
    %v781 = vsub.f32 %v371, %v780
    %v782 = vand.u32 %v781, 4294901760
    %v783 = vsub.f32 %v781, %v782
    %v784 = vand.u32 %v783, 4294901760
    %785 = vmatmul.f32.gmra.mxu0 %v784
    %v786 = vpop.f32.mrf.mxu0
    %v787 = vadd.f32 0.0, %v786
    %v788 = vand.u32 %v374, 4294901760
    %v789 = vsub.f32 %v374, %v788
    %v790 = vand.u32 %v789, 4294901760
    %v791 = vsub.f32 %v789, %v790
    %v792 = vand.u32 %v791, 4294901760
    %793 = vmatmul.f32.gmra.mxu0 %v792
    %v794 = vpop.f32.mrf.mxu0
    %v795 = vadd.f32 0.0, %v794
    %v796 = vand.u32 %v377, 4294901760
    %v797 = vsub.f32 %v377, %v796
    %v798 = vand.u32 %v797, 4294901760
    %v799 = vsub.f32 %v797, %v798
    %v800 = vand.u32 %v799, 4294901760
    %801 = vmatmul.f32.gmra.mxu0 %v800
    %v802 = vpop.f32.mrf.mxu0
    %v803 = vadd.f32 0.0, %v802
    %v804 = vand.u32 %v380, 4294901760
    %v805 = vsub.f32 %v380, %v804
    %v806 = vand.u32 %v805, 4294901760
    %v807 = vsub.f32 %v805, %v806
    %v808 = vand.u32 %v807, 4294901760
    %809 = vmatmul.f32.gmra.mxu0 %v808
    %v810 = vpop.f32.mrf.mxu0
    %v811 = vadd.f32 0.0, %v810
    %v812 = vand.u32 %v383, 4294901760
    %v813 = vsub.f32 %v383, %v812
    %v814 = vand.u32 %v813, 4294901760
    %v815 = vsub.f32 %v813, %v814
    %v816 = vand.u32 %v815, 4294901760
    %817 = vmatmul.f32.gmra.mxu0 %v816
    %v818 = vpop.f32.mrf.mxu0
    %v819 = vadd.f32 0.0, %v818
    %v820 = vand.u32 %v386, 4294901760
    %v821 = vsub.f32 %v386, %v820
    %v822 = vand.u32 %v821, 4294901760
    %v823 = vsub.f32 %v821, %v822
    %v824 = vand.u32 %v823, 4294901760
    %825 = vmatmul.f32.gmra.mxu0 %v824
    %v826 = vpop.f32.mrf.mxu0
    %v827 = vadd.f32 0.0, %v826
    %v828 = vand.u32 %v389, 4294901760
    %v829 = vsub.f32 %v389, %v828
    %v830 = vand.u32 %v829, 4294901760
    %v831 = vsub.f32 %v829, %v830
    %v832 = vand.u32 %v831, 4294901760
    %833 = vmatmul.f32.gmra.mxu0 %v832
    %v834 = vpop.f32.mrf.mxu0
    %v835 = vadd.f32 0.0, %v834
    %v836 = vand.u32 %v392, 4294901760
    %v837 = vsub.f32 %v392, %v836
    %v838 = vand.u32 %v837, 4294901760
    %v839 = vsub.f32 %v837, %v838
    %v840 = vand.u32 %v839, 4294901760
    %841 = vmatmul.f32.gmra.mxu0 %v840
    %v842 = vpop.f32.mrf.mxu0
    %v843 = vadd.f32 0.0, %v842
    %v844 = vand.u32 %v395, 4294901760
    %v845 = vsub.f32 %v395, %v844
    %v846 = vand.u32 %v845, 4294901760
    %v847 = vsub.f32 %v845, %v846
    %v848 = vand.u32 %v847, 4294901760
    %849 = vmatmul.f32.gmra.mxu0 %v848
    %v850 = vpop.f32.mrf.mxu0
    %v851 = vadd.f32 0.0, %v850
    %v852 = vand.u32 %v398, 4294901760
    %v853 = vsub.f32 %v398, %v852
    %v854 = vand.u32 %v853, 4294901760
    %v855 = vsub.f32 %v853, %v854
    %v856 = vand.u32 %v855, 4294901760
    %857 = vmatmul.f32.gmra.mxu0 %v856
    %v858 = vpop.f32.mrf.mxu0
    %v859 = vadd.f32 0.0, %v858
    %v860 = vand.u32 %v401, 4294901760
    %v861 = vsub.f32 %v401, %v860
    %v862 = vand.u32 %v861, 4294901760
    %v863 = vsub.f32 %v861, %v862
    %v864 = vand.u32 %v863, 4294901760
    %865 = vmatmul.f32.gmra.mxu0 %v864
    %v866 = vpop.f32.mrf.mxu0
    %v867 = vadd.f32 0.0, %v866
    %v868 = vand.u32 %v404, 4294901760
    %v869 = vsub.f32 %v404, %v868
    %v870 = vand.u32 %v869, 4294901760
    %v871 = vsub.f32 %v869, %v870
    %v872 = vand.u32 %v871, 4294901760
    %873 = vmatmul.f32.gmra.mxu0 %v872
    %v874 = vpop.f32.mrf.mxu0
    %v875 = vadd.f32 0.0, %v874
    %v876 = vand.u32 %v407, 4294901760
    %v877 = vsub.f32 %v407, %v876
    %v878 = vand.u32 %v877, 4294901760
    %v879 = vsub.f32 %v877, %v878
    %v880 = vand.u32 %v879, 4294901760
    %881 = vmatmul.f32.gmra.mxu0 %v880
    %v882 = vpop.f32.mrf.mxu0
    %v883 = vadd.f32 0.0, %v882
    %v884 = vand.u32 %v410, 4294901760
    %v885 = vsub.f32 %v410, %v884
    %v886 = vand.u32 %v885, 4294901760
    %v887 = vsub.f32 %v885, %v886
    %v888 = vand.u32 %v887, 4294901760
    %889 = vmatmul.f32.gmra.mxu0 %v888
    %v890 = vpop.f32.mrf.mxu0
    %v891 = vadd.f32 0.0, %v890
    %v892 = vand.u32 %v413, 4294901760
    %v893 = vsub.f32 %v413, %v892
    %v894 = vand.u32 %v893, 4294901760
    %v895 = vsub.f32 %v893, %v894
    %v896 = vand.u32 %v895, 4294901760
    %897 = vmatmul.f32.gmra.mxu0 %v896
    %v898 = vpop.f32.mrf.mxu0
    %v899 = vadd.f32 0.0, %v898
    %v900 = vand.u32 %v416, 4294901760
    %v901 = vsub.f32 %v416, %v900
    %v902 = vand.u32 %v901, 4294901760
    %v903 = vsub.f32 %v901, %v902
    %v904 = vand.u32 %v903, 4294901760
    %905 = vmatmul.f32.gmra.mxu0 %v904
    %v906 = vpop.f32.mrf.mxu0
    %v907 = vadd.f32 0.0, %v906
    %v908 = vand.u32 %v419, 4294901760
    %v909 = vsub.f32 %v419, %v908
    %v910 = vand.u32 %v909, 4294901760
    %v911 = vsub.f32 %v909, %v910
    %v912 = vand.u32 %v911, 4294901760
    %913 = vmatmul.f32.gmra.mxu0 %v912
    %v914 = vpop.f32.mrf.mxu0
    %v915 = vadd.f32 0.0, %v914
    %v916 = vand.u32 %v422, 4294901760
    %v917 = vsub.f32 %v422, %v916
    %v918 = vand.u32 %v917, 4294901760
    %v919 = vsub.f32 %v917, %v918
    %v920 = vand.u32 %v919, 4294901760
    %921 = vmatmul.f32.gmra.mxu0 %v920
    %v922 = vpop.f32.mrf.mxu0
    %v923 = vadd.f32 0.0, %v922
    %v924 = vand.u32 %v425, 4294901760
    %v925 = vsub.f32 %v425, %v924
    %v926 = vand.u32 %v925, 4294901760
    %v927 = vsub.f32 %v925, %v926
    %v928 = vand.u32 %v927, 4294901760
    %929 = vmatmul.f32.gmra.mxu0 %v928
    %v930 = vpop.f32.mrf.mxu0
    %v931 = vadd.f32 0.0, %v930
    %v932 = vand.u32 %v428, 4294901760
    %v933 = vsub.f32 %v428, %v932
    %v934 = vand.u32 %v933, 4294901760
    %v935 = vsub.f32 %v933, %v934
    %v936 = vand.u32 %v935, 4294901760
    %937 = vmatmul.f32.gmra.mxu0 %v936
    %v938 = vpop.f32.mrf.mxu0
    %v939 = vadd.f32 0.0, %v938
    %v940 = vand.u32 %v431, 4294901760
    %v941 = vsub.f32 %v431, %v940
    %v942 = vand.u32 %v941, 4294901760
    %v943 = vsub.f32 %v941, %v942
    %v944 = vand.u32 %v943, 4294901760
    %945 = vmatmul.f32.gmra.mxu0 %v944
    %v946 = vpop.f32.mrf.mxu0
    %v947 = vadd.f32 0.0, %v946
    %v948 = vand.u32 %v434, 4294901760
    %v949 = vsub.f32 %v434, %v948
    %v950 = vand.u32 %v949, 4294901760
    %v951 = vsub.f32 %v949, %v950
    %v952 = vand.u32 %v951, 4294901760
    %953 = vmatmul.f32.gmra.mxu0 %v952
    %v954 = vpop.f32.mrf.mxu0
    %v955 = vadd.f32 0.0, %v954
    %v956 = vand.u32 %v437, 4294901760
    %v957 = vsub.f32 %v437, %v956
    %v958 = vand.u32 %v957, 4294901760
    %v959 = vsub.f32 %v957, %v958
    %v960 = vand.u32 %v959, 4294901760
    %961 = vmatmul.f32.gmra.mxu0 %v960
    %v962 = vpop.f32.mrf.mxu0
    %v963 = vadd.f32 0.0, %v962
    %v964 = vand.u32 %v440, 4294901760
    %v965 = vsub.f32 %v440, %v964
    %v966 = vand.u32 %v965, 4294901760
    %v967 = vsub.f32 %v965, %v966
    %v968 = vand.u32 %v967, 4294901760
    %969 = vmatmul.f32.gmra.mxu0 %v968
    %v970 = vpop.f32.mrf.mxu0
    %v971 = vadd.f32 0.0, %v970
    %972 = vdwg.mxu0
    %973 = vmatpush.msra.mxu0 0.0
    %974 = vmatpush.msra.mxu0 0.0
    %975 = vmatpush.msra.mxu0 0.0
    %976 = vmatpush.msra.mxu0 0.0
    %977 = vmatpush.msra.mxu0 0.0
    %978 = vmatpush.msra.mxu0 0.0
    %979 = vmatpush.msra.mxu0 0.0
    %980 = vmatpush.msra.mxu0 0.0
    %981 = vmatpush.msra.mxu0 0.0
    %982 = vmatpush.msra.mxu0 0.0
    %983 = vmatpush.msra.mxu0 0.0
    %984 = vmatpush.msra.mxu0 0.0
    %985 = vmatpush.msra.mxu0 0.0
    %986 = vmatpush.msra.mxu0 0.0
    %v987 = vand.u32 %v120, 4294901760
    %v988 = vsub.f32 %v120, %v987
    %v989 = vand.u32 %v988, 4294901760
    %v990 = vsub.f32 %v988, %v989
    %v991 = vand.u32 %v990, 4294901760
    %992 = vmatpush.msra.mxu0 %v991
    %v993 = vand.u32 %v119, 4294901760
    %v994 = vsub.f32 %v119, %v993
    %v995 = vand.u32 %v994, 4294901760
    %v996 = vsub.f32 %v994, %v995
    %v997 = vand.u32 %v996, 4294901760
    %998 = vmatpush.msra.mxu0 %v997
    %v999 = vand.u32 %v251, 4294901760
    %1000 = vmatmul.f32.gmra.mxu0 %v999
    %v1001 = vpop.f32.mrf.mxu0
    %v1002 = vadd.f32 %v467, %v1001
    %v1003 = vand.u32 %v254, 4294901760
    %1004 = vmatmul.f32.gmra.mxu0 %v1003
    %v1005 = vpop.f32.mrf.mxu0
    %v1006 = vadd.f32 %v475, %v1005
    %v1007 = vand.u32 %v257, 4294901760
    %1008 = vmatmul.f32.gmra.mxu0 %v1007
    %v1009 = vpop.f32.mrf.mxu0
    %v1010 = vadd.f32 %v483, %v1009
    %v1011 = vand.u32 %v260, 4294901760
    %1012 = vmatmul.f32.gmra.mxu0 %v1011
    %v1013 = vpop.f32.mrf.mxu0
    %v1014 = vadd.f32 %v491, %v1013
    %v1015 = vand.u32 %v263, 4294901760
    %1016 = vmatmul.f32.gmra.mxu0 %v1015
    %v1017 = vpop.f32.mrf.mxu0
    %v1018 = vadd.f32 %v499, %v1017
    %v1019 = vand.u32 %v266, 4294901760
    %1020 = vmatmul.f32.gmra.mxu0 %v1019
    %v1021 = vpop.f32.mrf.mxu0
    %v1022 = vadd.f32 %v507, %v1021
    %v1023 = vand.u32 %v269, 4294901760
    %1024 = vmatmul.f32.gmra.mxu0 %v1023
    %v1025 = vpop.f32.mrf.mxu0
    %v1026 = vadd.f32 %v515, %v1025
    %v1027 = vand.u32 %v272, 4294901760
    %1028 = vmatmul.f32.gmra.mxu0 %v1027
    %v1029 = vpop.f32.mrf.mxu0
    %v1030 = vadd.f32 %v523, %v1029
    %v1031 = vand.u32 %v275, 4294901760
    %1032 = vmatmul.f32.gmra.mxu0 %v1031
    %v1033 = vpop.f32.mrf.mxu0
    %v1034 = vadd.f32 %v531, %v1033
    %v1035 = vand.u32 %v278, 4294901760
    %1036 = vmatmul.f32.gmra.mxu0 %v1035
    %v1037 = vpop.f32.mrf.mxu0
    %v1038 = vadd.f32 %v539, %v1037
    %v1039 = vand.u32 %v281, 4294901760
    %1040 = vmatmul.f32.gmra.mxu0 %v1039
    %v1041 = vpop.f32.mrf.mxu0
    %v1042 = vadd.f32 %v547, %v1041
    %v1043 = vand.u32 %v284, 4294901760
    %1044 = vmatmul.f32.gmra.mxu0 %v1043
    %v1045 = vpop.f32.mrf.mxu0
    %v1046 = vadd.f32 %v555, %v1045
    %v1047 = vand.u32 %v287, 4294901760
    %1048 = vmatmul.f32.gmra.mxu0 %v1047
    %v1049 = vpop.f32.mrf.mxu0
    %v1050 = vadd.f32 %v563, %v1049
    %v1051 = vand.u32 %v290, 4294901760
    %1052 = vmatmul.f32.gmra.mxu0 %v1051
    %v1053 = vpop.f32.mrf.mxu0
    %v1054 = vadd.f32 %v571, %v1053
    %v1055 = vand.u32 %v293, 4294901760
    %1056 = vmatmul.f32.gmra.mxu0 %v1055
    %v1057 = vpop.f32.mrf.mxu0
    %v1058 = vadd.f32 %v579, %v1057
    %v1059 = vand.u32 %v296, 4294901760
    %1060 = vmatmul.f32.gmra.mxu0 %v1059
    %v1061 = vpop.f32.mrf.mxu0
    %v1062 = vadd.f32 %v587, %v1061
    %v1063 = vand.u32 %v299, 4294901760
    %1064 = vmatmul.f32.gmra.mxu0 %v1063
    %v1065 = vpop.f32.mrf.mxu0
    %v1066 = vadd.f32 %v595, %v1065
    %v1067 = vand.u32 %v302, 4294901760
    %1068 = vmatmul.f32.gmra.mxu0 %v1067
    %v1069 = vpop.f32.mrf.mxu0
    %v1070 = vadd.f32 %v603, %v1069
    %v1071 = vand.u32 %v305, 4294901760
    %1072 = vmatmul.f32.gmra.mxu0 %v1071
    %v1073 = vpop.f32.mrf.mxu0
    %v1074 = vadd.f32 %v611, %v1073
    %v1075 = vand.u32 %v308, 4294901760
    %1076 = vmatmul.f32.gmra.mxu0 %v1075
    %v1077 = vpop.f32.mrf.mxu0
    %v1078 = vadd.f32 %v619, %v1077
    %v1079 = vand.u32 %v311, 4294901760
    %1080 = vmatmul.f32.gmra.mxu0 %v1079
    %v1081 = vpop.f32.mrf.mxu0
    %v1082 = vadd.f32 %v627, %v1081
    %v1083 = vand.u32 %v314, 4294901760
    %1084 = vmatmul.f32.gmra.mxu0 %v1083
    %v1085 = vpop.f32.mrf.mxu0
    %v1086 = vadd.f32 %v635, %v1085
    %v1087 = vand.u32 %v317, 4294901760
    %1088 = vmatmul.f32.gmra.mxu0 %v1087
    %v1089 = vpop.f32.mrf.mxu0
    %v1090 = vadd.f32 %v643, %v1089
    %v1091 = vand.u32 %v320, 4294901760
    %1092 = vmatmul.f32.gmra.mxu0 %v1091
    %v1093 = vpop.f32.mrf.mxu0
    %v1094 = vadd.f32 %v651, %v1093
    %v1095 = vand.u32 %v323, 4294901760
    %1096 = vmatmul.f32.gmra.mxu0 %v1095
    %v1097 = vpop.f32.mrf.mxu0
    %v1098 = vadd.f32 %v659, %v1097
    %v1099 = vand.u32 %v326, 4294901760
    %1100 = vmatmul.f32.gmra.mxu0 %v1099
    %v1101 = vpop.f32.mrf.mxu0
    %v1102 = vadd.f32 %v667, %v1101
    %v1103 = vand.u32 %v329, 4294901760
    %1104 = vmatmul.f32.gmra.mxu0 %v1103
    %v1105 = vpop.f32.mrf.mxu0
    %v1106 = vadd.f32 %v675, %v1105
    %v1107 = vand.u32 %v332, 4294901760
    %1108 = vmatmul.f32.gmra.mxu0 %v1107
    %v1109 = vpop.f32.mrf.mxu0
    %v1110 = vadd.f32 %v683, %v1109
    %v1111 = vand.u32 %v335, 4294901760
    %1112 = vmatmul.f32.gmra.mxu0 %v1111
    %v1113 = vpop.f32.mrf.mxu0
    %v1114 = vadd.f32 %v691, %v1113
    %v1115 = vand.u32 %v338, 4294901760
    %1116 = vmatmul.f32.gmra.mxu0 %v1115
    %v1117 = vpop.f32.mrf.mxu0
    %v1118 = vadd.f32 %v699, %v1117
    %v1119 = vand.u32 %v341, 4294901760
    %1120 = vmatmul.f32.gmra.mxu0 %v1119
    %v1121 = vpop.f32.mrf.mxu0
    %v1122 = vadd.f32 %v707, %v1121
    %v1123 = vand.u32 %v344, 4294901760
    %1124 = vmatmul.f32.gmra.mxu0 %v1123
    %v1125 = vpop.f32.mrf.mxu0
    %v1126 = vadd.f32 %v715, %v1125
    %v1127 = vand.u32 %v347, 4294901760
    %1128 = vmatmul.f32.gmra.mxu0 %v1127
    %v1129 = vpop.f32.mrf.mxu0
    %v1130 = vadd.f32 %v723, %v1129
    %v1131 = vand.u32 %v350, 4294901760
    %1132 = vmatmul.f32.gmra.mxu0 %v1131
    %v1133 = vpop.f32.mrf.mxu0
    %v1134 = vadd.f32 %v731, %v1133
    %v1135 = vand.u32 %v353, 4294901760
    %1136 = vmatmul.f32.gmra.mxu0 %v1135
    %v1137 = vpop.f32.mrf.mxu0
    %v1138 = vadd.f32 %v739, %v1137
    %v1139 = vand.u32 %v356, 4294901760
    %1140 = vmatmul.f32.gmra.mxu0 %v1139
    %v1141 = vpop.f32.mrf.mxu0
    %v1142 = vadd.f32 %v747, %v1141
    %v1143 = vand.u32 %v359, 4294901760
    %1144 = vmatmul.f32.gmra.mxu0 %v1143
    %v1145 = vpop.f32.mrf.mxu0
    %v1146 = vadd.f32 %v755, %v1145
    %v1147 = vand.u32 %v362, 4294901760
    %1148 = vmatmul.f32.gmra.mxu0 %v1147
    %v1149 = vpop.f32.mrf.mxu0
    %v1150 = vadd.f32 %v763, %v1149
    %v1151 = vand.u32 %v365, 4294901760
    %1152 = vmatmul.f32.gmra.mxu0 %v1151
    %v1153 = vpop.f32.mrf.mxu0
    %v1154 = vadd.f32 %v771, %v1153
    %v1155 = vand.u32 %v368, 4294901760
    %1156 = vmatmul.f32.gmra.mxu0 %v1155
    %v1157 = vpop.f32.mrf.mxu0
    %v1158 = vadd.f32 %v779, %v1157
    %v1159 = vand.u32 %v371, 4294901760
    %1160 = vmatmul.f32.gmra.mxu0 %v1159
    %v1161 = vpop.f32.mrf.mxu0
    %v1162 = vadd.f32 %v787, %v1161
    %v1163 = vand.u32 %v374, 4294901760
    %1164 = vmatmul.f32.gmra.mxu0 %v1163
    %v1165 = vpop.f32.mrf.mxu0
    %v1166 = vadd.f32 %v795, %v1165
    %v1167 = vand.u32 %v377, 4294901760
    %1168 = vmatmul.f32.gmra.mxu0 %v1167
    %v1169 = vpop.f32.mrf.mxu0
    %v1170 = vadd.f32 %v803, %v1169
    %v1171 = vand.u32 %v380, 4294901760
    %1172 = vmatmul.f32.gmra.mxu0 %v1171
    %v1173 = vpop.f32.mrf.mxu0
    %v1174 = vadd.f32 %v811, %v1173
    %v1175 = vand.u32 %v383, 4294901760
    %1176 = vmatmul.f32.gmra.mxu0 %v1175
    %v1177 = vpop.f32.mrf.mxu0
    %v1178 = vadd.f32 %v819, %v1177
    %v1179 = vand.u32 %v386, 4294901760
    %1180 = vmatmul.f32.gmra.mxu0 %v1179
    %v1181 = vpop.f32.mrf.mxu0
    %v1182 = vadd.f32 %v827, %v1181
    %v1183 = vand.u32 %v389, 4294901760
    %1184 = vmatmul.f32.gmra.mxu0 %v1183
    %v1185 = vpop.f32.mrf.mxu0
    %v1186 = vadd.f32 %v835, %v1185
    %v1187 = vand.u32 %v392, 4294901760
    %1188 = vmatmul.f32.gmra.mxu0 %v1187
    %v1189 = vpop.f32.mrf.mxu0
    %v1190 = vadd.f32 %v843, %v1189
    %v1191 = vand.u32 %v395, 4294901760
    %1192 = vmatmul.f32.gmra.mxu0 %v1191
    %v1193 = vpop.f32.mrf.mxu0
    %v1194 = vadd.f32 %v851, %v1193
    %v1195 = vand.u32 %v398, 4294901760
    %1196 = vmatmul.f32.gmra.mxu0 %v1195
    %v1197 = vpop.f32.mrf.mxu0
    %v1198 = vadd.f32 %v859, %v1197
    %v1199 = vand.u32 %v401, 4294901760
    %1200 = vmatmul.f32.gmra.mxu0 %v1199
    %v1201 = vpop.f32.mrf.mxu0
    %v1202 = vadd.f32 %v867, %v1201
    %v1203 = vand.u32 %v404, 4294901760
    %1204 = vmatmul.f32.gmra.mxu0 %v1203
    %v1205 = vpop.f32.mrf.mxu0
    %v1206 = vadd.f32 %v875, %v1205
    %v1207 = vand.u32 %v407, 4294901760
    %1208 = vmatmul.f32.gmra.mxu0 %v1207
    %v1209 = vpop.f32.mrf.mxu0
    %v1210 = vadd.f32 %v883, %v1209
    %v1211 = vand.u32 %v410, 4294901760
    %1212 = vmatmul.f32.gmra.mxu0 %v1211
    %v1213 = vpop.f32.mrf.mxu0
    %v1214 = vadd.f32 %v891, %v1213
    %v1215 = vand.u32 %v413, 4294901760
    %1216 = vmatmul.f32.gmra.mxu0 %v1215
    %v1217 = vpop.f32.mrf.mxu0
    %v1218 = vadd.f32 %v899, %v1217
    %v1219 = vand.u32 %v416, 4294901760
    %1220 = vmatmul.f32.gmra.mxu0 %v1219
    %v1221 = vpop.f32.mrf.mxu0
    %v1222 = vadd.f32 %v907, %v1221
    %v1223 = vand.u32 %v419, 4294901760
    %1224 = vmatmul.f32.gmra.mxu0 %v1223
    %v1225 = vpop.f32.mrf.mxu0
    %v1226 = vadd.f32 %v915, %v1225
    %v1227 = vand.u32 %v422, 4294901760
    %1228 = vmatmul.f32.gmra.mxu0 %v1227
    %v1229 = vpop.f32.mrf.mxu0
    %v1230 = vadd.f32 %v923, %v1229
    %v1231 = vand.u32 %v425, 4294901760
    %1232 = vmatmul.f32.gmra.mxu0 %v1231
    %v1233 = vpop.f32.mrf.mxu0
    %v1234 = vadd.f32 %v931, %v1233
    %v1235 = vand.u32 %v428, 4294901760
    %1236 = vmatmul.f32.gmra.mxu0 %v1235
    %v1237 = vpop.f32.mrf.mxu0
    %v1238 = vadd.f32 %v939, %v1237
    %v1239 = vand.u32 %v431, 4294901760
    %1240 = vmatmul.f32.gmra.mxu0 %v1239
    %v1241 = vpop.f32.mrf.mxu0
    %v1242 = vadd.f32 %v947, %v1241
    %v1243 = vand.u32 %v434, 4294901760
    %1244 = vmatmul.f32.gmra.mxu0 %v1243
    %v1245 = vpop.f32.mrf.mxu0
    %v1246 = vadd.f32 %v955, %v1245
    %v1247 = vand.u32 %v437, 4294901760
    %1248 = vmatmul.f32.gmra.mxu0 %v1247
    %v1249 = vpop.f32.mrf.mxu0
    %v1250 = vadd.f32 %v963, %v1249
    %v1251 = vand.u32 %v440, 4294901760
    %1252 = vmatmul.f32.gmra.mxu0 %v1251
    %v1253 = vpop.f32.mrf.mxu0
    %v1254 = vadd.f32 %v971, %v1253
    %1255 = vdwg.mxu0
    %1256 = vmatpush.msra.mxu0 0.0
    %1257 = vmatpush.msra.mxu0 0.0
    %1258 = vmatpush.msra.mxu0 0.0
    %1259 = vmatpush.msra.mxu0 0.0
    %1260 = vmatpush.msra.mxu0 0.0
    %1261 = vmatpush.msra.mxu0 0.0
    %1262 = vmatpush.msra.mxu0 0.0
    %1263 = vmatpush.msra.mxu0 0.0
    %1264 = vmatpush.msra.mxu0 0.0
    %1265 = vmatpush.msra.mxu0 0.0
    %1266 = vmatpush.msra.mxu0 0.0
    %1267 = vmatpush.msra.mxu0 0.0
    %1268 = vmatpush.msra.mxu0 0.0
    %1269 = vmatpush.msra.mxu0 0.0
    %v1270 = vand.u32 %v120, 4294901760
    %v1271 = vsub.f32 %v120, %v1270
    %1272 = vmatpush.msra.mxu0 %v1271
    %v1273 = vand.u32 %v119, 4294901760
    %v1274 = vsub.f32 %v119, %v1273
    %1275 = vmatpush.msra.mxu0 %v1274
    %v1276 = vand.u32 %v251, 4294901760
    %v1277 = vsub.f32 %v251, %v1276
    %1278 = vmatmul.f32.gmra.mxu0 %v1277
    %v1279 = vpop.f32.mrf.mxu0
    %v1280 = vadd.f32 %v1002, %v1279
    %v1281 = vand.u32 %v254, 4294901760
    %v1282 = vsub.f32 %v254, %v1281
    %1283 = vmatmul.f32.gmra.mxu0 %v1282
    %v1284 = vpop.f32.mrf.mxu0
    %v1285 = vadd.f32 %v1006, %v1284
    %v1286 = vand.u32 %v257, 4294901760
    %v1287 = vsub.f32 %v257, %v1286
    %1288 = vmatmul.f32.gmra.mxu0 %v1287
    %v1289 = vpop.f32.mrf.mxu0
    %v1290 = vadd.f32 %v1010, %v1289
    %v1291 = vand.u32 %v260, 4294901760
    %v1292 = vsub.f32 %v260, %v1291
    %1293 = vmatmul.f32.gmra.mxu0 %v1292
    %v1294 = vpop.f32.mrf.mxu0
    %v1295 = vadd.f32 %v1014, %v1294
    %v1296 = vand.u32 %v263, 4294901760
    %v1297 = vsub.f32 %v263, %v1296
    %1298 = vmatmul.f32.gmra.mxu0 %v1297
    %v1299 = vpop.f32.mrf.mxu0
    %v1300 = vadd.f32 %v1018, %v1299
    %v1301 = vand.u32 %v266, 4294901760
    %v1302 = vsub.f32 %v266, %v1301
    %1303 = vmatmul.f32.gmra.mxu0 %v1302
    %v1304 = vpop.f32.mrf.mxu0
    %v1305 = vadd.f32 %v1022, %v1304
    %v1306 = vand.u32 %v269, 4294901760
    %v1307 = vsub.f32 %v269, %v1306
    %1308 = vmatmul.f32.gmra.mxu0 %v1307
    %v1309 = vpop.f32.mrf.mxu0
    %v1310 = vadd.f32 %v1026, %v1309
    %v1311 = vand.u32 %v272, 4294901760
    %v1312 = vsub.f32 %v272, %v1311
    %1313 = vmatmul.f32.gmra.mxu0 %v1312
    %v1314 = vpop.f32.mrf.mxu0
    %v1315 = vadd.f32 %v1030, %v1314
    %v1316 = vand.u32 %v275, 4294901760
    %v1317 = vsub.f32 %v275, %v1316
    %1318 = vmatmul.f32.gmra.mxu0 %v1317
    %v1319 = vpop.f32.mrf.mxu0
    %v1320 = vadd.f32 %v1034, %v1319
    %v1321 = vand.u32 %v278, 4294901760
    %v1322 = vsub.f32 %v278, %v1321
    %1323 = vmatmul.f32.gmra.mxu0 %v1322
    %v1324 = vpop.f32.mrf.mxu0
    %v1325 = vadd.f32 %v1038, %v1324
    %v1326 = vand.u32 %v281, 4294901760
    %v1327 = vsub.f32 %v281, %v1326
    %1328 = vmatmul.f32.gmra.mxu0 %v1327
    %v1329 = vpop.f32.mrf.mxu0
    %v1330 = vadd.f32 %v1042, %v1329
    %v1331 = vand.u32 %v284, 4294901760
    %v1332 = vsub.f32 %v284, %v1331
    %1333 = vmatmul.f32.gmra.mxu0 %v1332
    %v1334 = vpop.f32.mrf.mxu0
    %v1335 = vadd.f32 %v1046, %v1334
    %v1336 = vand.u32 %v287, 4294901760
    %v1337 = vsub.f32 %v287, %v1336
    %1338 = vmatmul.f32.gmra.mxu0 %v1337
    %v1339 = vpop.f32.mrf.mxu0
    %v1340 = vadd.f32 %v1050, %v1339
    %v1341 = vand.u32 %v290, 4294901760
    %v1342 = vsub.f32 %v290, %v1341
    %1343 = vmatmul.f32.gmra.mxu0 %v1342
    %v1344 = vpop.f32.mrf.mxu0
    %v1345 = vadd.f32 %v1054, %v1344
    %v1346 = vand.u32 %v293, 4294901760
    %v1347 = vsub.f32 %v293, %v1346
    %1348 = vmatmul.f32.gmra.mxu0 %v1347
    %v1349 = vpop.f32.mrf.mxu0
    %v1350 = vadd.f32 %v1058, %v1349
    %v1351 = vand.u32 %v296, 4294901760
    %v1352 = vsub.f32 %v296, %v1351
    %1353 = vmatmul.f32.gmra.mxu0 %v1352
    %v1354 = vpop.f32.mrf.mxu0
    %v1355 = vadd.f32 %v1062, %v1354
    %v1356 = vand.u32 %v299, 4294901760
    %v1357 = vsub.f32 %v299, %v1356
    %1358 = vmatmul.f32.gmra.mxu0 %v1357
    %v1359 = vpop.f32.mrf.mxu0
    %v1360 = vadd.f32 %v1066, %v1359
    %v1361 = vand.u32 %v302, 4294901760
    %v1362 = vsub.f32 %v302, %v1361
    %1363 = vmatmul.f32.gmra.mxu0 %v1362
    %v1364 = vpop.f32.mrf.mxu0
    %v1365 = vadd.f32 %v1070, %v1364
    %v1366 = vand.u32 %v305, 4294901760
    %v1367 = vsub.f32 %v305, %v1366
    %1368 = vmatmul.f32.gmra.mxu0 %v1367
    %v1369 = vpop.f32.mrf.mxu0
    %v1370 = vadd.f32 %v1074, %v1369
    %v1371 = vand.u32 %v308, 4294901760
    %v1372 = vsub.f32 %v308, %v1371
    %1373 = vmatmul.f32.gmra.mxu0 %v1372
    %v1374 = vpop.f32.mrf.mxu0
    %v1375 = vadd.f32 %v1078, %v1374
    %v1376 = vand.u32 %v311, 4294901760
    %v1377 = vsub.f32 %v311, %v1376
    %1378 = vmatmul.f32.gmra.mxu0 %v1377
    %v1379 = vpop.f32.mrf.mxu0
    %v1380 = vadd.f32 %v1082, %v1379
    %v1381 = vand.u32 %v314, 4294901760
    %v1382 = vsub.f32 %v314, %v1381
    %1383 = vmatmul.f32.gmra.mxu0 %v1382
    %v1384 = vpop.f32.mrf.mxu0
    %v1385 = vadd.f32 %v1086, %v1384
    %v1386 = vand.u32 %v317, 4294901760
    %v1387 = vsub.f32 %v317, %v1386
    %1388 = vmatmul.f32.gmra.mxu0 %v1387
    %v1389 = vpop.f32.mrf.mxu0
    %v1390 = vadd.f32 %v1090, %v1389
    %v1391 = vand.u32 %v320, 4294901760
    %v1392 = vsub.f32 %v320, %v1391
    %1393 = vmatmul.f32.gmra.mxu0 %v1392
    %v1394 = vpop.f32.mrf.mxu0
    %v1395 = vadd.f32 %v1094, %v1394
    %v1396 = vand.u32 %v323, 4294901760
    %v1397 = vsub.f32 %v323, %v1396
    %1398 = vmatmul.f32.gmra.mxu0 %v1397
    %v1399 = vpop.f32.mrf.mxu0
    %v1400 = vadd.f32 %v1098, %v1399
    %v1401 = vand.u32 %v326, 4294901760
    %v1402 = vsub.f32 %v326, %v1401
    %1403 = vmatmul.f32.gmra.mxu0 %v1402
    %v1404 = vpop.f32.mrf.mxu0
    %v1405 = vadd.f32 %v1102, %v1404
    %v1406 = vand.u32 %v329, 4294901760
    %v1407 = vsub.f32 %v329, %v1406
    %1408 = vmatmul.f32.gmra.mxu0 %v1407
    %v1409 = vpop.f32.mrf.mxu0
    %v1410 = vadd.f32 %v1106, %v1409
    %v1411 = vand.u32 %v332, 4294901760
    %v1412 = vsub.f32 %v332, %v1411
    %1413 = vmatmul.f32.gmra.mxu0 %v1412
    %v1414 = vpop.f32.mrf.mxu0
    %v1415 = vadd.f32 %v1110, %v1414
    %v1416 = vand.u32 %v335, 4294901760
    %v1417 = vsub.f32 %v335, %v1416
    %1418 = vmatmul.f32.gmra.mxu0 %v1417
    %v1419 = vpop.f32.mrf.mxu0
    %v1420 = vadd.f32 %v1114, %v1419
    %v1421 = vand.u32 %v338, 4294901760
    %v1422 = vsub.f32 %v338, %v1421
    %1423 = vmatmul.f32.gmra.mxu0 %v1422
    %v1424 = vpop.f32.mrf.mxu0
    %v1425 = vadd.f32 %v1118, %v1424
    %v1426 = vand.u32 %v341, 4294901760
    %v1427 = vsub.f32 %v341, %v1426
    %1428 = vmatmul.f32.gmra.mxu0 %v1427
    %v1429 = vpop.f32.mrf.mxu0
    %v1430 = vadd.f32 %v1122, %v1429
    %v1431 = vand.u32 %v344, 4294901760
    %v1432 = vsub.f32 %v344, %v1431
    %1433 = vmatmul.f32.gmra.mxu0 %v1432
    %v1434 = vpop.f32.mrf.mxu0
    %v1435 = vadd.f32 %v1126, %v1434
    %v1436 = vand.u32 %v347, 4294901760
    %v1437 = vsub.f32 %v347, %v1436
    %1438 = vmatmul.f32.gmra.mxu0 %v1437
    %v1439 = vpop.f32.mrf.mxu0
    %v1440 = vadd.f32 %v1130, %v1439
    %v1441 = vand.u32 %v350, 4294901760
    %v1442 = vsub.f32 %v350, %v1441
    %1443 = vmatmul.f32.gmra.mxu0 %v1442
    %v1444 = vpop.f32.mrf.mxu0
    %v1445 = vadd.f32 %v1134, %v1444
    %v1446 = vand.u32 %v353, 4294901760
    %v1447 = vsub.f32 %v353, %v1446
    %1448 = vmatmul.f32.gmra.mxu0 %v1447
    %v1449 = vpop.f32.mrf.mxu0
    %v1450 = vadd.f32 %v1138, %v1449
    %v1451 = vand.u32 %v356, 4294901760
    %v1452 = vsub.f32 %v356, %v1451
    %1453 = vmatmul.f32.gmra.mxu0 %v1452
    %v1454 = vpop.f32.mrf.mxu0
    %v1455 = vadd.f32 %v1142, %v1454
    %v1456 = vand.u32 %v359, 4294901760
    %v1457 = vsub.f32 %v359, %v1456
    %1458 = vmatmul.f32.gmra.mxu0 %v1457
    %v1459 = vpop.f32.mrf.mxu0
    %v1460 = vadd.f32 %v1146, %v1459
    %v1461 = vand.u32 %v362, 4294901760
    %v1462 = vsub.f32 %v362, %v1461
    %1463 = vmatmul.f32.gmra.mxu0 %v1462
    %v1464 = vpop.f32.mrf.mxu0
    %v1465 = vadd.f32 %v1150, %v1464
    %v1466 = vand.u32 %v365, 4294901760
    %v1467 = vsub.f32 %v365, %v1466
    %1468 = vmatmul.f32.gmra.mxu0 %v1467
    %v1469 = vpop.f32.mrf.mxu0
    %v1470 = vadd.f32 %v1154, %v1469
    %v1471 = vand.u32 %v368, 4294901760
    %v1472 = vsub.f32 %v368, %v1471
    %1473 = vmatmul.f32.gmra.mxu0 %v1472
    %v1474 = vpop.f32.mrf.mxu0
    %v1475 = vadd.f32 %v1158, %v1474
    %v1476 = vand.u32 %v371, 4294901760
    %v1477 = vsub.f32 %v371, %v1476
    %1478 = vmatmul.f32.gmra.mxu0 %v1477
    %v1479 = vpop.f32.mrf.mxu0
    %v1480 = vadd.f32 %v1162, %v1479
    %v1481 = vand.u32 %v374, 4294901760
    %v1482 = vsub.f32 %v374, %v1481
    %1483 = vmatmul.f32.gmra.mxu0 %v1482
    %v1484 = vpop.f32.mrf.mxu0
    %v1485 = vadd.f32 %v1166, %v1484
    %v1486 = vand.u32 %v377, 4294901760
    %v1487 = vsub.f32 %v377, %v1486
    %1488 = vmatmul.f32.gmra.mxu0 %v1487
    %v1489 = vpop.f32.mrf.mxu0
    %v1490 = vadd.f32 %v1170, %v1489
    %v1491 = vand.u32 %v380, 4294901760
    %v1492 = vsub.f32 %v380, %v1491
    %1493 = vmatmul.f32.gmra.mxu0 %v1492
    %v1494 = vpop.f32.mrf.mxu0
    %v1495 = vadd.f32 %v1174, %v1494
    %v1496 = vand.u32 %v383, 4294901760
    %v1497 = vsub.f32 %v383, %v1496
    %1498 = vmatmul.f32.gmra.mxu0 %v1497
    %v1499 = vpop.f32.mrf.mxu0
    %v1500 = vadd.f32 %v1178, %v1499
    %v1501 = vand.u32 %v386, 4294901760
    %v1502 = vsub.f32 %v386, %v1501
    %1503 = vmatmul.f32.gmra.mxu0 %v1502
    %v1504 = vpop.f32.mrf.mxu0
    %v1505 = vadd.f32 %v1182, %v1504
    %v1506 = vand.u32 %v389, 4294901760
    %v1507 = vsub.f32 %v389, %v1506
    %1508 = vmatmul.f32.gmra.mxu0 %v1507
    %v1509 = vpop.f32.mrf.mxu0
    %v1510 = vadd.f32 %v1186, %v1509
    %v1511 = vand.u32 %v392, 4294901760
    %v1512 = vsub.f32 %v392, %v1511
    %1513 = vmatmul.f32.gmra.mxu0 %v1512
    %v1514 = vpop.f32.mrf.mxu0
    %v1515 = vadd.f32 %v1190, %v1514
    %v1516 = vand.u32 %v395, 4294901760
    %v1517 = vsub.f32 %v395, %v1516
    %1518 = vmatmul.f32.gmra.mxu0 %v1517
    %v1519 = vpop.f32.mrf.mxu0
    %v1520 = vadd.f32 %v1194, %v1519
    %v1521 = vand.u32 %v398, 4294901760
    %v1522 = vsub.f32 %v398, %v1521
    %1523 = vmatmul.f32.gmra.mxu0 %v1522
    %v1524 = vpop.f32.mrf.mxu0
    %v1525 = vadd.f32 %v1198, %v1524
    %v1526 = vand.u32 %v401, 4294901760
    %v1527 = vsub.f32 %v401, %v1526
    %1528 = vmatmul.f32.gmra.mxu0 %v1527
    %v1529 = vpop.f32.mrf.mxu0
    %v1530 = vadd.f32 %v1202, %v1529
    %v1531 = vand.u32 %v404, 4294901760
    %v1532 = vsub.f32 %v404, %v1531
    %1533 = vmatmul.f32.gmra.mxu0 %v1532
    %v1534 = vpop.f32.mrf.mxu0
    %v1535 = vadd.f32 %v1206, %v1534
    %v1536 = vand.u32 %v407, 4294901760
    %v1537 = vsub.f32 %v407, %v1536
    %1538 = vmatmul.f32.gmra.mxu0 %v1537
    %v1539 = vpop.f32.mrf.mxu0
    %v1540 = vadd.f32 %v1210, %v1539
    %v1541 = vand.u32 %v410, 4294901760
    %v1542 = vsub.f32 %v410, %v1541
    %1543 = vmatmul.f32.gmra.mxu0 %v1542
    %v1544 = vpop.f32.mrf.mxu0
    %v1545 = vadd.f32 %v1214, %v1544
    %v1546 = vand.u32 %v413, 4294901760
    %v1547 = vsub.f32 %v413, %v1546
    %1548 = vmatmul.f32.gmra.mxu0 %v1547
    %v1549 = vpop.f32.mrf.mxu0
    %v1550 = vadd.f32 %v1218, %v1549
    %v1551 = vand.u32 %v416, 4294901760
    %v1552 = vsub.f32 %v416, %v1551
    %1553 = vmatmul.f32.gmra.mxu0 %v1552
    %v1554 = vpop.f32.mrf.mxu0
    %v1555 = vadd.f32 %v1222, %v1554
    %v1556 = vand.u32 %v419, 4294901760
    %v1557 = vsub.f32 %v419, %v1556
    %1558 = vmatmul.f32.gmra.mxu0 %v1557
    %v1559 = vpop.f32.mrf.mxu0
    %v1560 = vadd.f32 %v1226, %v1559
    %v1561 = vand.u32 %v422, 4294901760
    %v1562 = vsub.f32 %v422, %v1561
    %1563 = vmatmul.f32.gmra.mxu0 %v1562
    %v1564 = vpop.f32.mrf.mxu0
    %v1565 = vadd.f32 %v1230, %v1564
    %v1566 = vand.u32 %v425, 4294901760
    %v1567 = vsub.f32 %v425, %v1566
    %1568 = vmatmul.f32.gmra.mxu0 %v1567
    %v1569 = vpop.f32.mrf.mxu0
    %v1570 = vadd.f32 %v1234, %v1569
    %v1571 = vand.u32 %v428, 4294901760
    %v1572 = vsub.f32 %v428, %v1571
    %1573 = vmatmul.f32.gmra.mxu0 %v1572
    %v1574 = vpop.f32.mrf.mxu0
    %v1575 = vadd.f32 %v1238, %v1574
    %v1576 = vand.u32 %v431, 4294901760
    %v1577 = vsub.f32 %v431, %v1576
    %1578 = vmatmul.f32.gmra.mxu0 %v1577
    %v1579 = vpop.f32.mrf.mxu0
    %v1580 = vadd.f32 %v1242, %v1579
    %v1581 = vand.u32 %v434, 4294901760
    %v1582 = vsub.f32 %v434, %v1581
    %1583 = vmatmul.f32.gmra.mxu0 %v1582
    %v1584 = vpop.f32.mrf.mxu0
    %v1585 = vadd.f32 %v1246, %v1584
    %v1586 = vand.u32 %v437, 4294901760
    %v1587 = vsub.f32 %v437, %v1586
    %1588 = vmatmul.f32.gmra.mxu0 %v1587
    %v1589 = vpop.f32.mrf.mxu0
    %v1590 = vadd.f32 %v1250, %v1589
    %v1591 = vand.u32 %v440, 4294901760
    %v1592 = vsub.f32 %v440, %v1591
    %1593 = vmatmul.f32.gmra.mxu0 %v1592
    %v1594 = vpop.f32.mrf.mxu0
    %v1595 = vadd.f32 %v1254, %v1594
    %1596 = vdwg.mxu0
    %1597 = vmatpush.msra.mxu0 0.0
    %1598 = vmatpush.msra.mxu0 0.0
    %1599 = vmatpush.msra.mxu0 0.0
    %1600 = vmatpush.msra.mxu0 0.0
    %1601 = vmatpush.msra.mxu0 0.0
    %1602 = vmatpush.msra.mxu0 0.0
    %1603 = vmatpush.msra.mxu0 0.0
    %1604 = vmatpush.msra.mxu0 0.0
    %1605 = vmatpush.msra.mxu0 0.0
    %1606 = vmatpush.msra.mxu0 0.0
    %1607 = vmatpush.msra.mxu0 0.0
    %1608 = vmatpush.msra.mxu0 0.0
    %1609 = vmatpush.msra.mxu0 0.0
    %1610 = vmatpush.msra.mxu0 0.0
    %v1611 = vand.u32 %v120, 4294901760
    %1612 = vmatpush.msra.mxu0 %v1611
    %v1613 = vand.u32 %v119, 4294901760
    %1614 = vmatpush.msra.mxu0 %v1613
    %v1615 = vand.u32 %v251, 4294901760
    %v1616 = vsub.f32 %v251, %v1615
    %v1617 = vand.u32 %v1616, 4294901760
    %1618 = vmatmul.f32.gmra.mxu0 %v1617
    %v1619 = vpop.f32.mrf.mxu0
    %v1620 = vadd.f32 %v1280, %v1619
    %v1621 = vand.u32 %v254, 4294901760
    %v1622 = vsub.f32 %v254, %v1621
    %v1623 = vand.u32 %v1622, 4294901760
    %1624 = vmatmul.f32.gmra.mxu0 %v1623
    %v1625 = vpop.f32.mrf.mxu0
    %v1626 = vadd.f32 %v1285, %v1625
    %v1627 = vand.u32 %v257, 4294901760
    %v1628 = vsub.f32 %v257, %v1627
    %v1629 = vand.u32 %v1628, 4294901760
    %1630 = vmatmul.f32.gmra.mxu0 %v1629
    %v1631 = vpop.f32.mrf.mxu0
    %v1632 = vadd.f32 %v1290, %v1631
    %v1633 = vand.u32 %v260, 4294901760
    %v1634 = vsub.f32 %v260, %v1633
    %v1635 = vand.u32 %v1634, 4294901760
    %1636 = vmatmul.f32.gmra.mxu0 %v1635
    %v1637 = vpop.f32.mrf.mxu0
    %v1638 = vadd.f32 %v1295, %v1637
    %v1639 = vand.u32 %v263, 4294901760
    %v1640 = vsub.f32 %v263, %v1639
    %v1641 = vand.u32 %v1640, 4294901760
    %1642 = vmatmul.f32.gmra.mxu0 %v1641
    %v1643 = vpop.f32.mrf.mxu0
    %v1644 = vadd.f32 %v1300, %v1643
    %v1645 = vand.u32 %v266, 4294901760
    %v1646 = vsub.f32 %v266, %v1645
    %v1647 = vand.u32 %v1646, 4294901760
    %1648 = vmatmul.f32.gmra.mxu0 %v1647
    %v1649 = vpop.f32.mrf.mxu0
    %v1650 = vadd.f32 %v1305, %v1649
    %v1651 = vand.u32 %v269, 4294901760
    %v1652 = vsub.f32 %v269, %v1651
    %v1653 = vand.u32 %v1652, 4294901760
    %1654 = vmatmul.f32.gmra.mxu0 %v1653
    %v1655 = vpop.f32.mrf.mxu0
    %v1656 = vadd.f32 %v1310, %v1655
    %v1657 = vand.u32 %v272, 4294901760
    %v1658 = vsub.f32 %v272, %v1657
    %v1659 = vand.u32 %v1658, 4294901760
    %1660 = vmatmul.f32.gmra.mxu0 %v1659
    %v1661 = vpop.f32.mrf.mxu0
    %v1662 = vadd.f32 %v1315, %v1661
    %v1663 = vand.u32 %v275, 4294901760
    %v1664 = vsub.f32 %v275, %v1663
    %v1665 = vand.u32 %v1664, 4294901760
    %1666 = vmatmul.f32.gmra.mxu0 %v1665
    %v1667 = vpop.f32.mrf.mxu0
    %v1668 = vadd.f32 %v1320, %v1667
    %v1669 = vand.u32 %v278, 4294901760
    %v1670 = vsub.f32 %v278, %v1669
    %v1671 = vand.u32 %v1670, 4294901760
    %1672 = vmatmul.f32.gmra.mxu0 %v1671
    %v1673 = vpop.f32.mrf.mxu0
    %v1674 = vadd.f32 %v1325, %v1673
    %v1675 = vand.u32 %v281, 4294901760
    %v1676 = vsub.f32 %v281, %v1675
    %v1677 = vand.u32 %v1676, 4294901760
    %1678 = vmatmul.f32.gmra.mxu0 %v1677
    %v1679 = vpop.f32.mrf.mxu0
    %v1680 = vadd.f32 %v1330, %v1679
    %v1681 = vand.u32 %v284, 4294901760
    %v1682 = vsub.f32 %v284, %v1681
    %v1683 = vand.u32 %v1682, 4294901760
    %1684 = vmatmul.f32.gmra.mxu0 %v1683
    %v1685 = vpop.f32.mrf.mxu0
    %v1686 = vadd.f32 %v1335, %v1685
    %v1687 = vand.u32 %v287, 4294901760
    %v1688 = vsub.f32 %v287, %v1687
    %v1689 = vand.u32 %v1688, 4294901760
    %1690 = vmatmul.f32.gmra.mxu0 %v1689
    %v1691 = vpop.f32.mrf.mxu0
    %v1692 = vadd.f32 %v1340, %v1691
    %v1693 = vand.u32 %v290, 4294901760
    %v1694 = vsub.f32 %v290, %v1693
    %v1695 = vand.u32 %v1694, 4294901760
    %1696 = vmatmul.f32.gmra.mxu0 %v1695
    %v1697 = vpop.f32.mrf.mxu0
    %v1698 = vadd.f32 %v1345, %v1697
    %v1699 = vand.u32 %v293, 4294901760
    %v1700 = vsub.f32 %v293, %v1699
    %v1701 = vand.u32 %v1700, 4294901760
    %1702 = vmatmul.f32.gmra.mxu0 %v1701
    %v1703 = vpop.f32.mrf.mxu0
    %v1704 = vadd.f32 %v1350, %v1703
    %v1705 = vand.u32 %v296, 4294901760
    %v1706 = vsub.f32 %v296, %v1705
    %v1707 = vand.u32 %v1706, 4294901760
    %1708 = vmatmul.f32.gmra.mxu0 %v1707
    %v1709 = vpop.f32.mrf.mxu0
    %v1710 = vadd.f32 %v1355, %v1709
    %v1711 = vand.u32 %v299, 4294901760
    %v1712 = vsub.f32 %v299, %v1711
    %v1713 = vand.u32 %v1712, 4294901760
    %1714 = vmatmul.f32.gmra.mxu0 %v1713
    %v1715 = vpop.f32.mrf.mxu0
    %v1716 = vadd.f32 %v1360, %v1715
    %v1717 = vand.u32 %v302, 4294901760
    %v1718 = vsub.f32 %v302, %v1717
    %v1719 = vand.u32 %v1718, 4294901760
    %1720 = vmatmul.f32.gmra.mxu0 %v1719
    %v1721 = vpop.f32.mrf.mxu0
    %v1722 = vadd.f32 %v1365, %v1721
    %v1723 = vand.u32 %v305, 4294901760
    %v1724 = vsub.f32 %v305, %v1723
    %v1725 = vand.u32 %v1724, 4294901760
    %1726 = vmatmul.f32.gmra.mxu0 %v1725
    %v1727 = vpop.f32.mrf.mxu0
    %v1728 = vadd.f32 %v1370, %v1727
    %v1729 = vand.u32 %v308, 4294901760
    %v1730 = vsub.f32 %v308, %v1729
    %v1731 = vand.u32 %v1730, 4294901760
    %1732 = vmatmul.f32.gmra.mxu0 %v1731
    %v1733 = vpop.f32.mrf.mxu0
    %v1734 = vadd.f32 %v1375, %v1733
    %v1735 = vand.u32 %v311, 4294901760
    %v1736 = vsub.f32 %v311, %v1735
    %v1737 = vand.u32 %v1736, 4294901760
    %1738 = vmatmul.f32.gmra.mxu0 %v1737
    %v1739 = vpop.f32.mrf.mxu0
    %v1740 = vadd.f32 %v1380, %v1739
    %v1741 = vand.u32 %v314, 4294901760
    %v1742 = vsub.f32 %v314, %v1741
    %v1743 = vand.u32 %v1742, 4294901760
    %1744 = vmatmul.f32.gmra.mxu0 %v1743
    %v1745 = vpop.f32.mrf.mxu0
    %v1746 = vadd.f32 %v1385, %v1745
    %v1747 = vand.u32 %v317, 4294901760
    %v1748 = vsub.f32 %v317, %v1747
    %v1749 = vand.u32 %v1748, 4294901760
    %1750 = vmatmul.f32.gmra.mxu0 %v1749
    %v1751 = vpop.f32.mrf.mxu0
    %v1752 = vadd.f32 %v1390, %v1751
    %v1753 = vand.u32 %v320, 4294901760
    %v1754 = vsub.f32 %v320, %v1753
    %v1755 = vand.u32 %v1754, 4294901760
    %1756 = vmatmul.f32.gmra.mxu0 %v1755
    %v1757 = vpop.f32.mrf.mxu0
    %v1758 = vadd.f32 %v1395, %v1757
    %v1759 = vand.u32 %v323, 4294901760
    %v1760 = vsub.f32 %v323, %v1759
    %v1761 = vand.u32 %v1760, 4294901760
    %1762 = vmatmul.f32.gmra.mxu0 %v1761
    %v1763 = vpop.f32.mrf.mxu0
    %v1764 = vadd.f32 %v1400, %v1763
    %v1765 = vand.u32 %v326, 4294901760
    %v1766 = vsub.f32 %v326, %v1765
    %v1767 = vand.u32 %v1766, 4294901760
    %1768 = vmatmul.f32.gmra.mxu0 %v1767
    %v1769 = vpop.f32.mrf.mxu0
    %v1770 = vadd.f32 %v1405, %v1769
    %v1771 = vand.u32 %v329, 4294901760
    %v1772 = vsub.f32 %v329, %v1771
    %v1773 = vand.u32 %v1772, 4294901760
    %1774 = vmatmul.f32.gmra.mxu0 %v1773
    %v1775 = vpop.f32.mrf.mxu0
    %v1776 = vadd.f32 %v1410, %v1775
    %v1777 = vand.u32 %v332, 4294901760
    %v1778 = vsub.f32 %v332, %v1777
    %v1779 = vand.u32 %v1778, 4294901760
    %1780 = vmatmul.f32.gmra.mxu0 %v1779
    %v1781 = vpop.f32.mrf.mxu0
    %v1782 = vadd.f32 %v1415, %v1781
    %v1783 = vand.u32 %v335, 4294901760
    %v1784 = vsub.f32 %v335, %v1783
    %v1785 = vand.u32 %v1784, 4294901760
    %1786 = vmatmul.f32.gmra.mxu0 %v1785
    %v1787 = vpop.f32.mrf.mxu0
    %v1788 = vadd.f32 %v1420, %v1787
    %v1789 = vand.u32 %v338, 4294901760
    %v1790 = vsub.f32 %v338, %v1789
    %v1791 = vand.u32 %v1790, 4294901760
    %1792 = vmatmul.f32.gmra.mxu0 %v1791
    %v1793 = vpop.f32.mrf.mxu0
    %v1794 = vadd.f32 %v1425, %v1793
    %v1795 = vand.u32 %v341, 4294901760
    %v1796 = vsub.f32 %v341, %v1795
    %v1797 = vand.u32 %v1796, 4294901760
    %1798 = vmatmul.f32.gmra.mxu0 %v1797
    %v1799 = vpop.f32.mrf.mxu0
    %v1800 = vadd.f32 %v1430, %v1799
    %v1801 = vand.u32 %v344, 4294901760
    %v1802 = vsub.f32 %v344, %v1801
    %v1803 = vand.u32 %v1802, 4294901760
    %1804 = vmatmul.f32.gmra.mxu0 %v1803
    %v1805 = vpop.f32.mrf.mxu0
    %v1806 = vadd.f32 %v1435, %v1805
    %v1807 = vand.u32 %v347, 4294901760
    %v1808 = vsub.f32 %v347, %v1807
    %v1809 = vand.u32 %v1808, 4294901760
    %1810 = vmatmul.f32.gmra.mxu0 %v1809
    %v1811 = vpop.f32.mrf.mxu0
    %v1812 = vadd.f32 %v1440, %v1811
    %v1813 = vand.u32 %v350, 4294901760
    %v1814 = vsub.f32 %v350, %v1813
    %v1815 = vand.u32 %v1814, 4294901760
    %1816 = vmatmul.f32.gmra.mxu0 %v1815
    %v1817 = vpop.f32.mrf.mxu0
    %v1818 = vadd.f32 %v1445, %v1817
    %v1819 = vand.u32 %v353, 4294901760
    %v1820 = vsub.f32 %v353, %v1819
    %v1821 = vand.u32 %v1820, 4294901760
    %1822 = vmatmul.f32.gmra.mxu0 %v1821
    %v1823 = vpop.f32.mrf.mxu0
    %v1824 = vadd.f32 %v1450, %v1823
    %v1825 = vand.u32 %v356, 4294901760
    %v1826 = vsub.f32 %v356, %v1825
    %v1827 = vand.u32 %v1826, 4294901760
    %1828 = vmatmul.f32.gmra.mxu0 %v1827
    %v1829 = vpop.f32.mrf.mxu0
    %v1830 = vadd.f32 %v1455, %v1829
    %v1831 = vand.u32 %v359, 4294901760
    %v1832 = vsub.f32 %v359, %v1831
    %v1833 = vand.u32 %v1832, 4294901760
    %1834 = vmatmul.f32.gmra.mxu0 %v1833
    %v1835 = vpop.f32.mrf.mxu0
    %v1836 = vadd.f32 %v1460, %v1835
    %v1837 = vand.u32 %v362, 4294901760
    %v1838 = vsub.f32 %v362, %v1837
    %v1839 = vand.u32 %v1838, 4294901760
    %1840 = vmatmul.f32.gmra.mxu0 %v1839
    %v1841 = vpop.f32.mrf.mxu0
    %v1842 = vadd.f32 %v1465, %v1841
    %v1843 = vand.u32 %v365, 4294901760
    %v1844 = vsub.f32 %v365, %v1843
    %v1845 = vand.u32 %v1844, 4294901760
    %1846 = vmatmul.f32.gmra.mxu0 %v1845
    %v1847 = vpop.f32.mrf.mxu0
    %v1848 = vadd.f32 %v1470, %v1847
    %v1849 = vand.u32 %v368, 4294901760
    %v1850 = vsub.f32 %v368, %v1849
    %v1851 = vand.u32 %v1850, 4294901760
    %1852 = vmatmul.f32.gmra.mxu0 %v1851
    %v1853 = vpop.f32.mrf.mxu0
    %v1854 = vadd.f32 %v1475, %v1853
    %v1855 = vand.u32 %v371, 4294901760
    %v1856 = vsub.f32 %v371, %v1855
    %v1857 = vand.u32 %v1856, 4294901760
    %1858 = vmatmul.f32.gmra.mxu0 %v1857
    %v1859 = vpop.f32.mrf.mxu0
    %v1860 = vadd.f32 %v1480, %v1859
    %v1861 = vand.u32 %v374, 4294901760
    %v1862 = vsub.f32 %v374, %v1861
    %v1863 = vand.u32 %v1862, 4294901760
    %1864 = vmatmul.f32.gmra.mxu0 %v1863
    %v1865 = vpop.f32.mrf.mxu0
    %v1866 = vadd.f32 %v1485, %v1865
    %v1867 = vand.u32 %v377, 4294901760
    %v1868 = vsub.f32 %v377, %v1867
    %v1869 = vand.u32 %v1868, 4294901760
    %1870 = vmatmul.f32.gmra.mxu0 %v1869
    %v1871 = vpop.f32.mrf.mxu0
    %v1872 = vadd.f32 %v1490, %v1871
    %v1873 = vand.u32 %v380, 4294901760
    %v1874 = vsub.f32 %v380, %v1873
    %v1875 = vand.u32 %v1874, 4294901760
    %1876 = vmatmul.f32.gmra.mxu0 %v1875
    %v1877 = vpop.f32.mrf.mxu0
    %v1878 = vadd.f32 %v1495, %v1877
    %v1879 = vand.u32 %v383, 4294901760
    %v1880 = vsub.f32 %v383, %v1879
    %v1881 = vand.u32 %v1880, 4294901760
    %1882 = vmatmul.f32.gmra.mxu0 %v1881
    %v1883 = vpop.f32.mrf.mxu0
    %v1884 = vadd.f32 %v1500, %v1883
    %v1885 = vand.u32 %v386, 4294901760
    %v1886 = vsub.f32 %v386, %v1885
    %v1887 = vand.u32 %v1886, 4294901760
    %1888 = vmatmul.f32.gmra.mxu0 %v1887
    %v1889 = vpop.f32.mrf.mxu0
    %v1890 = vadd.f32 %v1505, %v1889
    %v1891 = vand.u32 %v389, 4294901760
    %v1892 = vsub.f32 %v389, %v1891
    %v1893 = vand.u32 %v1892, 4294901760
    %1894 = vmatmul.f32.gmra.mxu0 %v1893
    %v1895 = vpop.f32.mrf.mxu0
    %v1896 = vadd.f32 %v1510, %v1895
    %v1897 = vand.u32 %v392, 4294901760
    %v1898 = vsub.f32 %v392, %v1897
    %v1899 = vand.u32 %v1898, 4294901760
    %1900 = vmatmul.f32.gmra.mxu0 %v1899
    %v1901 = vpop.f32.mrf.mxu0
    %v1902 = vadd.f32 %v1515, %v1901
    %v1903 = vand.u32 %v395, 4294901760
    %v1904 = vsub.f32 %v395, %v1903
    %v1905 = vand.u32 %v1904, 4294901760
    %1906 = vmatmul.f32.gmra.mxu0 %v1905
    %v1907 = vpop.f32.mrf.mxu0
    %v1908 = vadd.f32 %v1520, %v1907
    %v1909 = vand.u32 %v398, 4294901760
    %v1910 = vsub.f32 %v398, %v1909
    %v1911 = vand.u32 %v1910, 4294901760
    %1912 = vmatmul.f32.gmra.mxu0 %v1911
    %v1913 = vpop.f32.mrf.mxu0
    %v1914 = vadd.f32 %v1525, %v1913
    %v1915 = vand.u32 %v401, 4294901760
    %v1916 = vsub.f32 %v401, %v1915
    %v1917 = vand.u32 %v1916, 4294901760
    %1918 = vmatmul.f32.gmra.mxu0 %v1917
    %v1919 = vpop.f32.mrf.mxu0
    %v1920 = vadd.f32 %v1530, %v1919
    %v1921 = vand.u32 %v404, 4294901760
    %v1922 = vsub.f32 %v404, %v1921
    %v1923 = vand.u32 %v1922, 4294901760
    %1924 = vmatmul.f32.gmra.mxu0 %v1923
    %v1925 = vpop.f32.mrf.mxu0
    %v1926 = vadd.f32 %v1535, %v1925
    %v1927 = vand.u32 %v407, 4294901760
    %v1928 = vsub.f32 %v407, %v1927
    %v1929 = vand.u32 %v1928, 4294901760
    %1930 = vmatmul.f32.gmra.mxu0 %v1929
    %v1931 = vpop.f32.mrf.mxu0
    %v1932 = vadd.f32 %v1540, %v1931
    %v1933 = vand.u32 %v410, 4294901760
    %v1934 = vsub.f32 %v410, %v1933
    %v1935 = vand.u32 %v1934, 4294901760
    %1936 = vmatmul.f32.gmra.mxu0 %v1935
    %v1937 = vpop.f32.mrf.mxu0
    %v1938 = vadd.f32 %v1545, %v1937
    %v1939 = vand.u32 %v413, 4294901760
    %v1940 = vsub.f32 %v413, %v1939
    %v1941 = vand.u32 %v1940, 4294901760
    %1942 = vmatmul.f32.gmra.mxu0 %v1941
    %v1943 = vpop.f32.mrf.mxu0
    %v1944 = vadd.f32 %v1550, %v1943
    %v1945 = vand.u32 %v416, 4294901760
    %v1946 = vsub.f32 %v416, %v1945
    %v1947 = vand.u32 %v1946, 4294901760
    %1948 = vmatmul.f32.gmra.mxu0 %v1947
    %v1949 = vpop.f32.mrf.mxu0
    %v1950 = vadd.f32 %v1555, %v1949
    %v1951 = vand.u32 %v419, 4294901760
    %v1952 = vsub.f32 %v419, %v1951
    %v1953 = vand.u32 %v1952, 4294901760
    %1954 = vmatmul.f32.gmra.mxu0 %v1953
    %v1955 = vpop.f32.mrf.mxu0
    %v1956 = vadd.f32 %v1560, %v1955
    %v1957 = vand.u32 %v422, 4294901760
    %v1958 = vsub.f32 %v422, %v1957
    %v1959 = vand.u32 %v1958, 4294901760
    %1960 = vmatmul.f32.gmra.mxu0 %v1959
    %v1961 = vpop.f32.mrf.mxu0
    %v1962 = vadd.f32 %v1565, %v1961
    %v1963 = vand.u32 %v425, 4294901760
    %v1964 = vsub.f32 %v425, %v1963
    %v1965 = vand.u32 %v1964, 4294901760
    %1966 = vmatmul.f32.gmra.mxu0 %v1965
    %v1967 = vpop.f32.mrf.mxu0
    %v1968 = vadd.f32 %v1570, %v1967
    %v1969 = vand.u32 %v428, 4294901760
    %v1970 = vsub.f32 %v428, %v1969
    %v1971 = vand.u32 %v1970, 4294901760
    %1972 = vmatmul.f32.gmra.mxu0 %v1971
    %v1973 = vpop.f32.mrf.mxu0
    %v1974 = vadd.f32 %v1575, %v1973
    %v1975 = vand.u32 %v431, 4294901760
    %v1976 = vsub.f32 %v431, %v1975
    %v1977 = vand.u32 %v1976, 4294901760
    %1978 = vmatmul.f32.gmra.mxu0 %v1977
    %v1979 = vpop.f32.mrf.mxu0
    %v1980 = vadd.f32 %v1580, %v1979
    %v1981 = vand.u32 %v434, 4294901760
    %v1982 = vsub.f32 %v434, %v1981
    %v1983 = vand.u32 %v1982, 4294901760
    %1984 = vmatmul.f32.gmra.mxu0 %v1983
    %v1985 = vpop.f32.mrf.mxu0
    %v1986 = vadd.f32 %v1585, %v1985
    %v1987 = vand.u32 %v437, 4294901760
    %v1988 = vsub.f32 %v437, %v1987
    %v1989 = vand.u32 %v1988, 4294901760
    %1990 = vmatmul.f32.gmra.mxu0 %v1989
    %v1991 = vpop.f32.mrf.mxu0
    %v1992 = vadd.f32 %v1590, %v1991
    %v1993 = vand.u32 %v440, 4294901760
    %v1994 = vsub.f32 %v440, %v1993
    %v1995 = vand.u32 %v1994, 4294901760
    %1996 = vmatmul.f32.gmra.mxu0 %v1995
    %v1997 = vpop.f32.mrf.mxu0
    %v1998 = vadd.f32 %v1595, %v1997
    %1999 = vdwg.mxu0
    %2000 = vmatpush.msra.mxu0 0.0
    %2001 = vmatpush.msra.mxu0 0.0
    %2002 = vmatpush.msra.mxu0 0.0
    %2003 = vmatpush.msra.mxu0 0.0
    %2004 = vmatpush.msra.mxu0 0.0
    %2005 = vmatpush.msra.mxu0 0.0
    %2006 = vmatpush.msra.mxu0 0.0
    %2007 = vmatpush.msra.mxu0 0.0
    %2008 = vmatpush.msra.mxu0 0.0
    %2009 = vmatpush.msra.mxu0 0.0
    %2010 = vmatpush.msra.mxu0 0.0
    %2011 = vmatpush.msra.mxu0 0.0
    %2012 = vmatpush.msra.mxu0 0.0
    %2013 = vmatpush.msra.mxu0 0.0
    %v2014 = vand.u32 %v120, 4294901760
    %v2015 = vsub.f32 %v120, %v2014
    %v2016 = vand.u32 %v2015, 4294901760
    %2017 = vmatpush.msra.mxu0 %v2016
    %v2018 = vand.u32 %v119, 4294901760
    %v2019 = vsub.f32 %v119, %v2018
    %v2020 = vand.u32 %v2019, 4294901760
    %2021 = vmatpush.msra.mxu0 %v2020
    %v2022 = vand.u32 %v251, 4294901760
    %2023 = vmatmul.f32.gmra.mxu0 %v2022
    %v2024 = vpop.f32.mrf.mxu0
    %v2025 = vadd.f32 %v1620, %v2024
    %v2026 = vand.u32 %v254, 4294901760
    %2027 = vmatmul.f32.gmra.mxu0 %v2026
    %v2028 = vpop.f32.mrf.mxu0
    %v2029 = vadd.f32 %v1626, %v2028
    %v2030 = vand.u32 %v257, 4294901760
    %2031 = vmatmul.f32.gmra.mxu0 %v2030
    %v2032 = vpop.f32.mrf.mxu0
    %v2033 = vadd.f32 %v1632, %v2032
    %v2034 = vand.u32 %v260, 4294901760
    %2035 = vmatmul.f32.gmra.mxu0 %v2034
    %v2036 = vpop.f32.mrf.mxu0
    %v2037 = vadd.f32 %v1638, %v2036
    %v2038 = vand.u32 %v263, 4294901760
    %2039 = vmatmul.f32.gmra.mxu0 %v2038
    %v2040 = vpop.f32.mrf.mxu0
    %v2041 = vadd.f32 %v1644, %v2040
    %v2042 = vand.u32 %v266, 4294901760
    %2043 = vmatmul.f32.gmra.mxu0 %v2042
    %v2044 = vpop.f32.mrf.mxu0
    %v2045 = vadd.f32 %v1650, %v2044
    %v2046 = vand.u32 %v269, 4294901760
    %2047 = vmatmul.f32.gmra.mxu0 %v2046
    %v2048 = vpop.f32.mrf.mxu0
    %v2049 = vadd.f32 %v1656, %v2048
    %v2050 = vand.u32 %v272, 4294901760
    %2051 = vmatmul.f32.gmra.mxu0 %v2050
    %v2052 = vpop.f32.mrf.mxu0
    %v2053 = vadd.f32 %v1662, %v2052
    %v2054 = vand.u32 %v275, 4294901760
    %2055 = vmatmul.f32.gmra.mxu0 %v2054
    %v2056 = vpop.f32.mrf.mxu0
    %v2057 = vadd.f32 %v1668, %v2056
    %v2058 = vand.u32 %v278, 4294901760
    %2059 = vmatmul.f32.gmra.mxu0 %v2058
    %v2060 = vpop.f32.mrf.mxu0
    %v2061 = vadd.f32 %v1674, %v2060
    %v2062 = vand.u32 %v281, 4294901760
    %2063 = vmatmul.f32.gmra.mxu0 %v2062
    %v2064 = vpop.f32.mrf.mxu0
    %v2065 = vadd.f32 %v1680, %v2064
    %v2066 = vand.u32 %v284, 4294901760
    %2067 = vmatmul.f32.gmra.mxu0 %v2066
    %v2068 = vpop.f32.mrf.mxu0
    %v2069 = vadd.f32 %v1686, %v2068
    %v2070 = vand.u32 %v287, 4294901760
    %2071 = vmatmul.f32.gmra.mxu0 %v2070
    %v2072 = vpop.f32.mrf.mxu0
    %v2073 = vadd.f32 %v1692, %v2072
    %v2074 = vand.u32 %v290, 4294901760
    %2075 = vmatmul.f32.gmra.mxu0 %v2074
    %v2076 = vpop.f32.mrf.mxu0
    %v2077 = vadd.f32 %v1698, %v2076
    %v2078 = vand.u32 %v293, 4294901760
    %2079 = vmatmul.f32.gmra.mxu0 %v2078
    %v2080 = vpop.f32.mrf.mxu0
    %v2081 = vadd.f32 %v1704, %v2080
    %v2082 = vand.u32 %v296, 4294901760
    %2083 = vmatmul.f32.gmra.mxu0 %v2082
    %v2084 = vpop.f32.mrf.mxu0
    %v2085 = vadd.f32 %v1710, %v2084
    %v2086 = vand.u32 %v299, 4294901760
    %2087 = vmatmul.f32.gmra.mxu0 %v2086
    %v2088 = vpop.f32.mrf.mxu0
    %v2089 = vadd.f32 %v1716, %v2088
    %v2090 = vand.u32 %v302, 4294901760
    %2091 = vmatmul.f32.gmra.mxu0 %v2090
    %v2092 = vpop.f32.mrf.mxu0
    %v2093 = vadd.f32 %v1722, %v2092
    %v2094 = vand.u32 %v305, 4294901760
    %2095 = vmatmul.f32.gmra.mxu0 %v2094
    %v2096 = vpop.f32.mrf.mxu0
    %v2097 = vadd.f32 %v1728, %v2096
    %v2098 = vand.u32 %v308, 4294901760
    %2099 = vmatmul.f32.gmra.mxu0 %v2098
    %v2100 = vpop.f32.mrf.mxu0
    %v2101 = vadd.f32 %v1734, %v2100
    %v2102 = vand.u32 %v311, 4294901760
    %2103 = vmatmul.f32.gmra.mxu0 %v2102
    %v2104 = vpop.f32.mrf.mxu0
    %v2105 = vadd.f32 %v1740, %v2104
    %v2106 = vand.u32 %v314, 4294901760
    %2107 = vmatmul.f32.gmra.mxu0 %v2106
    %v2108 = vpop.f32.mrf.mxu0
    %v2109 = vadd.f32 %v1746, %v2108
    %v2110 = vand.u32 %v317, 4294901760
    %2111 = vmatmul.f32.gmra.mxu0 %v2110
    %v2112 = vpop.f32.mrf.mxu0
    %v2113 = vadd.f32 %v1752, %v2112
    %v2114 = vand.u32 %v320, 4294901760
    %2115 = vmatmul.f32.gmra.mxu0 %v2114
    %v2116 = vpop.f32.mrf.mxu0
    %v2117 = vadd.f32 %v1758, %v2116
    %v2118 = vand.u32 %v323, 4294901760
    %2119 = vmatmul.f32.gmra.mxu0 %v2118
    %v2120 = vpop.f32.mrf.mxu0
    %v2121 = vadd.f32 %v1764, %v2120
    %v2122 = vand.u32 %v326, 4294901760
    %2123 = vmatmul.f32.gmra.mxu0 %v2122
    %v2124 = vpop.f32.mrf.mxu0
    %v2125 = vadd.f32 %v1770, %v2124
    %v2126 = vand.u32 %v329, 4294901760
    %2127 = vmatmul.f32.gmra.mxu0 %v2126
    %v2128 = vpop.f32.mrf.mxu0
    %v2129 = vadd.f32 %v1776, %v2128
    %v2130 = vand.u32 %v332, 4294901760
    %2131 = vmatmul.f32.gmra.mxu0 %v2130
    %v2132 = vpop.f32.mrf.mxu0
    %v2133 = vadd.f32 %v1782, %v2132
    %v2134 = vand.u32 %v335, 4294901760
    %2135 = vmatmul.f32.gmra.mxu0 %v2134
    %v2136 = vpop.f32.mrf.mxu0
    %v2137 = vadd.f32 %v1788, %v2136
    %v2138 = vand.u32 %v338, 4294901760
    %2139 = vmatmul.f32.gmra.mxu0 %v2138
    %v2140 = vpop.f32.mrf.mxu0
    %v2141 = vadd.f32 %v1794, %v2140
    %v2142 = vand.u32 %v341, 4294901760
    %2143 = vmatmul.f32.gmra.mxu0 %v2142
    %v2144 = vpop.f32.mrf.mxu0
    %v2145 = vadd.f32 %v1800, %v2144
    %v2146 = vand.u32 %v344, 4294901760
    %2147 = vmatmul.f32.gmra.mxu0 %v2146
    %v2148 = vpop.f32.mrf.mxu0
    %v2149 = vadd.f32 %v1806, %v2148
    %v2150 = vand.u32 %v347, 4294901760
    %2151 = vmatmul.f32.gmra.mxu0 %v2150
    %v2152 = vpop.f32.mrf.mxu0
    %v2153 = vadd.f32 %v1812, %v2152
    %v2154 = vand.u32 %v350, 4294901760
    %2155 = vmatmul.f32.gmra.mxu0 %v2154
    %v2156 = vpop.f32.mrf.mxu0
    %v2157 = vadd.f32 %v1818, %v2156
    %v2158 = vand.u32 %v353, 4294901760
    %2159 = vmatmul.f32.gmra.mxu0 %v2158
    %v2160 = vpop.f32.mrf.mxu0
    %v2161 = vadd.f32 %v1824, %v2160
    %v2162 = vand.u32 %v356, 4294901760
    %2163 = vmatmul.f32.gmra.mxu0 %v2162
    %v2164 = vpop.f32.mrf.mxu0
    %v2165 = vadd.f32 %v1830, %v2164
    %v2166 = vand.u32 %v359, 4294901760
    %2167 = vmatmul.f32.gmra.mxu0 %v2166
    %v2168 = vpop.f32.mrf.mxu0
    %v2169 = vadd.f32 %v1836, %v2168
    %v2170 = vand.u32 %v362, 4294901760
    %2171 = vmatmul.f32.gmra.mxu0 %v2170
    %v2172 = vpop.f32.mrf.mxu0
    %v2173 = vadd.f32 %v1842, %v2172
    %v2174 = vand.u32 %v365, 4294901760
    %2175 = vmatmul.f32.gmra.mxu0 %v2174
    %v2176 = vpop.f32.mrf.mxu0
    %v2177 = vadd.f32 %v1848, %v2176
    %v2178 = vand.u32 %v368, 4294901760
    %2179 = vmatmul.f32.gmra.mxu0 %v2178
    %v2180 = vpop.f32.mrf.mxu0
    %v2181 = vadd.f32 %v1854, %v2180
    %v2182 = vand.u32 %v371, 4294901760
    %2183 = vmatmul.f32.gmra.mxu0 %v2182
    %v2184 = vpop.f32.mrf.mxu0
    %v2185 = vadd.f32 %v1860, %v2184
    %v2186 = vand.u32 %v374, 4294901760
    %2187 = vmatmul.f32.gmra.mxu0 %v2186
    %v2188 = vpop.f32.mrf.mxu0
    %v2189 = vadd.f32 %v1866, %v2188
    %v2190 = vand.u32 %v377, 4294901760
    %2191 = vmatmul.f32.gmra.mxu0 %v2190
    %v2192 = vpop.f32.mrf.mxu0
    %v2193 = vadd.f32 %v1872, %v2192
    %v2194 = vand.u32 %v380, 4294901760
    %2195 = vmatmul.f32.gmra.mxu0 %v2194
    %v2196 = vpop.f32.mrf.mxu0
    %v2197 = vadd.f32 %v1878, %v2196
    %v2198 = vand.u32 %v383, 4294901760
    %2199 = vmatmul.f32.gmra.mxu0 %v2198
    %v2200 = vpop.f32.mrf.mxu0
    %v2201 = vadd.f32 %v1884, %v2200
    %v2202 = vand.u32 %v386, 4294901760
    %2203 = vmatmul.f32.gmra.mxu0 %v2202
    %v2204 = vpop.f32.mrf.mxu0
    %v2205 = vadd.f32 %v1890, %v2204
    %v2206 = vand.u32 %v389, 4294901760
    %2207 = vmatmul.f32.gmra.mxu0 %v2206
    %v2208 = vpop.f32.mrf.mxu0
    %v2209 = vadd.f32 %v1896, %v2208
    %v2210 = vand.u32 %v392, 4294901760
    %2211 = vmatmul.f32.gmra.mxu0 %v2210
    %v2212 = vpop.f32.mrf.mxu0
    %v2213 = vadd.f32 %v1902, %v2212
    %v2214 = vand.u32 %v395, 4294901760
    %2215 = vmatmul.f32.gmra.mxu0 %v2214
    %v2216 = vpop.f32.mrf.mxu0
    %v2217 = vadd.f32 %v1908, %v2216
    %v2218 = vand.u32 %v398, 4294901760
    %2219 = vmatmul.f32.gmra.mxu0 %v2218
    %v2220 = vpop.f32.mrf.mxu0
    %v2221 = vadd.f32 %v1914, %v2220
    %v2222 = vand.u32 %v401, 4294901760
    %2223 = vmatmul.f32.gmra.mxu0 %v2222
    %v2224 = vpop.f32.mrf.mxu0
    %v2225 = vadd.f32 %v1920, %v2224
    %v2226 = vand.u32 %v404, 4294901760
    %2227 = vmatmul.f32.gmra.mxu0 %v2226
    %v2228 = vpop.f32.mrf.mxu0
    %v2229 = vadd.f32 %v1926, %v2228
    %v2230 = vand.u32 %v407, 4294901760
    %2231 = vmatmul.f32.gmra.mxu0 %v2230
    %v2232 = vpop.f32.mrf.mxu0
    %v2233 = vadd.f32 %v1932, %v2232
    %v2234 = vand.u32 %v410, 4294901760
    %2235 = vmatmul.f32.gmra.mxu0 %v2234
    %v2236 = vpop.f32.mrf.mxu0
    %v2237 = vadd.f32 %v1938, %v2236
    %v2238 = vand.u32 %v413, 4294901760
    %2239 = vmatmul.f32.gmra.mxu0 %v2238
    %v2240 = vpop.f32.mrf.mxu0
    %v2241 = vadd.f32 %v1944, %v2240
    %v2242 = vand.u32 %v416, 4294901760
    %2243 = vmatmul.f32.gmra.mxu0 %v2242
    %v2244 = vpop.f32.mrf.mxu0
    %v2245 = vadd.f32 %v1950, %v2244
    %v2246 = vand.u32 %v419, 4294901760
    %2247 = vmatmul.f32.gmra.mxu0 %v2246
    %v2248 = vpop.f32.mrf.mxu0
    %v2249 = vadd.f32 %v1956, %v2248
    %v2250 = vand.u32 %v422, 4294901760
    %2251 = vmatmul.f32.gmra.mxu0 %v2250
    %v2252 = vpop.f32.mrf.mxu0
    %v2253 = vadd.f32 %v1962, %v2252
    %v2254 = vand.u32 %v425, 4294901760
    %2255 = vmatmul.f32.gmra.mxu0 %v2254
    %v2256 = vpop.f32.mrf.mxu0
    %v2257 = vadd.f32 %v1968, %v2256
    %v2258 = vand.u32 %v428, 4294901760
    %2259 = vmatmul.f32.gmra.mxu0 %v2258
    %v2260 = vpop.f32.mrf.mxu0
    %v2261 = vadd.f32 %v1974, %v2260
    %v2262 = vand.u32 %v431, 4294901760
    %2263 = vmatmul.f32.gmra.mxu0 %v2262
    %v2264 = vpop.f32.mrf.mxu0
    %v2265 = vadd.f32 %v1980, %v2264
    %v2266 = vand.u32 %v434, 4294901760
    %2267 = vmatmul.f32.gmra.mxu0 %v2266
    %v2268 = vpop.f32.mrf.mxu0
    %v2269 = vadd.f32 %v1986, %v2268
    %v2270 = vand.u32 %v437, 4294901760
    %2271 = vmatmul.f32.gmra.mxu0 %v2270
    %v2272 = vpop.f32.mrf.mxu0
    %v2273 = vadd.f32 %v1992, %v2272
    %v2274 = vand.u32 %v440, 4294901760
    %2275 = vmatmul.f32.gmra.mxu0 %v2274
    %v2276 = vpop.f32.mrf.mxu0
    %v2277 = vadd.f32 %v1998, %v2276
    %2278 = vdwg.mxu0
    %2279 = vmatpush.msra.mxu0 0.0
    %2280 = vmatpush.msra.mxu0 0.0
    %2281 = vmatpush.msra.mxu0 0.0
    %2282 = vmatpush.msra.mxu0 0.0
    %2283 = vmatpush.msra.mxu0 0.0
    %2284 = vmatpush.msra.mxu0 0.0
    %2285 = vmatpush.msra.mxu0 0.0
    %2286 = vmatpush.msra.mxu0 0.0
    %2287 = vmatpush.msra.mxu0 0.0
    %2288 = vmatpush.msra.mxu0 0.0
    %2289 = vmatpush.msra.mxu0 0.0
    %2290 = vmatpush.msra.mxu0 0.0
    %2291 = vmatpush.msra.mxu0 0.0
    %2292 = vmatpush.msra.mxu0 0.0
    %v2293 = vand.u32 %v120, 4294901760
    %2294 = vmatpush.msra.mxu0 %v2293
    %v2295 = vand.u32 %v119, 4294901760
    %2296 = vmatpush.msra.mxu0 %v2295
    %v2297 = vand.u32 %v251, 4294901760
    %2298 = vmatmul.f32.gmra.mxu0 %v2297
    %v2299 = vpop.f32.mrf.mxu0
    %v2300 = vadd.f32 %v2025, %v2299
    %v2301 = vand.u32 %v254, 4294901760
    %2302 = vmatmul.f32.gmra.mxu0 %v2301
    %v2303 = vpop.f32.mrf.mxu0
    %v2304 = vadd.f32 %v2029, %v2303
    %v2305 = vand.u32 %v257, 4294901760
    %2306 = vmatmul.f32.gmra.mxu0 %v2305
    %v2307 = vpop.f32.mrf.mxu0
    %v2308 = vadd.f32 %v2033, %v2307
    %v2309 = vand.u32 %v260, 4294901760
    %2310 = vmatmul.f32.gmra.mxu0 %v2309
    %v2311 = vpop.f32.mrf.mxu0
    %v2312 = vadd.f32 %v2037, %v2311
    %v2313 = vand.u32 %v263, 4294901760
    %2314 = vmatmul.f32.gmra.mxu0 %v2313
    %v2315 = vpop.f32.mrf.mxu0
    %v2316 = vadd.f32 %v2041, %v2315
    %v2317 = vand.u32 %v266, 4294901760
    %2318 = vmatmul.f32.gmra.mxu0 %v2317
    %v2319 = vpop.f32.mrf.mxu0
    %v2320 = vadd.f32 %v2045, %v2319
    %v2321 = vand.u32 %v269, 4294901760
    %2322 = vmatmul.f32.gmra.mxu0 %v2321
    %v2323 = vpop.f32.mrf.mxu0
    %v2324 = vadd.f32 %v2049, %v2323
    %v2325 = vand.u32 %v272, 4294901760
    %2326 = vmatmul.f32.gmra.mxu0 %v2325
    %v2327 = vpop.f32.mrf.mxu0
    %v2328 = vadd.f32 %v2053, %v2327
    %v2329 = vand.u32 %v275, 4294901760
    %2330 = vmatmul.f32.gmra.mxu0 %v2329
    %v2331 = vpop.f32.mrf.mxu0
    %v2332 = vadd.f32 %v2057, %v2331
    %v2333 = vand.u32 %v278, 4294901760
    %2334 = vmatmul.f32.gmra.mxu0 %v2333
    %v2335 = vpop.f32.mrf.mxu0
    %v2336 = vadd.f32 %v2061, %v2335
    %v2337 = vand.u32 %v281, 4294901760
    %2338 = vmatmul.f32.gmra.mxu0 %v2337
    %v2339 = vpop.f32.mrf.mxu0
    %v2340 = vadd.f32 %v2065, %v2339
    %v2341 = vand.u32 %v284, 4294901760
    %2342 = vmatmul.f32.gmra.mxu0 %v2341
    %v2343 = vpop.f32.mrf.mxu0
    %v2344 = vadd.f32 %v2069, %v2343
    %v2345 = vand.u32 %v287, 4294901760
    %2346 = vmatmul.f32.gmra.mxu0 %v2345
    %v2347 = vpop.f32.mrf.mxu0
    %v2348 = vadd.f32 %v2073, %v2347
    %v2349 = vand.u32 %v290, 4294901760
    %2350 = vmatmul.f32.gmra.mxu0 %v2349
    %v2351 = vpop.f32.mrf.mxu0
    %v2352 = vadd.f32 %v2077, %v2351
    %v2353 = vand.u32 %v293, 4294901760
    %2354 = vmatmul.f32.gmra.mxu0 %v2353
    %v2355 = vpop.f32.mrf.mxu0
    %v2356 = vadd.f32 %v2081, %v2355
    %v2357 = vand.u32 %v296, 4294901760
    %2358 = vmatmul.f32.gmra.mxu0 %v2357
    %v2359 = vpop.f32.mrf.mxu0
    %v2360 = vadd.f32 %v2085, %v2359
    %v2361 = vand.u32 %v299, 4294901760
    %2362 = vmatmul.f32.gmra.mxu0 %v2361
    %v2363 = vpop.f32.mrf.mxu0
    %v2364 = vadd.f32 %v2089, %v2363
    %v2365 = vand.u32 %v302, 4294901760
    %2366 = vmatmul.f32.gmra.mxu0 %v2365
    %v2367 = vpop.f32.mrf.mxu0
    %v2368 = vadd.f32 %v2093, %v2367
    %v2369 = vand.u32 %v305, 4294901760
    %2370 = vmatmul.f32.gmra.mxu0 %v2369
    %v2371 = vpop.f32.mrf.mxu0
    %v2372 = vadd.f32 %v2097, %v2371
    %v2373 = vand.u32 %v308, 4294901760
    %2374 = vmatmul.f32.gmra.mxu0 %v2373
    %v2375 = vpop.f32.mrf.mxu0
    %v2376 = vadd.f32 %v2101, %v2375
    %v2377 = vand.u32 %v311, 4294901760
    %2378 = vmatmul.f32.gmra.mxu0 %v2377
    %v2379 = vpop.f32.mrf.mxu0
    %v2380 = vadd.f32 %v2105, %v2379
    %v2381 = vand.u32 %v314, 4294901760
    %2382 = vmatmul.f32.gmra.mxu0 %v2381
    %v2383 = vpop.f32.mrf.mxu0
    %v2384 = vadd.f32 %v2109, %v2383
    %v2385 = vand.u32 %v317, 4294901760
    %2386 = vmatmul.f32.gmra.mxu0 %v2385
    %v2387 = vpop.f32.mrf.mxu0
    %v2388 = vadd.f32 %v2113, %v2387
    %v2389 = vand.u32 %v320, 4294901760
    %2390 = vmatmul.f32.gmra.mxu0 %v2389
    %v2391 = vpop.f32.mrf.mxu0
    %v2392 = vadd.f32 %v2117, %v2391
    %v2393 = vand.u32 %v323, 4294901760
    %2394 = vmatmul.f32.gmra.mxu0 %v2393
    %v2395 = vpop.f32.mrf.mxu0
    %v2396 = vadd.f32 %v2121, %v2395
    %v2397 = vand.u32 %v326, 4294901760
    %2398 = vmatmul.f32.gmra.mxu0 %v2397
    %v2399 = vpop.f32.mrf.mxu0
    %v2400 = vadd.f32 %v2125, %v2399
    %v2401 = vand.u32 %v329, 4294901760
    %2402 = vmatmul.f32.gmra.mxu0 %v2401
    %v2403 = vpop.f32.mrf.mxu0
    %v2404 = vadd.f32 %v2129, %v2403
    %v2405 = vand.u32 %v332, 4294901760
    %2406 = vmatmul.f32.gmra.mxu0 %v2405
    %v2407 = vpop.f32.mrf.mxu0
    %v2408 = vadd.f32 %v2133, %v2407
    %v2409 = vand.u32 %v335, 4294901760
    %2410 = vmatmul.f32.gmra.mxu0 %v2409
    %v2411 = vpop.f32.mrf.mxu0
    %v2412 = vadd.f32 %v2137, %v2411
    %v2413 = vand.u32 %v338, 4294901760
    %2414 = vmatmul.f32.gmra.mxu0 %v2413
    %v2415 = vpop.f32.mrf.mxu0
    %v2416 = vadd.f32 %v2141, %v2415
    %v2417 = vand.u32 %v341, 4294901760
    %2418 = vmatmul.f32.gmra.mxu0 %v2417
    %v2419 = vpop.f32.mrf.mxu0
    %v2420 = vadd.f32 %v2145, %v2419
    %v2421 = vand.u32 %v344, 4294901760
    %2422 = vmatmul.f32.gmra.mxu0 %v2421
    %v2423 = vpop.f32.mrf.mxu0
    %v2424 = vadd.f32 %v2149, %v2423
    %v2425 = vand.u32 %v347, 4294901760
    %2426 = vmatmul.f32.gmra.mxu0 %v2425
    %v2427 = vpop.f32.mrf.mxu0
    %v2428 = vadd.f32 %v2153, %v2427
    %v2429 = vand.u32 %v350, 4294901760
    %2430 = vmatmul.f32.gmra.mxu0 %v2429
    %v2431 = vpop.f32.mrf.mxu0
    %v2432 = vadd.f32 %v2157, %v2431
    %v2433 = vand.u32 %v353, 4294901760
    %2434 = vmatmul.f32.gmra.mxu0 %v2433
    %v2435 = vpop.f32.mrf.mxu0
    %v2436 = vadd.f32 %v2161, %v2435
    %v2437 = vand.u32 %v356, 4294901760
    %2438 = vmatmul.f32.gmra.mxu0 %v2437
    %v2439 = vpop.f32.mrf.mxu0
    %v2440 = vadd.f32 %v2165, %v2439
    %v2441 = vand.u32 %v359, 4294901760
    %2442 = vmatmul.f32.gmra.mxu0 %v2441
    %v2443 = vpop.f32.mrf.mxu0
    %v2444 = vadd.f32 %v2169, %v2443
    %v2445 = vand.u32 %v362, 4294901760
    %2446 = vmatmul.f32.gmra.mxu0 %v2445
    %v2447 = vpop.f32.mrf.mxu0
    %v2448 = vadd.f32 %v2173, %v2447
    %v2449 = vand.u32 %v365, 4294901760
    %2450 = vmatmul.f32.gmra.mxu0 %v2449
    %v2451 = vpop.f32.mrf.mxu0
    %v2452 = vadd.f32 %v2177, %v2451
    %v2453 = vand.u32 %v368, 4294901760
    %2454 = vmatmul.f32.gmra.mxu0 %v2453
    %v2455 = vpop.f32.mrf.mxu0
    %v2456 = vadd.f32 %v2181, %v2455
    %v2457 = vand.u32 %v371, 4294901760
    %2458 = vmatmul.f32.gmra.mxu0 %v2457
    %v2459 = vpop.f32.mrf.mxu0
    %v2460 = vadd.f32 %v2185, %v2459
    %v2461 = vand.u32 %v374, 4294901760
    %2462 = vmatmul.f32.gmra.mxu0 %v2461
    %v2463 = vpop.f32.mrf.mxu0
    %v2464 = vadd.f32 %v2189, %v2463
    %v2465 = vand.u32 %v377, 4294901760
    %2466 = vmatmul.f32.gmra.mxu0 %v2465
    %v2467 = vpop.f32.mrf.mxu0
    %v2468 = vadd.f32 %v2193, %v2467
    %v2469 = vand.u32 %v380, 4294901760
    %2470 = vmatmul.f32.gmra.mxu0 %v2469
    %v2471 = vpop.f32.mrf.mxu0
    %v2472 = vadd.f32 %v2197, %v2471
    %v2473 = vand.u32 %v383, 4294901760
    %2474 = vmatmul.f32.gmra.mxu0 %v2473
    %v2475 = vpop.f32.mrf.mxu0
    %v2476 = vadd.f32 %v2201, %v2475
    %v2477 = vand.u32 %v386, 4294901760
    %2478 = vmatmul.f32.gmra.mxu0 %v2477
    %v2479 = vpop.f32.mrf.mxu0
    %v2480 = vadd.f32 %v2205, %v2479
    %v2481 = vand.u32 %v389, 4294901760
    %2482 = vmatmul.f32.gmra.mxu0 %v2481
    %v2483 = vpop.f32.mrf.mxu0
    %v2484 = vadd.f32 %v2209, %v2483
    %v2485 = vand.u32 %v392, 4294901760
    %2486 = vmatmul.f32.gmra.mxu0 %v2485
    %v2487 = vpop.f32.mrf.mxu0
    %v2488 = vadd.f32 %v2213, %v2487
    %v2489 = vand.u32 %v395, 4294901760
    %2490 = vmatmul.f32.gmra.mxu0 %v2489
    %v2491 = vpop.f32.mrf.mxu0
    %v2492 = vadd.f32 %v2217, %v2491
    %v2493 = vand.u32 %v398, 4294901760
    %2494 = vmatmul.f32.gmra.mxu0 %v2493
    %v2495 = vpop.f32.mrf.mxu0
    %v2496 = vadd.f32 %v2221, %v2495
    %v2497 = vand.u32 %v401, 4294901760
    %2498 = vmatmul.f32.gmra.mxu0 %v2497
    %v2499 = vpop.f32.mrf.mxu0
    %v2500 = vadd.f32 %v2225, %v2499
    %v2501 = vand.u32 %v404, 4294901760
    %2502 = vmatmul.f32.gmra.mxu0 %v2501
    %v2503 = vpop.f32.mrf.mxu0
    %v2504 = vadd.f32 %v2229, %v2503
    %v2505 = vand.u32 %v407, 4294901760
    %2506 = vmatmul.f32.gmra.mxu0 %v2505
    %v2507 = vpop.f32.mrf.mxu0
    %v2508 = vadd.f32 %v2233, %v2507
    %v2509 = vand.u32 %v410, 4294901760
    %2510 = vmatmul.f32.gmra.mxu0 %v2509
    %v2511 = vpop.f32.mrf.mxu0
    %v2512 = vadd.f32 %v2237, %v2511
    %v2513 = vand.u32 %v413, 4294901760
    %2514 = vmatmul.f32.gmra.mxu0 %v2513
    %v2515 = vpop.f32.mrf.mxu0
    %v2516 = vadd.f32 %v2241, %v2515
    %v2517 = vand.u32 %v416, 4294901760
    %2518 = vmatmul.f32.gmra.mxu0 %v2517
    %v2519 = vpop.f32.mrf.mxu0
    %v2520 = vadd.f32 %v2245, %v2519
    %v2521 = vand.u32 %v419, 4294901760
    %2522 = vmatmul.f32.gmra.mxu0 %v2521
    %v2523 = vpop.f32.mrf.mxu0
    %v2524 = vadd.f32 %v2249, %v2523
    %v2525 = vand.u32 %v422, 4294901760
    %2526 = vmatmul.f32.gmra.mxu0 %v2525
    %v2527 = vpop.f32.mrf.mxu0
    %v2528 = vadd.f32 %v2253, %v2527
    %v2529 = vand.u32 %v425, 4294901760
    %2530 = vmatmul.f32.gmra.mxu0 %v2529
    %v2531 = vpop.f32.mrf.mxu0
    %v2532 = vadd.f32 %v2257, %v2531
    %v2533 = vand.u32 %v428, 4294901760
    %2534 = vmatmul.f32.gmra.mxu0 %v2533
    %v2535 = vpop.f32.mrf.mxu0
    %v2536 = vadd.f32 %v2261, %v2535
    %v2537 = vand.u32 %v431, 4294901760
    %2538 = vmatmul.f32.gmra.mxu0 %v2537
    %v2539 = vpop.f32.mrf.mxu0
    %v2540 = vadd.f32 %v2265, %v2539
    %v2541 = vand.u32 %v434, 4294901760
    %2542 = vmatmul.f32.gmra.mxu0 %v2541
    %v2543 = vpop.f32.mrf.mxu0
    %v2544 = vadd.f32 %v2269, %v2543
    %v2545 = vand.u32 %v437, 4294901760
    %2546 = vmatmul.f32.gmra.mxu0 %v2545
    %v2547 = vpop.f32.mrf.mxu0
    %v2548 = vadd.f32 %v2273, %v2547
    %v2549 = vand.u32 %v440, 4294901760
    %2550 = vmatmul.f32.gmra.mxu0 %v2549
    %v2551 = vpop.f32.mrf.mxu0
    %v2552 = vadd.f32 %v2277, %v2551
    %2553 = vdwg.mxu0
    %s2554 = smul.u32 0, 64
    %v2555 = vld [vmem:[#allocation5] sm:$0xff]
    %v2556 = vld [vmem:[#allocation5 + $0x8] sm:$0xff]
    %v2557 = vld [vmem:[#allocation7] sm:$0xff]
    %v2558 = vld [vmem:[#allocation7 + $0x8] sm:$0xff]
    %v2559 = vadd.s32 %v89, 16
    %v2560 = vadd.s32 %v89, 24
    %v2561 = vadd.s32 %v89, 32
    %v2562 = vadd.s32 %v89, 40
    %v2563 = vadd.s32 %v89, 48
    %v2564 = vadd.s32 %v89, 56
    %v2565 = vstv %s2554
    %v2566 = vadd.s32 %v89, %v2565
    %v2567 = vadd.s32 %v90, %v2565
    %v2568 = vadd.s32 %v2559, %v2565
    %v2569 = vadd.s32 %v2560, %v2565
    %v2570 = vadd.s32 %v2561, %v2565
    %v2571 = vadd.s32 %v2562, %v2565
    %v2572 = vadd.s32 %v2563, %v2565
    %v2573 = vadd.s32 %v2564, %v2565
    %v2574 = vperm.slane %v2555, 0
    %v2575 = vperm.slane %v2555, 4
    %v2576 = vperm.slane %v2556, 0
    %v2577 = vperm.slane %v2556, 4
    %v2578 = vperm.slane %v2574, 0
    %v2579 = vperm.slane %v2575, 0
    %v2580 = vperm.slane %v2576, 0
    %v2581 = vperm.slane %v2577, 0
    %vm2582 = vcmp.eq.s32.totalorder %v2578, %v2566
    %vm2583 = vcmp.eq.s32.totalorder %v2579, %v2566
    %vm2584 = vcmp.eq.s32.totalorder %v2580, %v2566
    %vm2585 = vcmp.eq.s32.totalorder %v2581, %v2566
    %vm2586 = vcmp.eq.s32.totalorder %v2578, %v2567
    %vm2587 = vcmp.eq.s32.totalorder %v2579, %v2567
    %vm2588 = vcmp.eq.s32.totalorder %v2580, %v2567
    %vm2589 = vcmp.eq.s32.totalorder %v2581, %v2567
    %vm2590 = vcmp.eq.s32.totalorder %v2578, %v2568
    %vm2591 = vcmp.eq.s32.totalorder %v2579, %v2568
    %vm2592 = vcmp.eq.s32.totalorder %v2580, %v2568
    %vm2593 = vcmp.eq.s32.totalorder %v2581, %v2568
    %vm2594 = vcmp.eq.s32.totalorder %v2578, %v2569
    %vm2595 = vcmp.eq.s32.totalorder %v2579, %v2569
    %vm2596 = vcmp.eq.s32.totalorder %v2580, %v2569
    %vm2597 = vcmp.eq.s32.totalorder %v2581, %v2569
    %vm2598 = vcmp.eq.s32.totalorder %v2578, %v2570
    %vm2599 = vcmp.eq.s32.totalorder %v2579, %v2570
    %vm2600 = vcmp.eq.s32.totalorder %v2580, %v2570
    %vm2601 = vcmp.eq.s32.totalorder %v2581, %v2570
    %vm2602 = vcmp.eq.s32.totalorder %v2578, %v2571
    %vm2603 = vcmp.eq.s32.totalorder %v2579, %v2571
    %vm2604 = vcmp.eq.s32.totalorder %v2580, %v2571
    %vm2605 = vcmp.eq.s32.totalorder %v2581, %v2571
    %vm2606 = vcmp.eq.s32.totalorder %v2578, %v2572
    %vm2607 = vcmp.eq.s32.totalorder %v2579, %v2572
    %vm2608 = vcmp.eq.s32.totalorder %v2580, %v2572
    %vm2609 = vcmp.eq.s32.totalorder %v2581, %v2572
    %vm2610 = vcmp.eq.s32.totalorder %v2578, %v2573
    %vm2611 = vcmp.eq.s32.totalorder %v2579, %v2573
    %vm2612 = vcmp.eq.s32.totalorder %v2580, %v2573
    %vm2613 = vcmp.eq.s32.totalorder %v2581, %v2573
    %v2616 = vperm.slane %v2557, 0
    %v2617 = vperm.slane %v2557, 4
    %v2618 = vperm.slane %v2558, 0
    %v2619 = vperm.slane %v2558, 4
    %v2624 = vperm.slane %v2616, 0
    %v2625 = vperm.slane %v2617, 0
    %v2626 = vperm.slane %v2618, 0
    %v2627 = vperm.slane %v2619, 0
    %v2628 = vsel %vm2582, %v2624, 0.0
    %v2629 = vsel %vm2583, %v2625, 0.0
    %v2630 = vsel %vm2584, %v2626, 0.0
    %v2631 = vsel %vm2585, %v2627, 0.0
    %v2632 = vsel %vm2586, %v2624, 0.0
    %v2633 = vsel %vm2587, %v2625, 0.0
    %v2634 = vsel %vm2588, %v2626, 0.0
    %v2635 = vsel %vm2589, %v2627, 0.0
    %v2636 = vsel %vm2590, %v2624, 0.0
    %v2637 = vsel %vm2591, %v2625, 0.0
    %v2638 = vsel %vm2592, %v2626, 0.0
    %v2639 = vsel %vm2593, %v2627, 0.0
    %v2640 = vsel %vm2594, %v2624, 0.0
    %v2641 = vsel %vm2595, %v2625, 0.0
    %v2642 = vsel %vm2596, %v2626, 0.0
    %v2643 = vsel %vm2597, %v2627, 0.0
    %v2644 = vsel %vm2598, %v2624, 0.0
    %v2645 = vsel %vm2599, %v2625, 0.0
    %v2646 = vsel %vm2600, %v2626, 0.0
    %v2647 = vsel %vm2601, %v2627, 0.0
    %v2648 = vsel %vm2602, %v2624, 0.0
    %v2649 = vsel %vm2603, %v2625, 0.0
    %v2650 = vsel %vm2604, %v2626, 0.0
    %v2651 = vsel %vm2605, %v2627, 0.0
    %v2652 = vsel %vm2606, %v2624, 0.0
    %v2653 = vsel %vm2607, %v2625, 0.0
    %v2654 = vsel %vm2608, %v2626, 0.0
    %v2655 = vsel %vm2609, %v2627, 0.0
    %v2656 = vsel %vm2610, %v2624, 0.0
    %v2657 = vsel %vm2611, %v2625, 0.0
    %v2658 = vsel %vm2612, %v2626, 0.0
    %v2659 = vsel %vm2613, %v2627, 0.0
    %v2660 = vadd.f32 %v2628, 0.0
    %v2661 = vadd.f32 %v2629, 0.0
    %v2662 = vadd.f32 %v2630, 0.0
    %v2663 = vadd.f32 %v2631, 0.0
    %v2664 = vadd.f32 %v2632, 0.0
    %v2665 = vadd.f32 %v2633, 0.0
    %v2666 = vadd.f32 %v2634, 0.0
    %v2667 = vadd.f32 %v2635, 0.0
    %v2668 = vadd.f32 %v2636, 0.0
    %v2669 = vadd.f32 %v2637, 0.0
    %v2670 = vadd.f32 %v2638, 0.0
    %v2671 = vadd.f32 %v2639, 0.0
    %v2672 = vadd.f32 %v2640, 0.0
    %v2673 = vadd.f32 %v2641, 0.0
    %v2674 = vadd.f32 %v2642, 0.0
    %v2675 = vadd.f32 %v2643, 0.0
    %v2676 = vadd.f32 %v2644, 0.0
    %v2677 = vadd.f32 %v2645, 0.0
    %v2678 = vadd.f32 %v2646, 0.0
    %v2679 = vadd.f32 %v2647, 0.0
    %v2680 = vadd.f32 %v2648, 0.0
    %v2681 = vadd.f32 %v2649, 0.0
    %v2682 = vadd.f32 %v2650, 0.0
    %v2683 = vadd.f32 %v2651, 0.0
    %v2684 = vadd.f32 %v2652, 0.0
    %v2685 = vadd.f32 %v2653, 0.0
    %v2686 = vadd.f32 %v2654, 0.0
    %v2687 = vadd.f32 %v2655, 0.0
    %v2688 = vadd.f32 %v2656, 0.0
    %v2689 = vadd.f32 %v2657, 0.0
    %v2690 = vadd.f32 %v2658, 0.0
    %v2691 = vadd.f32 %v2659, 0.0
    %v2692 = vperm.slane %v2555, 1
    %v2693 = vperm.slane %v2555, 5
    %v2694 = vperm.slane %v2556, 1
    %v2695 = vperm.slane %v2556, 5
    %v2696 = vperm.slane %v2692, 1
    %v2697 = vperm.slane %v2693, 1
    %v2698 = vperm.slane %v2694, 1
    %v2699 = vperm.slane %v2695, 1
    %vm2700 = vcmp.eq.s32.totalorder %v2696, %v2566
    %vm2701 = vcmp.eq.s32.totalorder %v2697, %v2566
    %vm2702 = vcmp.eq.s32.totalorder %v2698, %v2566
    %vm2703 = vcmp.eq.s32.totalorder %v2699, %v2566
    %vm2704 = vcmp.eq.s32.totalorder %v2696, %v2567
    %vm2705 = vcmp.eq.s32.totalorder %v2697, %v2567
    %vm2706 = vcmp.eq.s32.totalorder %v2698, %v2567
    %vm2707 = vcmp.eq.s32.totalorder %v2699, %v2567
    %vm2708 = vcmp.eq.s32.totalorder %v2696, %v2568
    %vm2709 = vcmp.eq.s32.totalorder %v2697, %v2568
    %vm2710 = vcmp.eq.s32.totalorder %v2698, %v2568
    %vm2711 = vcmp.eq.s32.totalorder %v2699, %v2568
    %vm2712 = vcmp.eq.s32.totalorder %v2696, %v2569
    %vm2713 = vcmp.eq.s32.totalorder %v2697, %v2569
    %vm2714 = vcmp.eq.s32.totalorder %v2698, %v2569
    %vm2715 = vcmp.eq.s32.totalorder %v2699, %v2569
    %vm2716 = vcmp.eq.s32.totalorder %v2696, %v2570
    %vm2717 = vcmp.eq.s32.totalorder %v2697, %v2570
    %vm2718 = vcmp.eq.s32.totalorder %v2698, %v2570
    %vm2719 = vcmp.eq.s32.totalorder %v2699, %v2570
    %vm2720 = vcmp.eq.s32.totalorder %v2696, %v2571
    %vm2721 = vcmp.eq.s32.totalorder %v2697, %v2571
    %vm2722 = vcmp.eq.s32.totalorder %v2698, %v2571
    %vm2723 = vcmp.eq.s32.totalorder %v2699, %v2571
    %vm2724 = vcmp.eq.s32.totalorder %v2696, %v2572
    %vm2725 = vcmp.eq.s32.totalorder %v2697, %v2572
    %vm2726 = vcmp.eq.s32.totalorder %v2698, %v2572
    %vm2727 = vcmp.eq.s32.totalorder %v2699, %v2572
    %vm2728 = vcmp.eq.s32.totalorder %v2696, %v2573
    %vm2729 = vcmp.eq.s32.totalorder %v2697, %v2573
    %vm2730 = vcmp.eq.s32.totalorder %v2698, %v2573
    %vm2731 = vcmp.eq.s32.totalorder %v2699, %v2573
    %v2732 = vperm.slane %v2557, 1
    %v2733 = vperm.slane %v2557, 5
    %v2734 = vperm.slane %v2558, 1
    %v2735 = vperm.slane %v2558, 5
    %v2740 = vperm.slane %v2732, 1
    %v2741 = vperm.slane %v2733, 1
    %v2742 = vperm.slane %v2734, 1
    %v2743 = vperm.slane %v2735, 1
    %v2744 = vsel %vm2700, %v2740, 0.0
    %v2745 = vsel %vm2701, %v2741, 0.0
    %v2746 = vsel %vm2702, %v2742, 0.0
    %v2747 = vsel %vm2703, %v2743, 0.0
    %v2748 = vsel %vm2704, %v2740, 0.0
    %v2749 = vsel %vm2705, %v2741, 0.0
    %v2750 = vsel %vm2706, %v2742, 0.0
    %v2751 = vsel %vm2707, %v2743, 0.0
    %v2752 = vsel %vm2708, %v2740, 0.0
    %v2753 = vsel %vm2709, %v2741, 0.0
    %v2754 = vsel %vm2710, %v2742, 0.0
    %v2755 = vsel %vm2711, %v2743, 0.0
    %v2756 = vsel %vm2712, %v2740, 0.0
    %v2757 = vsel %vm2713, %v2741, 0.0
    %v2758 = vsel %vm2714, %v2742, 0.0
    %v2759 = vsel %vm2715, %v2743, 0.0
    %v2760 = vsel %vm2716, %v2740, 0.0
    %v2761 = vsel %vm2717, %v2741, 0.0
    %v2762 = vsel %vm2718, %v2742, 0.0
    %v2763 = vsel %vm2719, %v2743, 0.0
    %v2764 = vsel %vm2720, %v2740, 0.0
    %v2765 = vsel %vm2721, %v2741, 0.0
    %v2766 = vsel %vm2722, %v2742, 0.0
    %v2767 = vsel %vm2723, %v2743, 0.0
    %v2768 = vsel %vm2724, %v2740, 0.0
    %v2769 = vsel %vm2725, %v2741, 0.0
    %v2770 = vsel %vm2726, %v2742, 0.0
    %v2771 = vsel %vm2727, %v2743, 0.0
    %v2772 = vsel %vm2728, %v2740, 0.0
    %v2773 = vsel %vm2729, %v2741, 0.0
    %v2774 = vsel %vm2730, %v2742, 0.0
    %v2775 = vsel %vm2731, %v2743, 0.0
    %v2776 = vadd.f32 %v2660, %v2744
    %v2777 = vadd.f32 %v2661, %v2745
    %v2778 = vadd.f32 %v2662, %v2746
    %v2779 = vadd.f32 %v2663, %v2747
    %v2780 = vadd.f32 %v2664, %v2748
    %v2781 = vadd.f32 %v2665, %v2749
    %v2782 = vadd.f32 %v2666, %v2750
    %v2783 = vadd.f32 %v2667, %v2751
    %v2784 = vadd.f32 %v2668, %v2752
    %v2785 = vadd.f32 %v2669, %v2753
    %v2786 = vadd.f32 %v2670, %v2754
    %v2787 = vadd.f32 %v2671, %v2755
    %v2788 = vadd.f32 %v2672, %v2756
    %v2789 = vadd.f32 %v2673, %v2757
    %v2790 = vadd.f32 %v2674, %v2758
    %v2791 = vadd.f32 %v2675, %v2759
    %v2792 = vadd.f32 %v2676, %v2760
    %v2793 = vadd.f32 %v2677, %v2761
    %v2794 = vadd.f32 %v2678, %v2762
    %v2795 = vadd.f32 %v2679, %v2763
    %v2796 = vadd.f32 %v2680, %v2764
    %v2797 = vadd.f32 %v2681, %v2765
    %v2798 = vadd.f32 %v2682, %v2766
    %v2799 = vadd.f32 %v2683, %v2767
    %v2800 = vadd.f32 %v2684, %v2768
    %v2801 = vadd.f32 %v2685, %v2769
    %v2802 = vadd.f32 %v2686, %v2770
    %v2803 = vadd.f32 %v2687, %v2771
    %v2804 = vadd.f32 %v2688, %v2772
    %v2805 = vadd.f32 %v2689, %v2773
    %v2806 = vadd.f32 %v2690, %v2774
    %v2807 = vadd.f32 %v2691, %v2775
    %v2808 = vperm.slane %v2555, 2
    %v2809 = vperm.slane %v2555, 6
    %v2810 = vperm.slane %v2556, 2
    %v2811 = vperm.slane %v2556, 6
    %v2812 = vperm.slane %v2808, 2
    %v2813 = vperm.slane %v2809, 2
    %v2814 = vperm.slane %v2810, 2
    %v2815 = vperm.slane %v2811, 2
    %vm2816 = vcmp.eq.s32.totalorder %v2812, %v2566
    %vm2817 = vcmp.eq.s32.totalorder %v2813, %v2566
    %vm2818 = vcmp.eq.s32.totalorder %v2814, %v2566
    %vm2819 = vcmp.eq.s32.totalorder %v2815, %v2566
    %vm2820 = vcmp.eq.s32.totalorder %v2812, %v2567
    %vm2821 = vcmp.eq.s32.totalorder %v2813, %v2567
    %vm2822 = vcmp.eq.s32.totalorder %v2814, %v2567
    %vm2823 = vcmp.eq.s32.totalorder %v2815, %v2567
    %vm2824 = vcmp.eq.s32.totalorder %v2812, %v2568
    %vm2825 = vcmp.eq.s32.totalorder %v2813, %v2568
    %vm2826 = vcmp.eq.s32.totalorder %v2814, %v2568
    %vm2827 = vcmp.eq.s32.totalorder %v2815, %v2568
    %vm2828 = vcmp.eq.s32.totalorder %v2812, %v2569
    %vm2829 = vcmp.eq.s32.totalorder %v2813, %v2569
    %vm2830 = vcmp.eq.s32.totalorder %v2814, %v2569
    %vm2831 = vcmp.eq.s32.totalorder %v2815, %v2569
    %vm2832 = vcmp.eq.s32.totalorder %v2812, %v2570
    %vm2833 = vcmp.eq.s32.totalorder %v2813, %v2570
    %vm2834 = vcmp.eq.s32.totalorder %v2814, %v2570
    %vm2835 = vcmp.eq.s32.totalorder %v2815, %v2570
    %vm2836 = vcmp.eq.s32.totalorder %v2812, %v2571
    %vm2837 = vcmp.eq.s32.totalorder %v2813, %v2571
    %vm2838 = vcmp.eq.s32.totalorder %v2814, %v2571
    %vm2839 = vcmp.eq.s32.totalorder %v2815, %v2571
    %vm2840 = vcmp.eq.s32.totalorder %v2812, %v2572
    %vm2841 = vcmp.eq.s32.totalorder %v2813, %v2572
    %vm2842 = vcmp.eq.s32.totalorder %v2814, %v2572
    %vm2843 = vcmp.eq.s32.totalorder %v2815, %v2572
    %vm2844 = vcmp.eq.s32.totalorder %v2812, %v2573
    %vm2845 = vcmp.eq.s32.totalorder %v2813, %v2573
    %vm2846 = vcmp.eq.s32.totalorder %v2814, %v2573
    %vm2847 = vcmp.eq.s32.totalorder %v2815, %v2573
    %v2848 = vperm.slane %v2557, 2
    %v2849 = vperm.slane %v2557, 6
    %v2850 = vperm.slane %v2558, 2
    %v2851 = vperm.slane %v2558, 6
    %v2856 = vperm.slane %v2848, 2
    %v2857 = vperm.slane %v2849, 2
    %v2858 = vperm.slane %v2850, 2
    %v2859 = vperm.slane %v2851, 2
    %v2860 = vsel %vm2816, %v2856, 0.0
    %v2861 = vsel %vm2817, %v2857, 0.0
    %v2862 = vsel %vm2818, %v2858, 0.0
    %v2863 = vsel %vm2819, %v2859, 0.0
    %v2864 = vsel %vm2820, %v2856, 0.0
    %v2865 = vsel %vm2821, %v2857, 0.0
    %v2866 = vsel %vm2822, %v2858, 0.0
    %v2867 = vsel %vm2823, %v2859, 0.0
    %v2868 = vsel %vm2824, %v2856, 0.0
    %v2869 = vsel %vm2825, %v2857, 0.0
    %v2870 = vsel %vm2826, %v2858, 0.0
    %v2871 = vsel %vm2827, %v2859, 0.0
    %v2872 = vsel %vm2828, %v2856, 0.0
    %v2873 = vsel %vm2829, %v2857, 0.0
    %v2874 = vsel %vm2830, %v2858, 0.0
    %v2875 = vsel %vm2831, %v2859, 0.0
    %v2876 = vsel %vm2832, %v2856, 0.0
    %v2877 = vsel %vm2833, %v2857, 0.0
    %v2878 = vsel %vm2834, %v2858, 0.0
    %v2879 = vsel %vm2835, %v2859, 0.0
    %v2880 = vsel %vm2836, %v2856, 0.0
    %v2881 = vsel %vm2837, %v2857, 0.0
    %v2882 = vsel %vm2838, %v2858, 0.0
    %v2883 = vsel %vm2839, %v2859, 0.0
    %v2884 = vsel %vm2840, %v2856, 0.0
    %v2885 = vsel %vm2841, %v2857, 0.0
    %v2886 = vsel %vm2842, %v2858, 0.0
    %v2887 = vsel %vm2843, %v2859, 0.0
    %v2888 = vsel %vm2844, %v2856, 0.0
    %v2889 = vsel %vm2845, %v2857, 0.0
    %v2890 = vsel %vm2846, %v2858, 0.0
    %v2891 = vsel %vm2847, %v2859, 0.0
    %v2892 = vadd.f32 %v2776, %v2860
    %v2893 = vadd.f32 %v2777, %v2861
    %v2894 = vadd.f32 %v2778, %v2862
    %v2895 = vadd.f32 %v2779, %v2863
    %v2896 = vadd.f32 %v2780, %v2864
    %v2897 = vadd.f32 %v2781, %v2865
    %v2898 = vadd.f32 %v2782, %v2866
    %v2899 = vadd.f32 %v2783, %v2867
    %v2900 = vadd.f32 %v2784, %v2868
    %v2901 = vadd.f32 %v2785, %v2869
    %v2902 = vadd.f32 %v2786, %v2870
    %v2903 = vadd.f32 %v2787, %v2871
    %v2904 = vadd.f32 %v2788, %v2872
    %v2905 = vadd.f32 %v2789, %v2873
    %v2906 = vadd.f32 %v2790, %v2874
    %v2907 = vadd.f32 %v2791, %v2875
    %v2908 = vadd.f32 %v2792, %v2876
    %v2909 = vadd.f32 %v2793, %v2877
    %v2910 = vadd.f32 %v2794, %v2878
    %v2911 = vadd.f32 %v2795, %v2879
    %v2912 = vadd.f32 %v2796, %v2880
    %v2913 = vadd.f32 %v2797, %v2881
    %v2914 = vadd.f32 %v2798, %v2882
    %v2915 = vadd.f32 %v2799, %v2883
    %v2916 = vadd.f32 %v2800, %v2884
    %v2917 = vadd.f32 %v2801, %v2885
    %v2918 = vadd.f32 %v2802, %v2886
    %v2919 = vadd.f32 %v2803, %v2887
    %v2920 = vadd.f32 %v2804, %v2888
    %v2921 = vadd.f32 %v2805, %v2889
    %v2922 = vadd.f32 %v2806, %v2890
    %v2923 = vadd.f32 %v2807, %v2891
    %v2924 = vperm.slane %v2555, 3
    %v2925 = vperm.slane %v2555, 7
    %v2926 = vperm.slane %v2556, 3
    %v2927 = vperm.slane %v2556, 7
    %v2928 = vperm.slane %v2924, 3
    %v2929 = vperm.slane %v2925, 3
    %v2930 = vperm.slane %v2926, 3
    %v2931 = vperm.slane %v2927, 3
    %vm2932 = vcmp.eq.s32.totalorder %v2928, %v2566
    %vm2933 = vcmp.eq.s32.totalorder %v2929, %v2566
    %vm2934 = vcmp.eq.s32.totalorder %v2930, %v2566
    %vm2935 = vcmp.eq.s32.totalorder %v2931, %v2566
    %vm2936 = vcmp.eq.s32.totalorder %v2928, %v2567
    %vm2937 = vcmp.eq.s32.totalorder %v2929, %v2567
    %vm2938 = vcmp.eq.s32.totalorder %v2930, %v2567
    %vm2939 = vcmp.eq.s32.totalorder %v2931, %v2567
    %vm2940 = vcmp.eq.s32.totalorder %v2928, %v2568
    %vm2941 = vcmp.eq.s32.totalorder %v2929, %v2568
    %vm2942 = vcmp.eq.s32.totalorder %v2930, %v2568
    %vm2943 = vcmp.eq.s32.totalorder %v2931, %v2568
    %vm2944 = vcmp.eq.s32.totalorder %v2928, %v2569
    %vm2945 = vcmp.eq.s32.totalorder %v2929, %v2569
    %vm2946 = vcmp.eq.s32.totalorder %v2930, %v2569
    %vm2947 = vcmp.eq.s32.totalorder %v2931, %v2569
    %vm2948 = vcmp.eq.s32.totalorder %v2928, %v2570
    %vm2949 = vcmp.eq.s32.totalorder %v2929, %v2570
    %vm2950 = vcmp.eq.s32.totalorder %v2930, %v2570
    %vm2951 = vcmp.eq.s32.totalorder %v2931, %v2570
    %vm2952 = vcmp.eq.s32.totalorder %v2928, %v2571
    %vm2953 = vcmp.eq.s32.totalorder %v2929, %v2571
    %vm2954 = vcmp.eq.s32.totalorder %v2930, %v2571
    %vm2955 = vcmp.eq.s32.totalorder %v2931, %v2571
    %vm2956 = vcmp.eq.s32.totalorder %v2928, %v2572
    %vm2957 = vcmp.eq.s32.totalorder %v2929, %v2572
    %vm2958 = vcmp.eq.s32.totalorder %v2930, %v2572
    %vm2959 = vcmp.eq.s32.totalorder %v2931, %v2572
    %vm2960 = vcmp.eq.s32.totalorder %v2928, %v2573
    %vm2961 = vcmp.eq.s32.totalorder %v2929, %v2573
    %vm2962 = vcmp.eq.s32.totalorder %v2930, %v2573
    %vm2963 = vcmp.eq.s32.totalorder %v2931, %v2573
    %v2964 = vperm.slane %v2557, 3
    %v2965 = vperm.slane %v2557, 7
    %v2966 = vperm.slane %v2558, 3
    %v2967 = vperm.slane %v2558, 7
    %v2972 = vperm.slane %v2964, 3
    %v2973 = vperm.slane %v2965, 3
    %v2974 = vperm.slane %v2966, 3
    %v2975 = vperm.slane %v2967, 3
    %v2976 = vsel %vm2932, %v2972, 0.0
    %v2977 = vsel %vm2933, %v2973, 0.0
    %v2978 = vsel %vm2934, %v2974, 0.0
    %v2979 = vsel %vm2935, %v2975, 0.0
    %v2980 = vsel %vm2936, %v2972, 0.0
    %v2981 = vsel %vm2937, %v2973, 0.0
    %v2982 = vsel %vm2938, %v2974, 0.0
    %v2983 = vsel %vm2939, %v2975, 0.0
    %v2984 = vsel %vm2940, %v2972, 0.0
    %v2985 = vsel %vm2941, %v2973, 0.0
    %v2986 = vsel %vm2942, %v2974, 0.0
    %v2987 = vsel %vm2943, %v2975, 0.0
    %v2988 = vsel %vm2944, %v2972, 0.0
    %v2989 = vsel %vm2945, %v2973, 0.0
    %v2990 = vsel %vm2946, %v2974, 0.0
    %v2991 = vsel %vm2947, %v2975, 0.0
    %v2992 = vsel %vm2948, %v2972, 0.0
    %v2993 = vsel %vm2949, %v2973, 0.0
    %v2994 = vsel %vm2950, %v2974, 0.0
    %v2995 = vsel %vm2951, %v2975, 0.0
    %v2996 = vsel %vm2952, %v2972, 0.0
    %v2997 = vsel %vm2953, %v2973, 0.0
    %v2998 = vsel %vm2954, %v2974, 0.0
    %v2999 = vsel %vm2955, %v2975, 0.0
    %v3000 = vsel %vm2956, %v2972, 0.0
    %v3001 = vsel %vm2957, %v2973, 0.0
    %v3002 = vsel %vm2958, %v2974, 0.0
    %v3003 = vsel %vm2959, %v2975, 0.0
    %v3004 = vsel %vm2960, %v2972, 0.0
    %v3005 = vsel %vm2961, %v2973, 0.0
    %v3006 = vsel %vm2962, %v2974, 0.0
    %v3007 = vsel %vm2963, %v2975, 0.0
    %v3008 = vadd.f32 %v2892, %v2976
    %v3009 = vadd.f32 %v2893, %v2977
    %v3010 = vadd.f32 %v2894, %v2978
    %v3011 = vadd.f32 %v2895, %v2979
    %v3012 = vadd.f32 %v2896, %v2980
    %v3013 = vadd.f32 %v2897, %v2981
    %v3014 = vadd.f32 %v2898, %v2982
    %v3015 = vadd.f32 %v2899, %v2983
    %v3016 = vadd.f32 %v2900, %v2984
    %v3017 = vadd.f32 %v2901, %v2985
    %v3018 = vadd.f32 %v2902, %v2986
    %v3019 = vadd.f32 %v2903, %v2987
    %v3020 = vadd.f32 %v2904, %v2988
    %v3021 = vadd.f32 %v2905, %v2989
    %v3022 = vadd.f32 %v2906, %v2990
    %v3023 = vadd.f32 %v2907, %v2991
    %v3024 = vadd.f32 %v2908, %v2992
    %v3025 = vadd.f32 %v2909, %v2993
    %v3026 = vadd.f32 %v2910, %v2994
    %v3027 = vadd.f32 %v2911, %v2995
    %v3028 = vadd.f32 %v2912, %v2996
    %v3029 = vadd.f32 %v2913, %v2997
    %v3030 = vadd.f32 %v2914, %v2998
    %v3031 = vadd.f32 %v2915, %v2999
    %v3032 = vadd.f32 %v2916, %v3000
    %v3033 = vadd.f32 %v2917, %v3001
    %v3034 = vadd.f32 %v2918, %v3002
    %v3035 = vadd.f32 %v2919, %v3003
    %v3036 = vadd.f32 %v2920, %v3004
    %v3037 = vadd.f32 %v2921, %v3005
    %v3038 = vadd.f32 %v2922, %v3006
    %v3039 = vadd.f32 %v2923, %v3007
    %v3040 = vld [vmem:[#allocation10] sm:$0xff]
    %v3041 = vld [vmem:[#allocation10 + $0x8] sm:$0xff]
    %v3042 = vld [vmem:[#allocation10 + $0x10] sm:$0xff]
    %v3043 = vld [vmem:[#allocation10 + $0x18] sm:$0xff]
    %v3044 = vld [vmem:[#allocation10 + $0x20] sm:$0xff]
    %v3045 = vld [vmem:[#allocation10 + $0x28] sm:$0xff]
    %v3046 = vld [vmem:[#allocation10 + $0x30] sm:$0xff]
    %v3047 = vld [vmem:[#allocation10 + $0x38] sm:$0xff]
    %v3048 = vand.u32 %v2360, 4294901760
    %3049 = vmatpush.msra.mxu0 %v3048
    %v3050 = vand.u32 %v2356, 4294901760
    %3051 = vmatpush.msra.mxu0 %v3050
    %v3052 = vand.u32 %v2352, 4294901760
    %3053 = vmatpush.msra.mxu0 %v3052
    %v3054 = vand.u32 %v2348, 4294901760
    %3055 = vmatpush.msra.mxu0 %v3054
    %v3056 = vand.u32 %v2344, 4294901760
    %3057 = vmatpush.msra.mxu0 %v3056
    %v3058 = vand.u32 %v2340, 4294901760
    %3059 = vmatpush.msra.mxu0 %v3058
    %v3060 = vand.u32 %v2336, 4294901760
    %3061 = vmatpush.msra.mxu0 %v3060
    %v3062 = vand.u32 %v2332, 4294901760
    %3063 = vmatpush.msra.mxu0 %v3062
    %v3064 = vand.u32 %v2328, 4294901760
    %3065 = vmatpush.msra.mxu0 %v3064
    %v3066 = vand.u32 %v2324, 4294901760
    %3067 = vmatpush.msra.mxu0 %v3066
    %v3068 = vand.u32 %v2320, 4294901760
    %3069 = vmatpush.msra.mxu0 %v3068
    %v3070 = vand.u32 %v2316, 4294901760
    %3071 = vmatpush.msra.mxu0 %v3070
    %v3072 = vand.u32 %v2312, 4294901760
    %3073 = vmatpush.msra.mxu0 %v3072
    %v3074 = vand.u32 %v2308, 4294901760
    %3075 = vmatpush.msra.mxu0 %v3074
    %v3076 = vand.u32 %v2304, 4294901760
    %3077 = vmatpush.msra.mxu0 %v3076
    %v3078 = vand.u32 %v2300, 4294901760
    %3079 = vmatpush.msra.mxu0 %v3078
    %v3080 = vand.u32 %v3008, 4294901760
    %v3081 = vsub.f32 %v3008, %v3080
    %v3082 = vand.u32 %v3081, 4294901760
    %v3083 = vsub.f32 %v3081, %v3082
    %v3084 = vand.u32 %v3083, 4294901760
    %3085 = vmatmul.f32.gmra.mxu0 %v3084
    %v3086 = vpop.f32.mrf.mxu0
    %v3087 = vadd.f32 0.0, %v3086
    %v3088 = vand.u32 %v3012, 4294901760
    %v3089 = vsub.f32 %v3012, %v3088
    %v3090 = vand.u32 %v3089, 4294901760
    %v3091 = vsub.f32 %v3089, %v3090
    %v3092 = vand.u32 %v3091, 4294901760
    %3093 = vmatmul.f32.gmra.mxu0 %v3092
    %v3094 = vpop.f32.mrf.mxu0
    %v3095 = vadd.f32 0.0, %v3094
    %v3096 = vand.u32 %v3016, 4294901760
    %v3097 = vsub.f32 %v3016, %v3096
    %v3098 = vand.u32 %v3097, 4294901760
    %v3099 = vsub.f32 %v3097, %v3098
    %v3100 = vand.u32 %v3099, 4294901760
    %3101 = vmatmul.f32.gmra.mxu0 %v3100
    %v3102 = vpop.f32.mrf.mxu0
    %v3103 = vadd.f32 0.0, %v3102
    %v3104 = vand.u32 %v3020, 4294901760
    %v3105 = vsub.f32 %v3020, %v3104
    %v3106 = vand.u32 %v3105, 4294901760
    %v3107 = vsub.f32 %v3105, %v3106
    %v3108 = vand.u32 %v3107, 4294901760
    %3109 = vmatmul.f32.gmra.mxu0 %v3108
    %v3110 = vpop.f32.mrf.mxu0
    %v3111 = vadd.f32 0.0, %v3110
    %v3112 = vand.u32 %v3024, 4294901760
    %v3113 = vsub.f32 %v3024, %v3112
    %v3114 = vand.u32 %v3113, 4294901760
    %v3115 = vsub.f32 %v3113, %v3114
    %v3116 = vand.u32 %v3115, 4294901760
    %3117 = vmatmul.f32.gmra.mxu0 %v3116
    %v3118 = vpop.f32.mrf.mxu0
    %v3119 = vadd.f32 0.0, %v3118
    %v3120 = vand.u32 %v3028, 4294901760
    %v3121 = vsub.f32 %v3028, %v3120
    %v3122 = vand.u32 %v3121, 4294901760
    %v3123 = vsub.f32 %v3121, %v3122
    %v3124 = vand.u32 %v3123, 4294901760
    %3125 = vmatmul.f32.gmra.mxu0 %v3124
    %v3126 = vpop.f32.mrf.mxu0
    %v3127 = vadd.f32 0.0, %v3126
    %v3128 = vand.u32 %v3032, 4294901760
    %v3129 = vsub.f32 %v3032, %v3128
    %v3130 = vand.u32 %v3129, 4294901760
    %v3131 = vsub.f32 %v3129, %v3130
    %v3132 = vand.u32 %v3131, 4294901760
    %3133 = vmatmul.f32.gmra.mxu0 %v3132
    %v3134 = vpop.f32.mrf.mxu0
    %v3135 = vadd.f32 0.0, %v3134
    %v3136 = vand.u32 %v3036, 4294901760
    %v3137 = vsub.f32 %v3036, %v3136
    %v3138 = vand.u32 %v3137, 4294901760
    %v3139 = vsub.f32 %v3137, %v3138
    %v3140 = vand.u32 %v3139, 4294901760
    %3141 = vmatmul.f32.gmra.mxu0 %v3140
    %v3142 = vpop.f32.mrf.mxu0
    %v3143 = vadd.f32 0.0, %v3142
    %3144 = vdwg.mxu0
    %v3145 = vand.u32 %v2360, 4294901760
    %v3146 = vsub.f32 %v2360, %v3145
    %v3147 = vand.u32 %v3146, 4294901760
    %v3148 = vsub.f32 %v3146, %v3147
    %v3149 = vand.u32 %v3148, 4294901760
    %3150 = vmatpush.msra.mxu0 %v3149
    %v3151 = vand.u32 %v2356, 4294901760
    %v3152 = vsub.f32 %v2356, %v3151
    %v3153 = vand.u32 %v3152, 4294901760
    %v3154 = vsub.f32 %v3152, %v3153
    %v3155 = vand.u32 %v3154, 4294901760
    %3156 = vmatpush.msra.mxu0 %v3155
    %v3157 = vand.u32 %v2352, 4294901760
    %v3158 = vsub.f32 %v2352, %v3157
    %v3159 = vand.u32 %v3158, 4294901760
    %v3160 = vsub.f32 %v3158, %v3159
    %v3161 = vand.u32 %v3160, 4294901760
    %3162 = vmatpush.msra.mxu0 %v3161
    %v3163 = vand.u32 %v2348, 4294901760
    %v3164 = vsub.f32 %v2348, %v3163
    %v3165 = vand.u32 %v3164, 4294901760
    %v3166 = vsub.f32 %v3164, %v3165
    %v3167 = vand.u32 %v3166, 4294901760
    %3168 = vmatpush.msra.mxu0 %v3167
    %v3169 = vand.u32 %v2344, 4294901760
    %v3170 = vsub.f32 %v2344, %v3169
    %v3171 = vand.u32 %v3170, 4294901760
    %v3172 = vsub.f32 %v3170, %v3171
    %v3173 = vand.u32 %v3172, 4294901760
    %3174 = vmatpush.msra.mxu0 %v3173
    %v3175 = vand.u32 %v2340, 4294901760
    %v3176 = vsub.f32 %v2340, %v3175
    %v3177 = vand.u32 %v3176, 4294901760
    %v3178 = vsub.f32 %v3176, %v3177
    %v3179 = vand.u32 %v3178, 4294901760
    %3180 = vmatpush.msra.mxu0 %v3179
    %v3181 = vand.u32 %v2336, 4294901760
    %v3182 = vsub.f32 %v2336, %v3181
    %v3183 = vand.u32 %v3182, 4294901760
    %v3184 = vsub.f32 %v3182, %v3183
    %v3185 = vand.u32 %v3184, 4294901760
    %3186 = vmatpush.msra.mxu0 %v3185
    %v3187 = vand.u32 %v2332, 4294901760
    %v3188 = vsub.f32 %v2332, %v3187
    %v3189 = vand.u32 %v3188, 4294901760
    %v3190 = vsub.f32 %v3188, %v3189
    %v3191 = vand.u32 %v3190, 4294901760
    %3192 = vmatpush.msra.mxu0 %v3191
    %v3193 = vand.u32 %v2328, 4294901760
    %v3194 = vsub.f32 %v2328, %v3193
    %v3195 = vand.u32 %v3194, 4294901760
    %v3196 = vsub.f32 %v3194, %v3195
    %v3197 = vand.u32 %v3196, 4294901760
    %3198 = vmatpush.msra.mxu0 %v3197
    %v3199 = vand.u32 %v2324, 4294901760
    %v3200 = vsub.f32 %v2324, %v3199
    %v3201 = vand.u32 %v3200, 4294901760
    %v3202 = vsub.f32 %v3200, %v3201
    %v3203 = vand.u32 %v3202, 4294901760
    %3204 = vmatpush.msra.mxu0 %v3203
    %v3205 = vand.u32 %v2320, 4294901760
    %v3206 = vsub.f32 %v2320, %v3205
    %v3207 = vand.u32 %v3206, 4294901760
    %v3208 = vsub.f32 %v3206, %v3207
    %v3209 = vand.u32 %v3208, 4294901760
    %3210 = vmatpush.msra.mxu0 %v3209
    %v3211 = vand.u32 %v2316, 4294901760
    %v3212 = vsub.f32 %v2316, %v3211
    %v3213 = vand.u32 %v3212, 4294901760
    %v3214 = vsub.f32 %v3212, %v3213
    %v3215 = vand.u32 %v3214, 4294901760
    %3216 = vmatpush.msra.mxu0 %v3215
    %v3217 = vand.u32 %v2312, 4294901760
    %v3218 = vsub.f32 %v2312, %v3217
    %v3219 = vand.u32 %v3218, 4294901760
    %v3220 = vsub.f32 %v3218, %v3219
    %v3221 = vand.u32 %v3220, 4294901760
    %3222 = vmatpush.msra.mxu0 %v3221
    %v3223 = vand.u32 %v2308, 4294901760
    %v3224 = vsub.f32 %v2308, %v3223
    %v3225 = vand.u32 %v3224, 4294901760
    %v3226 = vsub.f32 %v3224, %v3225
    %v3227 = vand.u32 %v3226, 4294901760
    %3228 = vmatpush.msra.mxu0 %v3227
    %v3229 = vand.u32 %v2304, 4294901760
    %v3230 = vsub.f32 %v2304, %v3229
    %v3231 = vand.u32 %v3230, 4294901760
    %v3232 = vsub.f32 %v3230, %v3231
    %v3233 = vand.u32 %v3232, 4294901760
    %3234 = vmatpush.msra.mxu0 %v3233
    %v3235 = vand.u32 %v2300, 4294901760
    %v3236 = vsub.f32 %v2300, %v3235
    %v3237 = vand.u32 %v3236, 4294901760
    %v3238 = vsub.f32 %v3236, %v3237
    %v3239 = vand.u32 %v3238, 4294901760
    %3240 = vmatpush.msra.mxu0 %v3239
    %v3241 = vand.u32 %v3008, 4294901760
    %3242 = vmatmul.f32.gmra.mxu0 %v3241
    %v3243 = vpop.f32.mrf.mxu0
    %v3244 = vadd.f32 %v3087, %v3243
    %v3245 = vand.u32 %v3012, 4294901760
    %3246 = vmatmul.f32.gmra.mxu0 %v3245
    %v3247 = vpop.f32.mrf.mxu0
    %v3248 = vadd.f32 %v3095, %v3247
    %v3249 = vand.u32 %v3016, 4294901760
    %3250 = vmatmul.f32.gmra.mxu0 %v3249
    %v3251 = vpop.f32.mrf.mxu0
    %v3252 = vadd.f32 %v3103, %v3251
    %v3253 = vand.u32 %v3020, 4294901760
    %3254 = vmatmul.f32.gmra.mxu0 %v3253
    %v3255 = vpop.f32.mrf.mxu0
    %v3256 = vadd.f32 %v3111, %v3255
    %v3257 = vand.u32 %v3024, 4294901760
    %3258 = vmatmul.f32.gmra.mxu0 %v3257
    %v3259 = vpop.f32.mrf.mxu0
    %v3260 = vadd.f32 %v3119, %v3259
    %v3261 = vand.u32 %v3028, 4294901760
    %3262 = vmatmul.f32.gmra.mxu0 %v3261
    %v3263 = vpop.f32.mrf.mxu0
    %v3264 = vadd.f32 %v3127, %v3263
    %v3265 = vand.u32 %v3032, 4294901760
    %3266 = vmatmul.f32.gmra.mxu0 %v3265
    %v3267 = vpop.f32.mrf.mxu0
    %v3268 = vadd.f32 %v3135, %v3267
    %v3269 = vand.u32 %v3036, 4294901760
    %3270 = vmatmul.f32.gmra.mxu0 %v3269
    %v3271 = vpop.f32.mrf.mxu0
    %v3272 = vadd.f32 %v3143, %v3271
    %3273 = vdwg.mxu0
    %v3274 = vand.u32 %v2360, 4294901760
    %v3275 = vsub.f32 %v2360, %v3274
    %3276 = vmatpush.msra.mxu0 %v3275
    %v3277 = vand.u32 %v2356, 4294901760
    %v3278 = vsub.f32 %v2356, %v3277
    %3279 = vmatpush.msra.mxu0 %v3278
    %v3280 = vand.u32 %v2352, 4294901760
    %v3281 = vsub.f32 %v2352, %v3280
    %3282 = vmatpush.msra.mxu0 %v3281
    %v3283 = vand.u32 %v2348, 4294901760
    %v3284 = vsub.f32 %v2348, %v3283
    %3285 = vmatpush.msra.mxu0 %v3284
    %v3286 = vand.u32 %v2344, 4294901760
    %v3287 = vsub.f32 %v2344, %v3286
    %3288 = vmatpush.msra.mxu0 %v3287
    %v3289 = vand.u32 %v2340, 4294901760
    %v3290 = vsub.f32 %v2340, %v3289
    %3291 = vmatpush.msra.mxu0 %v3290
    %v3292 = vand.u32 %v2336, 4294901760
    %v3293 = vsub.f32 %v2336, %v3292
    %3294 = vmatpush.msra.mxu0 %v3293
    %v3295 = vand.u32 %v2332, 4294901760
    %v3296 = vsub.f32 %v2332, %v3295
    %3297 = vmatpush.msra.mxu0 %v3296
    %v3298 = vand.u32 %v2328, 4294901760
    %v3299 = vsub.f32 %v2328, %v3298
    %3300 = vmatpush.msra.mxu0 %v3299
    %v3301 = vand.u32 %v2324, 4294901760
    %v3302 = vsub.f32 %v2324, %v3301
    %3303 = vmatpush.msra.mxu0 %v3302
    %v3304 = vand.u32 %v2320, 4294901760
    %v3305 = vsub.f32 %v2320, %v3304
    %3306 = vmatpush.msra.mxu0 %v3305
    %v3307 = vand.u32 %v2316, 4294901760
    %v3308 = vsub.f32 %v2316, %v3307
    %3309 = vmatpush.msra.mxu0 %v3308
    %v3310 = vand.u32 %v2312, 4294901760
    %v3311 = vsub.f32 %v2312, %v3310
    %3312 = vmatpush.msra.mxu0 %v3311
    %v3313 = vand.u32 %v2308, 4294901760
    %v3314 = vsub.f32 %v2308, %v3313
    %3315 = vmatpush.msra.mxu0 %v3314
    %v3316 = vand.u32 %v2304, 4294901760
    %v3317 = vsub.f32 %v2304, %v3316
    %3318 = vmatpush.msra.mxu0 %v3317
    %v3319 = vand.u32 %v2300, 4294901760
    %v3320 = vsub.f32 %v2300, %v3319
    %3321 = vmatpush.msra.mxu0 %v3320
    %v3322 = vand.u32 %v3008, 4294901760
    %v3323 = vsub.f32 %v3008, %v3322
    %3324 = vmatmul.f32.gmra.mxu0 %v3323
    %v3325 = vpop.f32.mrf.mxu0
    %v3326 = vadd.f32 %v3244, %v3325
    %v3327 = vand.u32 %v3012, 4294901760
    %v3328 = vsub.f32 %v3012, %v3327
    %3329 = vmatmul.f32.gmra.mxu0 %v3328
    %v3330 = vpop.f32.mrf.mxu0
    %v3331 = vadd.f32 %v3248, %v3330
    %v3332 = vand.u32 %v3016, 4294901760
    %v3333 = vsub.f32 %v3016, %v3332
    %3334 = vmatmul.f32.gmra.mxu0 %v3333
    %v3335 = vpop.f32.mrf.mxu0
    %v3336 = vadd.f32 %v3252, %v3335
    %v3337 = vand.u32 %v3020, 4294901760
    %v3338 = vsub.f32 %v3020, %v3337
    %3339 = vmatmul.f32.gmra.mxu0 %v3338
    %v3340 = vpop.f32.mrf.mxu0
    %v3341 = vadd.f32 %v3256, %v3340
    %v3342 = vand.u32 %v3024, 4294901760
    %v3343 = vsub.f32 %v3024, %v3342
    %3344 = vmatmul.f32.gmra.mxu0 %v3343
    %v3345 = vpop.f32.mrf.mxu0
    %v3346 = vadd.f32 %v3260, %v3345
    %v3347 = vand.u32 %v3028, 4294901760
    %v3348 = vsub.f32 %v3028, %v3347
    %3349 = vmatmul.f32.gmra.mxu0 %v3348
    %v3350 = vpop.f32.mrf.mxu0
    %v3351 = vadd.f32 %v3264, %v3350
    %v3352 = vand.u32 %v3032, 4294901760
    %v3353 = vsub.f32 %v3032, %v3352
    %3354 = vmatmul.f32.gmra.mxu0 %v3353
    %v3355 = vpop.f32.mrf.mxu0
    %v3356 = vadd.f32 %v3268, %v3355
    %v3357 = vand.u32 %v3036, 4294901760
    %v3358 = vsub.f32 %v3036, %v3357
    %3359 = vmatmul.f32.gmra.mxu0 %v3358
    %v3360 = vpop.f32.mrf.mxu0
    %v3361 = vadd.f32 %v3272, %v3360
    %3362 = vdwg.mxu0
    %v3363 = vand.u32 %v2360, 4294901760
    %3364 = vmatpush.msra.mxu0 %v3363
    %v3365 = vand.u32 %v2356, 4294901760
    %3366 = vmatpush.msra.mxu0 %v3365
    %v3367 = vand.u32 %v2352, 4294901760
    %3368 = vmatpush.msra.mxu0 %v3367
    %v3369 = vand.u32 %v2348, 4294901760
    %3370 = vmatpush.msra.mxu0 %v3369
    %v3371 = vand.u32 %v2344, 4294901760
    %3372 = vmatpush.msra.mxu0 %v3371
    %v3373 = vand.u32 %v2340, 4294901760
    %3374 = vmatpush.msra.mxu0 %v3373
    %v3375 = vand.u32 %v2336, 4294901760
    %3376 = vmatpush.msra.mxu0 %v3375
    %v3377 = vand.u32 %v2332, 4294901760
    %3378 = vmatpush.msra.mxu0 %v3377
    %v3379 = vand.u32 %v2328, 4294901760
    %3380 = vmatpush.msra.mxu0 %v3379
    %v3381 = vand.u32 %v2324, 4294901760
    %3382 = vmatpush.msra.mxu0 %v3381
    %v3383 = vand.u32 %v2320, 4294901760
    %3384 = vmatpush.msra.mxu0 %v3383
    %v3385 = vand.u32 %v2316, 4294901760
    %3386 = vmatpush.msra.mxu0 %v3385
    %v3387 = vand.u32 %v2312, 4294901760
    %3388 = vmatpush.msra.mxu0 %v3387
    %v3389 = vand.u32 %v2308, 4294901760
    %3390 = vmatpush.msra.mxu0 %v3389
    %v3391 = vand.u32 %v2304, 4294901760
    %3392 = vmatpush.msra.mxu0 %v3391
    %v3393 = vand.u32 %v2300, 4294901760
    %3394 = vmatpush.msra.mxu0 %v3393
    %v3395 = vand.u32 %v3008, 4294901760
    %v3396 = vsub.f32 %v3008, %v3395
    %v3397 = vand.u32 %v3396, 4294901760
    %3398 = vmatmul.f32.gmra.mxu0 %v3397
    %v3399 = vpop.f32.mrf.mxu0
    %v3400 = vadd.f32 %v3326, %v3399
    %v3401 = vand.u32 %v3012, 4294901760
    %v3402 = vsub.f32 %v3012, %v3401
    %v3403 = vand.u32 %v3402, 4294901760
    %3404 = vmatmul.f32.gmra.mxu0 %v3403
    %v3405 = vpop.f32.mrf.mxu0
    %v3406 = vadd.f32 %v3331, %v3405
    %v3407 = vand.u32 %v3016, 4294901760
    %v3408 = vsub.f32 %v3016, %v3407
    %v3409 = vand.u32 %v3408, 4294901760
    %3410 = vmatmul.f32.gmra.mxu0 %v3409
    %v3411 = vpop.f32.mrf.mxu0
    %v3412 = vadd.f32 %v3336, %v3411
    %v3413 = vand.u32 %v3020, 4294901760
    %v3414 = vsub.f32 %v3020, %v3413
    %v3415 = vand.u32 %v3414, 4294901760
    %3416 = vmatmul.f32.gmra.mxu0 %v3415
    %v3417 = vpop.f32.mrf.mxu0
    %v3418 = vadd.f32 %v3341, %v3417
    %v3419 = vand.u32 %v3024, 4294901760
    %v3420 = vsub.f32 %v3024, %v3419
    %v3421 = vand.u32 %v3420, 4294901760
    %3422 = vmatmul.f32.gmra.mxu0 %v3421
    %v3423 = vpop.f32.mrf.mxu0
    %v3424 = vadd.f32 %v3346, %v3423
    %v3425 = vand.u32 %v3028, 4294901760
    %v3426 = vsub.f32 %v3028, %v3425
    %v3427 = vand.u32 %v3426, 4294901760
    %3428 = vmatmul.f32.gmra.mxu0 %v3427
    %v3429 = vpop.f32.mrf.mxu0
    %v3430 = vadd.f32 %v3351, %v3429
    %v3431 = vand.u32 %v3032, 4294901760
    %v3432 = vsub.f32 %v3032, %v3431
    %v3433 = vand.u32 %v3432, 4294901760
    %3434 = vmatmul.f32.gmra.mxu0 %v3433
    %v3435 = vpop.f32.mrf.mxu0
    %v3436 = vadd.f32 %v3356, %v3435
    %v3437 = vand.u32 %v3036, 4294901760
    %v3438 = vsub.f32 %v3036, %v3437
    %v3439 = vand.u32 %v3438, 4294901760
    %3440 = vmatmul.f32.gmra.mxu0 %v3439
    %v3441 = vpop.f32.mrf.mxu0
    %v3442 = vadd.f32 %v3361, %v3441
    %3443 = vdwg.mxu0
    %v3444 = vand.u32 %v2360, 4294901760
    %v3445 = vsub.f32 %v2360, %v3444
    %v3446 = vand.u32 %v3445, 4294901760
    %3447 = vmatpush.msra.mxu0 %v3446
    %v3448 = vand.u32 %v2356, 4294901760
    %v3449 = vsub.f32 %v2356, %v3448
    %v3450 = vand.u32 %v3449, 4294901760
    %3451 = vmatpush.msra.mxu0 %v3450
    %v3452 = vand.u32 %v2352, 4294901760
    %v3453 = vsub.f32 %v2352, %v3452
    %v3454 = vand.u32 %v3453, 4294901760
    %3455 = vmatpush.msra.mxu0 %v3454
    %v3456 = vand.u32 %v2348, 4294901760
    %v3457 = vsub.f32 %v2348, %v3456
    %v3458 = vand.u32 %v3457, 4294901760
    %3459 = vmatpush.msra.mxu0 %v3458
    %v3460 = vand.u32 %v2344, 4294901760
    %v3461 = vsub.f32 %v2344, %v3460
    %v3462 = vand.u32 %v3461, 4294901760
    %3463 = vmatpush.msra.mxu0 %v3462
    %v3464 = vand.u32 %v2340, 4294901760
    %v3465 = vsub.f32 %v2340, %v3464
    %v3466 = vand.u32 %v3465, 4294901760
    %3467 = vmatpush.msra.mxu0 %v3466
    %v3468 = vand.u32 %v2336, 4294901760
    %v3469 = vsub.f32 %v2336, %v3468
    %v3470 = vand.u32 %v3469, 4294901760
    %3471 = vmatpush.msra.mxu0 %v3470
    %v3472 = vand.u32 %v2332, 4294901760
    %v3473 = vsub.f32 %v2332, %v3472
    %v3474 = vand.u32 %v3473, 4294901760
    %3475 = vmatpush.msra.mxu0 %v3474
    %v3476 = vand.u32 %v2328, 4294901760
    %v3477 = vsub.f32 %v2328, %v3476
    %v3478 = vand.u32 %v3477, 4294901760
    %3479 = vmatpush.msra.mxu0 %v3478
    %v3480 = vand.u32 %v2324, 4294901760
    %v3481 = vsub.f32 %v2324, %v3480
    %v3482 = vand.u32 %v3481, 4294901760
    %3483 = vmatpush.msra.mxu0 %v3482
    %v3484 = vand.u32 %v2320, 4294901760
    %v3485 = vsub.f32 %v2320, %v3484
    %v3486 = vand.u32 %v3485, 4294901760
    %3487 = vmatpush.msra.mxu0 %v3486
    %v3488 = vand.u32 %v2316, 4294901760
    %v3489 = vsub.f32 %v2316, %v3488
    %v3490 = vand.u32 %v3489, 4294901760
    %3491 = vmatpush.msra.mxu0 %v3490
    %v3492 = vand.u32 %v2312, 4294901760
    %v3493 = vsub.f32 %v2312, %v3492
    %v3494 = vand.u32 %v3493, 4294901760
    %3495 = vmatpush.msra.mxu0 %v3494
    %v3496 = vand.u32 %v2308, 4294901760
    %v3497 = vsub.f32 %v2308, %v3496
    %v3498 = vand.u32 %v3497, 4294901760
    %3499 = vmatpush.msra.mxu0 %v3498
    %v3500 = vand.u32 %v2304, 4294901760
    %v3501 = vsub.f32 %v2304, %v3500
    %v3502 = vand.u32 %v3501, 4294901760
    %3503 = vmatpush.msra.mxu0 %v3502
    %v3504 = vand.u32 %v2300, 4294901760
    %v3505 = vsub.f32 %v2300, %v3504
    %v3506 = vand.u32 %v3505, 4294901760
    %3507 = vmatpush.msra.mxu0 %v3506
    %v3508 = vand.u32 %v3008, 4294901760
    %3509 = vmatmul.f32.gmra.mxu0 %v3508
    %v3510 = vpop.f32.mrf.mxu0
    %v3511 = vadd.f32 %v3400, %v3510
    %v3512 = vand.u32 %v3012, 4294901760
    %3513 = vmatmul.f32.gmra.mxu0 %v3512
    %v3514 = vpop.f32.mrf.mxu0
    %v3515 = vadd.f32 %v3406, %v3514
    %v3516 = vand.u32 %v3016, 4294901760
    %3517 = vmatmul.f32.gmra.mxu0 %v3516
    %v3518 = vpop.f32.mrf.mxu0
    %v3519 = vadd.f32 %v3412, %v3518
    %v3520 = vand.u32 %v3020, 4294901760
    %3521 = vmatmul.f32.gmra.mxu0 %v3520
    %v3522 = vpop.f32.mrf.mxu0
    %v3523 = vadd.f32 %v3418, %v3522
    %v3524 = vand.u32 %v3024, 4294901760
    %3525 = vmatmul.f32.gmra.mxu0 %v3524
    %v3526 = vpop.f32.mrf.mxu0
    %v3527 = vadd.f32 %v3424, %v3526
    %v3528 = vand.u32 %v3028, 4294901760
    %3529 = vmatmul.f32.gmra.mxu0 %v3528
    %v3530 = vpop.f32.mrf.mxu0
    %v3531 = vadd.f32 %v3430, %v3530
    %v3532 = vand.u32 %v3032, 4294901760
    %3533 = vmatmul.f32.gmra.mxu0 %v3532
    %v3534 = vpop.f32.mrf.mxu0
    %v3535 = vadd.f32 %v3436, %v3534
    %v3536 = vand.u32 %v3036, 4294901760
    %3537 = vmatmul.f32.gmra.mxu0 %v3536
    %v3538 = vpop.f32.mrf.mxu0
    %v3539 = vadd.f32 %v3442, %v3538
    %3540 = vdwg.mxu0
    %v3541 = vand.u32 %v2360, 4294901760
    %3542 = vmatpush.msra.mxu0 %v3541
    %v3543 = vand.u32 %v2356, 4294901760
    %3544 = vmatpush.msra.mxu0 %v3543
    %v3545 = vand.u32 %v2352, 4294901760
    %3546 = vmatpush.msra.mxu0 %v3545
    %v3547 = vand.u32 %v2348, 4294901760
    %3548 = vmatpush.msra.mxu0 %v3547
    %v3549 = vand.u32 %v2344, 4294901760
    %3550 = vmatpush.msra.mxu0 %v3549
    %v3551 = vand.u32 %v2340, 4294901760
    %3552 = vmatpush.msra.mxu0 %v3551
    %v3553 = vand.u32 %v2336, 4294901760
    %3554 = vmatpush.msra.mxu0 %v3553
    %v3555 = vand.u32 %v2332, 4294901760
    %3556 = vmatpush.msra.mxu0 %v3555
    %v3557 = vand.u32 %v2328, 4294901760
    %3558 = vmatpush.msra.mxu0 %v3557
    %v3559 = vand.u32 %v2324, 4294901760
    %3560 = vmatpush.msra.mxu0 %v3559
    %v3561 = vand.u32 %v2320, 4294901760
    %3562 = vmatpush.msra.mxu0 %v3561
    %v3563 = vand.u32 %v2316, 4294901760
    %3564 = vmatpush.msra.mxu0 %v3563
    %v3565 = vand.u32 %v2312, 4294901760
    %3566 = vmatpush.msra.mxu0 %v3565
    %v3567 = vand.u32 %v2308, 4294901760
    %3568 = vmatpush.msra.mxu0 %v3567
    %v3569 = vand.u32 %v2304, 4294901760
    %3570 = vmatpush.msra.mxu0 %v3569
    %v3571 = vand.u32 %v2300, 4294901760
    %3572 = vmatpush.msra.mxu0 %v3571
    %v3573 = vand.u32 %v3008, 4294901760
    %3574 = vmatmul.f32.gmra.mxu0 %v3573
    %v3575 = vpop.f32.mrf.mxu0
    %v3576 = vadd.f32 %v3511, %v3575
    %v3577 = vand.u32 %v3012, 4294901760
    %3578 = vmatmul.f32.gmra.mxu0 %v3577
    %v3579 = vpop.f32.mrf.mxu0
    %v3580 = vadd.f32 %v3515, %v3579
    %v3581 = vand.u32 %v3016, 4294901760
    %3582 = vmatmul.f32.gmra.mxu0 %v3581
    %v3583 = vpop.f32.mrf.mxu0
    %v3584 = vadd.f32 %v3519, %v3583
    %v3585 = vand.u32 %v3020, 4294901760
    %3586 = vmatmul.f32.gmra.mxu0 %v3585
    %v3587 = vpop.f32.mrf.mxu0
    %v3588 = vadd.f32 %v3523, %v3587
    %v3589 = vand.u32 %v3024, 4294901760
    %3590 = vmatmul.f32.gmra.mxu0 %v3589
    %v3591 = vpop.f32.mrf.mxu0
    %v3592 = vadd.f32 %v3527, %v3591
    %v3593 = vand.u32 %v3028, 4294901760
    %3594 = vmatmul.f32.gmra.mxu0 %v3593
    %v3595 = vpop.f32.mrf.mxu0
    %v3596 = vadd.f32 %v3531, %v3595
    %v3597 = vand.u32 %v3032, 4294901760
    %3598 = vmatmul.f32.gmra.mxu0 %v3597
    %v3599 = vpop.f32.mrf.mxu0
    %v3600 = vadd.f32 %v3535, %v3599
    %v3601 = vand.u32 %v3036, 4294901760
    %3602 = vmatmul.f32.gmra.mxu0 %v3601
    %v3603 = vpop.f32.mrf.mxu0
    %v3604 = vadd.f32 %v3539, %v3603
    %3605 = vdwg.mxu0
    %v3606 = vand.u32 %v2424, 4294901760
    %3607 = vmatpush.msra.mxu0 %v3606
    %v3608 = vand.u32 %v2420, 4294901760
    %3609 = vmatpush.msra.mxu0 %v3608
    %v3610 = vand.u32 %v2416, 4294901760
    %3611 = vmatpush.msra.mxu0 %v3610
    %v3612 = vand.u32 %v2412, 4294901760
    %3613 = vmatpush.msra.mxu0 %v3612
    %v3614 = vand.u32 %v2408, 4294901760
    %3615 = vmatpush.msra.mxu0 %v3614
    %v3616 = vand.u32 %v2404, 4294901760
    %3617 = vmatpush.msra.mxu0 %v3616
    %v3618 = vand.u32 %v2400, 4294901760
    %3619 = vmatpush.msra.mxu0 %v3618
    %v3620 = vand.u32 %v2396, 4294901760
    %3621 = vmatpush.msra.mxu0 %v3620
    %v3622 = vand.u32 %v2392, 4294901760
    %3623 = vmatpush.msra.mxu0 %v3622
    %v3624 = vand.u32 %v2388, 4294901760
    %3625 = vmatpush.msra.mxu0 %v3624
    %v3626 = vand.u32 %v2384, 4294901760
    %3627 = vmatpush.msra.mxu0 %v3626
    %v3628 = vand.u32 %v2380, 4294901760
    %3629 = vmatpush.msra.mxu0 %v3628
    %v3630 = vand.u32 %v2376, 4294901760
    %3631 = vmatpush.msra.mxu0 %v3630
    %v3632 = vand.u32 %v2372, 4294901760
    %3633 = vmatpush.msra.mxu0 %v3632
    %v3634 = vand.u32 %v2368, 4294901760
    %3635 = vmatpush.msra.mxu0 %v3634
    %v3636 = vand.u32 %v2364, 4294901760
    %3637 = vmatpush.msra.mxu0 %v3636
    %v3638 = vand.u32 %v3009, 4294901760
    %v3639 = vsub.f32 %v3009, %v3638
    %v3640 = vand.u32 %v3639, 4294901760
    %v3641 = vsub.f32 %v3639, %v3640
    %v3642 = vand.u32 %v3641, 4294901760
    %3643 = vmatmul.f32.gmra.mxu0 %v3642
    %v3644 = vpop.f32.mrf.mxu0
    %v3645 = vadd.f32 %v3576, %v3644
    %v3646 = vand.u32 %v3013, 4294901760
    %v3647 = vsub.f32 %v3013, %v3646
    %v3648 = vand.u32 %v3647, 4294901760
    %v3649 = vsub.f32 %v3647, %v3648
    %v3650 = vand.u32 %v3649, 4294901760
    %3651 = vmatmul.f32.gmra.mxu0 %v3650
    %v3652 = vpop.f32.mrf.mxu0
    %v3653 = vadd.f32 %v3580, %v3652
    %v3654 = vand.u32 %v3017, 4294901760
    %v3655 = vsub.f32 %v3017, %v3654
    %v3656 = vand.u32 %v3655, 4294901760
    %v3657 = vsub.f32 %v3655, %v3656
    %v3658 = vand.u32 %v3657, 4294901760
    %3659 = vmatmul.f32.gmra.mxu0 %v3658
    %v3660 = vpop.f32.mrf.mxu0
    %v3661 = vadd.f32 %v3584, %v3660
    %v3662 = vand.u32 %v3021, 4294901760
    %v3663 = vsub.f32 %v3021, %v3662
    %v3664 = vand.u32 %v3663, 4294901760
    %v3665 = vsub.f32 %v3663, %v3664
    %v3666 = vand.u32 %v3665, 4294901760
    %3667 = vmatmul.f32.gmra.mxu0 %v3666
    %v3668 = vpop.f32.mrf.mxu0
    %v3669 = vadd.f32 %v3588, %v3668
    %v3670 = vand.u32 %v3025, 4294901760
    %v3671 = vsub.f32 %v3025, %v3670
    %v3672 = vand.u32 %v3671, 4294901760
    %v3673 = vsub.f32 %v3671, %v3672
    %v3674 = vand.u32 %v3673, 4294901760
    %3675 = vmatmul.f32.gmra.mxu0 %v3674
    %v3676 = vpop.f32.mrf.mxu0
    %v3677 = vadd.f32 %v3592, %v3676
    %v3678 = vand.u32 %v3029, 4294901760
    %v3679 = vsub.f32 %v3029, %v3678
    %v3680 = vand.u32 %v3679, 4294901760
    %v3681 = vsub.f32 %v3679, %v3680
    %v3682 = vand.u32 %v3681, 4294901760
    %3683 = vmatmul.f32.gmra.mxu0 %v3682
    %v3684 = vpop.f32.mrf.mxu0
    %v3685 = vadd.f32 %v3596, %v3684
    %v3686 = vand.u32 %v3033, 4294901760
    %v3687 = vsub.f32 %v3033, %v3686
    %v3688 = vand.u32 %v3687, 4294901760
    %v3689 = vsub.f32 %v3687, %v3688
    %v3690 = vand.u32 %v3689, 4294901760
    %3691 = vmatmul.f32.gmra.mxu0 %v3690
    %v3692 = vpop.f32.mrf.mxu0
    %v3693 = vadd.f32 %v3600, %v3692
    %v3694 = vand.u32 %v3037, 4294901760
    %v3695 = vsub.f32 %v3037, %v3694
    %v3696 = vand.u32 %v3695, 4294901760
    %v3697 = vsub.f32 %v3695, %v3696
    %v3698 = vand.u32 %v3697, 4294901760
    %3699 = vmatmul.f32.gmra.mxu0 %v3698
    %v3700 = vpop.f32.mrf.mxu0
    %v3701 = vadd.f32 %v3604, %v3700
    %3702 = vdwg.mxu0
    %v3703 = vand.u32 %v2424, 4294901760
    %v3704 = vsub.f32 %v2424, %v3703
    %v3705 = vand.u32 %v3704, 4294901760
    %v3706 = vsub.f32 %v3704, %v3705
    %v3707 = vand.u32 %v3706, 4294901760
    %3708 = vmatpush.msra.mxu0 %v3707
    %v3709 = vand.u32 %v2420, 4294901760
    %v3710 = vsub.f32 %v2420, %v3709
    %v3711 = vand.u32 %v3710, 4294901760
    %v3712 = vsub.f32 %v3710, %v3711
    %v3713 = vand.u32 %v3712, 4294901760
    %3714 = vmatpush.msra.mxu0 %v3713
    %v3715 = vand.u32 %v2416, 4294901760
    %v3716 = vsub.f32 %v2416, %v3715
    %v3717 = vand.u32 %v3716, 4294901760
    %v3718 = vsub.f32 %v3716, %v3717
    %v3719 = vand.u32 %v3718, 4294901760
    %3720 = vmatpush.msra.mxu0 %v3719
    %v3721 = vand.u32 %v2412, 4294901760
    %v3722 = vsub.f32 %v2412, %v3721
    %v3723 = vand.u32 %v3722, 4294901760
    %v3724 = vsub.f32 %v3722, %v3723
    %v3725 = vand.u32 %v3724, 4294901760
    %3726 = vmatpush.msra.mxu0 %v3725
    %v3727 = vand.u32 %v2408, 4294901760
    %v3728 = vsub.f32 %v2408, %v3727
    %v3729 = vand.u32 %v3728, 4294901760
    %v3730 = vsub.f32 %v3728, %v3729
    %v3731 = vand.u32 %v3730, 4294901760
    %3732 = vmatpush.msra.mxu0 %v3731
    %v3733 = vand.u32 %v2404, 4294901760
    %v3734 = vsub.f32 %v2404, %v3733
    %v3735 = vand.u32 %v3734, 4294901760
    %v3736 = vsub.f32 %v3734, %v3735
    %v3737 = vand.u32 %v3736, 4294901760
    %3738 = vmatpush.msra.mxu0 %v3737
    %v3739 = vand.u32 %v2400, 4294901760
    %v3740 = vsub.f32 %v2400, %v3739
    %v3741 = vand.u32 %v3740, 4294901760
    %v3742 = vsub.f32 %v3740, %v3741
    %v3743 = vand.u32 %v3742, 4294901760
    %3744 = vmatpush.msra.mxu0 %v3743
    %v3745 = vand.u32 %v2396, 4294901760
    %v3746 = vsub.f32 %v2396, %v3745
    %v3747 = vand.u32 %v3746, 4294901760
    %v3748 = vsub.f32 %v3746, %v3747
    %v3749 = vand.u32 %v3748, 4294901760
    %3750 = vmatpush.msra.mxu0 %v3749
    %v3751 = vand.u32 %v2392, 4294901760
    %v3752 = vsub.f32 %v2392, %v3751
    %v3753 = vand.u32 %v3752, 4294901760
    %v3754 = vsub.f32 %v3752, %v3753
    %v3755 = vand.u32 %v3754, 4294901760
    %3756 = vmatpush.msra.mxu0 %v3755
    %v3757 = vand.u32 %v2388, 4294901760
    %v3758 = vsub.f32 %v2388, %v3757
    %v3759 = vand.u32 %v3758, 4294901760
    %v3760 = vsub.f32 %v3758, %v3759
    %v3761 = vand.u32 %v3760, 4294901760
    %3762 = vmatpush.msra.mxu0 %v3761
    %v3763 = vand.u32 %v2384, 4294901760
    %v3764 = vsub.f32 %v2384, %v3763
    %v3765 = vand.u32 %v3764, 4294901760
    %v3766 = vsub.f32 %v3764, %v3765
    %v3767 = vand.u32 %v3766, 4294901760
    %3768 = vmatpush.msra.mxu0 %v3767
    %v3769 = vand.u32 %v2380, 4294901760
    %v3770 = vsub.f32 %v2380, %v3769
    %v3771 = vand.u32 %v3770, 4294901760
    %v3772 = vsub.f32 %v3770, %v3771
    %v3773 = vand.u32 %v3772, 4294901760
    %3774 = vmatpush.msra.mxu0 %v3773
    %v3775 = vand.u32 %v2376, 4294901760
    %v3776 = vsub.f32 %v2376, %v3775
    %v3777 = vand.u32 %v3776, 4294901760
    %v3778 = vsub.f32 %v3776, %v3777
    %v3779 = vand.u32 %v3778, 4294901760
    %3780 = vmatpush.msra.mxu0 %v3779
    %v3781 = vand.u32 %v2372, 4294901760
    %v3782 = vsub.f32 %v2372, %v3781
    %v3783 = vand.u32 %v3782, 4294901760
    %v3784 = vsub.f32 %v3782, %v3783
    %v3785 = vand.u32 %v3784, 4294901760
    %3786 = vmatpush.msra.mxu0 %v3785
    %v3787 = vand.u32 %v2368, 4294901760
    %v3788 = vsub.f32 %v2368, %v3787
    %v3789 = vand.u32 %v3788, 4294901760
    %v3790 = vsub.f32 %v3788, %v3789
    %v3791 = vand.u32 %v3790, 4294901760
    %3792 = vmatpush.msra.mxu0 %v3791
    %v3793 = vand.u32 %v2364, 4294901760
    %v3794 = vsub.f32 %v2364, %v3793
    %v3795 = vand.u32 %v3794, 4294901760
    %v3796 = vsub.f32 %v3794, %v3795
    %v3797 = vand.u32 %v3796, 4294901760
    %3798 = vmatpush.msra.mxu0 %v3797
    %v3799 = vand.u32 %v3009, 4294901760
    %3800 = vmatmul.f32.gmra.mxu0 %v3799
    %v3801 = vpop.f32.mrf.mxu0
    %v3802 = vadd.f32 %v3645, %v3801
    %v3803 = vand.u32 %v3013, 4294901760
    %3804 = vmatmul.f32.gmra.mxu0 %v3803
    %v3805 = vpop.f32.mrf.mxu0
    %v3806 = vadd.f32 %v3653, %v3805
    %v3807 = vand.u32 %v3017, 4294901760
    %3808 = vmatmul.f32.gmra.mxu0 %v3807
    %v3809 = vpop.f32.mrf.mxu0
    %v3810 = vadd.f32 %v3661, %v3809
    %v3811 = vand.u32 %v3021, 4294901760
    %3812 = vmatmul.f32.gmra.mxu0 %v3811
    %v3813 = vpop.f32.mrf.mxu0
    %v3814 = vadd.f32 %v3669, %v3813
    %v3815 = vand.u32 %v3025, 4294901760
    %3816 = vmatmul.f32.gmra.mxu0 %v3815
    %v3817 = vpop.f32.mrf.mxu0
    %v3818 = vadd.f32 %v3677, %v3817
    %v3819 = vand.u32 %v3029, 4294901760
    %3820 = vmatmul.f32.gmra.mxu0 %v3819
    %v3821 = vpop.f32.mrf.mxu0
    %v3822 = vadd.f32 %v3685, %v3821
    %v3823 = vand.u32 %v3033, 4294901760
    %3824 = vmatmul.f32.gmra.mxu0 %v3823
    %v3825 = vpop.f32.mrf.mxu0
    %v3826 = vadd.f32 %v3693, %v3825
    %v3827 = vand.u32 %v3037, 4294901760
    %3828 = vmatmul.f32.gmra.mxu0 %v3827
    %v3829 = vpop.f32.mrf.mxu0
    %v3830 = vadd.f32 %v3701, %v3829
    %3831 = vdwg.mxu0
    %v3832 = vand.u32 %v2424, 4294901760
    %v3833 = vsub.f32 %v2424, %v3832
    %3834 = vmatpush.msra.mxu0 %v3833
    %v3835 = vand.u32 %v2420, 4294901760
    %v3836 = vsub.f32 %v2420, %v3835
    %3837 = vmatpush.msra.mxu0 %v3836
    %v3838 = vand.u32 %v2416, 4294901760
    %v3839 = vsub.f32 %v2416, %v3838
    %3840 = vmatpush.msra.mxu0 %v3839
    %v3841 = vand.u32 %v2412, 4294901760
    %v3842 = vsub.f32 %v2412, %v3841
    %3843 = vmatpush.msra.mxu0 %v3842
    %v3844 = vand.u32 %v2408, 4294901760
    %v3845 = vsub.f32 %v2408, %v3844
    %3846 = vmatpush.msra.mxu0 %v3845
    %v3847 = vand.u32 %v2404, 4294901760
    %v3848 = vsub.f32 %v2404, %v3847
    %3849 = vmatpush.msra.mxu0 %v3848
    %v3850 = vand.u32 %v2400, 4294901760
    %v3851 = vsub.f32 %v2400, %v3850
    %3852 = vmatpush.msra.mxu0 %v3851
    %v3853 = vand.u32 %v2396, 4294901760
    %v3854 = vsub.f32 %v2396, %v3853
    %3855 = vmatpush.msra.mxu0 %v3854
    %v3856 = vand.u32 %v2392, 4294901760
    %v3857 = vsub.f32 %v2392, %v3856
    %3858 = vmatpush.msra.mxu0 %v3857
    %v3859 = vand.u32 %v2388, 4294901760
    %v3860 = vsub.f32 %v2388, %v3859
    %3861 = vmatpush.msra.mxu0 %v3860
    %v3862 = vand.u32 %v2384, 4294901760
    %v3863 = vsub.f32 %v2384, %v3862
    %3864 = vmatpush.msra.mxu0 %v3863
    %v3865 = vand.u32 %v2380, 4294901760
    %v3866 = vsub.f32 %v2380, %v3865
    %3867 = vmatpush.msra.mxu0 %v3866
    %v3868 = vand.u32 %v2376, 4294901760
    %v3869 = vsub.f32 %v2376, %v3868
    %3870 = vmatpush.msra.mxu0 %v3869
    %v3871 = vand.u32 %v2372, 4294901760
    %v3872 = vsub.f32 %v2372, %v3871
    %3873 = vmatpush.msra.mxu0 %v3872
    %v3874 = vand.u32 %v2368, 4294901760
    %v3875 = vsub.f32 %v2368, %v3874
    %3876 = vmatpush.msra.mxu0 %v3875
    %v3877 = vand.u32 %v2364, 4294901760
    %v3878 = vsub.f32 %v2364, %v3877
    %3879 = vmatpush.msra.mxu0 %v3878
    %v3880 = vand.u32 %v3009, 4294901760
    %v3881 = vsub.f32 %v3009, %v3880
    %3882 = vmatmul.f32.gmra.mxu0 %v3881
    %v3883 = vpop.f32.mrf.mxu0
    %v3884 = vadd.f32 %v3802, %v3883
    %v3885 = vand.u32 %v3013, 4294901760
    %v3886 = vsub.f32 %v3013, %v3885
    %3887 = vmatmul.f32.gmra.mxu0 %v3886
    %v3888 = vpop.f32.mrf.mxu0
    %v3889 = vadd.f32 %v3806, %v3888
    %v3890 = vand.u32 %v3017, 4294901760
    %v3891 = vsub.f32 %v3017, %v3890
    %3892 = vmatmul.f32.gmra.mxu0 %v3891
    %v3893 = vpop.f32.mrf.mxu0
    %v3894 = vadd.f32 %v3810, %v3893
    %v3895 = vand.u32 %v3021, 4294901760
    %v3896 = vsub.f32 %v3021, %v3895
    %3897 = vmatmul.f32.gmra.mxu0 %v3896
    %v3898 = vpop.f32.mrf.mxu0
    %v3899 = vadd.f32 %v3814, %v3898
    %v3900 = vand.u32 %v3025, 4294901760
    %v3901 = vsub.f32 %v3025, %v3900
    %3902 = vmatmul.f32.gmra.mxu0 %v3901
    %v3903 = vpop.f32.mrf.mxu0
    %v3904 = vadd.f32 %v3818, %v3903
    %v3905 = vand.u32 %v3029, 4294901760
    %v3906 = vsub.f32 %v3029, %v3905
    %3907 = vmatmul.f32.gmra.mxu0 %v3906
    %v3908 = vpop.f32.mrf.mxu0
    %v3909 = vadd.f32 %v3822, %v3908
    %v3910 = vand.u32 %v3033, 4294901760
    %v3911 = vsub.f32 %v3033, %v3910
    %3912 = vmatmul.f32.gmra.mxu0 %v3911
    %v3913 = vpop.f32.mrf.mxu0
    %v3914 = vadd.f32 %v3826, %v3913
    %v3915 = vand.u32 %v3037, 4294901760
    %v3916 = vsub.f32 %v3037, %v3915
    %3917 = vmatmul.f32.gmra.mxu0 %v3916
    %v3918 = vpop.f32.mrf.mxu0
    %v3919 = vadd.f32 %v3830, %v3918
    %3920 = vdwg.mxu0
    %v3921 = vand.u32 %v2424, 4294901760
    %3922 = vmatpush.msra.mxu0 %v3921
    %v3923 = vand.u32 %v2420, 4294901760
    %3924 = vmatpush.msra.mxu0 %v3923
    %v3925 = vand.u32 %v2416, 4294901760
    %3926 = vmatpush.msra.mxu0 %v3925
    %v3927 = vand.u32 %v2412, 4294901760
    %3928 = vmatpush.msra.mxu0 %v3927
    %v3929 = vand.u32 %v2408, 4294901760
    %3930 = vmatpush.msra.mxu0 %v3929
    %v3931 = vand.u32 %v2404, 4294901760
    %3932 = vmatpush.msra.mxu0 %v3931
    %v3933 = vand.u32 %v2400, 4294901760
    %3934 = vmatpush.msra.mxu0 %v3933
    %v3935 = vand.u32 %v2396, 4294901760
    %3936 = vmatpush.msra.mxu0 %v3935
    %v3937 = vand.u32 %v2392, 4294901760
    %3938 = vmatpush.msra.mxu0 %v3937
    %v3939 = vand.u32 %v2388, 4294901760
    %3940 = vmatpush.msra.mxu0 %v3939
    %v3941 = vand.u32 %v2384, 4294901760
    %3942 = vmatpush.msra.mxu0 %v3941
    %v3943 = vand.u32 %v2380, 4294901760
    %3944 = vmatpush.msra.mxu0 %v3943
    %v3945 = vand.u32 %v2376, 4294901760
    %3946 = vmatpush.msra.mxu0 %v3945
    %v3947 = vand.u32 %v2372, 4294901760
    %3948 = vmatpush.msra.mxu0 %v3947
    %v3949 = vand.u32 %v2368, 4294901760
    %3950 = vmatpush.msra.mxu0 %v3949
    %v3951 = vand.u32 %v2364, 4294901760
    %3952 = vmatpush.msra.mxu0 %v3951
    %v3953 = vand.u32 %v3009, 4294901760
    %v3954 = vsub.f32 %v3009, %v3953
    %v3955 = vand.u32 %v3954, 4294901760
    %3956 = vmatmul.f32.gmra.mxu0 %v3955
    %v3957 = vpop.f32.mrf.mxu0
    %v3958 = vadd.f32 %v3884, %v3957
    %v3959 = vand.u32 %v3013, 4294901760
    %v3960 = vsub.f32 %v3013, %v3959
    %v3961 = vand.u32 %v3960, 4294901760
    %3962 = vmatmul.f32.gmra.mxu0 %v3961
    %v3963 = vpop.f32.mrf.mxu0
    %v3964 = vadd.f32 %v3889, %v3963
    %v3965 = vand.u32 %v3017, 4294901760
    %v3966 = vsub.f32 %v3017, %v3965
    %v3967 = vand.u32 %v3966, 4294901760
    %3968 = vmatmul.f32.gmra.mxu0 %v3967
    %v3969 = vpop.f32.mrf.mxu0
    %v3970 = vadd.f32 %v3894, %v3969
    %v3971 = vand.u32 %v3021, 4294901760
    %v3972 = vsub.f32 %v3021, %v3971
    %v3973 = vand.u32 %v3972, 4294901760
    %3974 = vmatmul.f32.gmra.mxu0 %v3973
    %v3975 = vpop.f32.mrf.mxu0
    %v3976 = vadd.f32 %v3899, %v3975
    %v3977 = vand.u32 %v3025, 4294901760
    %v3978 = vsub.f32 %v3025, %v3977
    %v3979 = vand.u32 %v3978, 4294901760
    %3980 = vmatmul.f32.gmra.mxu0 %v3979
    %v3981 = vpop.f32.mrf.mxu0
    %v3982 = vadd.f32 %v3904, %v3981
    %v3983 = vand.u32 %v3029, 4294901760
    %v3984 = vsub.f32 %v3029, %v3983
    %v3985 = vand.u32 %v3984, 4294901760
    %3986 = vmatmul.f32.gmra.mxu0 %v3985
    %v3987 = vpop.f32.mrf.mxu0
    %v3988 = vadd.f32 %v3909, %v3987
    %v3989 = vand.u32 %v3033, 4294901760
    %v3990 = vsub.f32 %v3033, %v3989
    %v3991 = vand.u32 %v3990, 4294901760
    %3992 = vmatmul.f32.gmra.mxu0 %v3991
    %v3993 = vpop.f32.mrf.mxu0
    %v3994 = vadd.f32 %v3914, %v3993
    %v3995 = vand.u32 %v3037, 4294901760
    %v3996 = vsub.f32 %v3037, %v3995
    %v3997 = vand.u32 %v3996, 4294901760
    %3998 = vmatmul.f32.gmra.mxu0 %v3997
    %v3999 = vpop.f32.mrf.mxu0
    %v4000 = vadd.f32 %v3919, %v3999
    %4001 = vdwg.mxu0
    %v4002 = vand.u32 %v2424, 4294901760
    %v4003 = vsub.f32 %v2424, %v4002
    %v4004 = vand.u32 %v4003, 4294901760
    %4005 = vmatpush.msra.mxu0 %v4004
    %v4006 = vand.u32 %v2420, 4294901760
    %v4007 = vsub.f32 %v2420, %v4006
    %v4008 = vand.u32 %v4007, 4294901760
    %4009 = vmatpush.msra.mxu0 %v4008
    %v4010 = vand.u32 %v2416, 4294901760
    %v4011 = vsub.f32 %v2416, %v4010
    %v4012 = vand.u32 %v4011, 4294901760
    %4013 = vmatpush.msra.mxu0 %v4012
    %v4014 = vand.u32 %v2412, 4294901760
    %v4015 = vsub.f32 %v2412, %v4014
    %v4016 = vand.u32 %v4015, 4294901760
    %4017 = vmatpush.msra.mxu0 %v4016
    %v4018 = vand.u32 %v2408, 4294901760
    %v4019 = vsub.f32 %v2408, %v4018
    %v4020 = vand.u32 %v4019, 4294901760
    %4021 = vmatpush.msra.mxu0 %v4020
    %v4022 = vand.u32 %v2404, 4294901760
    %v4023 = vsub.f32 %v2404, %v4022
    %v4024 = vand.u32 %v4023, 4294901760
    %4025 = vmatpush.msra.mxu0 %v4024
    %v4026 = vand.u32 %v2400, 4294901760
    %v4027 = vsub.f32 %v2400, %v4026
    %v4028 = vand.u32 %v4027, 4294901760
    %4029 = vmatpush.msra.mxu0 %v4028
    %v4030 = vand.u32 %v2396, 4294901760
    %v4031 = vsub.f32 %v2396, %v4030
    %v4032 = vand.u32 %v4031, 4294901760
    %4033 = vmatpush.msra.mxu0 %v4032
    %v4034 = vand.u32 %v2392, 4294901760
    %v4035 = vsub.f32 %v2392, %v4034
    %v4036 = vand.u32 %v4035, 4294901760
    %4037 = vmatpush.msra.mxu0 %v4036
    %v4038 = vand.u32 %v2388, 4294901760
    %v4039 = vsub.f32 %v2388, %v4038
    %v4040 = vand.u32 %v4039, 4294901760
    %4041 = vmatpush.msra.mxu0 %v4040
    %v4042 = vand.u32 %v2384, 4294901760
    %v4043 = vsub.f32 %v2384, %v4042
    %v4044 = vand.u32 %v4043, 4294901760
    %4045 = vmatpush.msra.mxu0 %v4044
    %v4046 = vand.u32 %v2380, 4294901760
    %v4047 = vsub.f32 %v2380, %v4046
    %v4048 = vand.u32 %v4047, 4294901760
    %4049 = vmatpush.msra.mxu0 %v4048
    %v4050 = vand.u32 %v2376, 4294901760
    %v4051 = vsub.f32 %v2376, %v4050
    %v4052 = vand.u32 %v4051, 4294901760
    %4053 = vmatpush.msra.mxu0 %v4052
    %v4054 = vand.u32 %v2372, 4294901760
    %v4055 = vsub.f32 %v2372, %v4054
    %v4056 = vand.u32 %v4055, 4294901760
    %4057 = vmatpush.msra.mxu0 %v4056
    %v4058 = vand.u32 %v2368, 4294901760
    %v4059 = vsub.f32 %v2368, %v4058
    %v4060 = vand.u32 %v4059, 4294901760
    %4061 = vmatpush.msra.mxu0 %v4060
    %v4062 = vand.u32 %v2364, 4294901760
    %v4063 = vsub.f32 %v2364, %v4062
    %v4064 = vand.u32 %v4063, 4294901760
    %4065 = vmatpush.msra.mxu0 %v4064
    %v4066 = vand.u32 %v3009, 4294901760
    %4067 = vmatmul.f32.gmra.mxu0 %v4066
    %v4068 = vpop.f32.mrf.mxu0
    %v4069 = vadd.f32 %v3958, %v4068
    %v4070 = vand.u32 %v3013, 4294901760
    %4071 = vmatmul.f32.gmra.mxu0 %v4070
    %v4072 = vpop.f32.mrf.mxu0
    %v4073 = vadd.f32 %v3964, %v4072
    %v4074 = vand.u32 %v3017, 4294901760
    %4075 = vmatmul.f32.gmra.mxu0 %v4074
    %v4076 = vpop.f32.mrf.mxu0
    %v4077 = vadd.f32 %v3970, %v4076
    %v4078 = vand.u32 %v3021, 4294901760
    %4079 = vmatmul.f32.gmra.mxu0 %v4078
    %v4080 = vpop.f32.mrf.mxu0
    %v4081 = vadd.f32 %v3976, %v4080
    %v4082 = vand.u32 %v3025, 4294901760
    %4083 = vmatmul.f32.gmra.mxu0 %v4082
    %v4084 = vpop.f32.mrf.mxu0
    %v4085 = vadd.f32 %v3982, %v4084
    %v4086 = vand.u32 %v3029, 4294901760
    %4087 = vmatmul.f32.gmra.mxu0 %v4086
    %v4088 = vpop.f32.mrf.mxu0
    %v4089 = vadd.f32 %v3988, %v4088
    %v4090 = vand.u32 %v3033, 4294901760
    %4091 = vmatmul.f32.gmra.mxu0 %v4090
    %v4092 = vpop.f32.mrf.mxu0
    %v4093 = vadd.f32 %v3994, %v4092
    %v4094 = vand.u32 %v3037, 4294901760
    %4095 = vmatmul.f32.gmra.mxu0 %v4094
    %v4096 = vpop.f32.mrf.mxu0
    %v4097 = vadd.f32 %v4000, %v4096
    %4098 = vdwg.mxu0
    %v4099 = vand.u32 %v2424, 4294901760
    %4100 = vmatpush.msra.mxu0 %v4099
    %v4101 = vand.u32 %v2420, 4294901760
    %4102 = vmatpush.msra.mxu0 %v4101
    %v4103 = vand.u32 %v2416, 4294901760
    %4104 = vmatpush.msra.mxu0 %v4103
    %v4105 = vand.u32 %v2412, 4294901760
    %4106 = vmatpush.msra.mxu0 %v4105
    %v4107 = vand.u32 %v2408, 4294901760
    %4108 = vmatpush.msra.mxu0 %v4107
    %v4109 = vand.u32 %v2404, 4294901760
    %4110 = vmatpush.msra.mxu0 %v4109
    %v4111 = vand.u32 %v2400, 4294901760
    %4112 = vmatpush.msra.mxu0 %v4111
    %v4113 = vand.u32 %v2396, 4294901760
    %4114 = vmatpush.msra.mxu0 %v4113
    %v4115 = vand.u32 %v2392, 4294901760
    %4116 = vmatpush.msra.mxu0 %v4115
    %v4117 = vand.u32 %v2388, 4294901760
    %4118 = vmatpush.msra.mxu0 %v4117
    %v4119 = vand.u32 %v2384, 4294901760
    %4120 = vmatpush.msra.mxu0 %v4119
    %v4121 = vand.u32 %v2380, 4294901760
    %4122 = vmatpush.msra.mxu0 %v4121
    %v4123 = vand.u32 %v2376, 4294901760
    %4124 = vmatpush.msra.mxu0 %v4123
    %v4125 = vand.u32 %v2372, 4294901760
    %4126 = vmatpush.msra.mxu0 %v4125
    %v4127 = vand.u32 %v2368, 4294901760
    %4128 = vmatpush.msra.mxu0 %v4127
    %v4129 = vand.u32 %v2364, 4294901760
    %4130 = vmatpush.msra.mxu0 %v4129
    %v4131 = vand.u32 %v3009, 4294901760
    %4132 = vmatmul.f32.gmra.mxu0 %v4131
    %v4133 = vpop.f32.mrf.mxu0
    %v4134 = vadd.f32 %v4069, %v4133
    %v4135 = vand.u32 %v3013, 4294901760
    %4136 = vmatmul.f32.gmra.mxu0 %v4135
    %v4137 = vpop.f32.mrf.mxu0
    %v4138 = vadd.f32 %v4073, %v4137
    %v4139 = vand.u32 %v3017, 4294901760
    %4140 = vmatmul.f32.gmra.mxu0 %v4139
    %v4141 = vpop.f32.mrf.mxu0
    %v4142 = vadd.f32 %v4077, %v4141
    %v4143 = vand.u32 %v3021, 4294901760
    %4144 = vmatmul.f32.gmra.mxu0 %v4143
    %v4145 = vpop.f32.mrf.mxu0
    %v4146 = vadd.f32 %v4081, %v4145
    %v4147 = vand.u32 %v3025, 4294901760
    %4148 = vmatmul.f32.gmra.mxu0 %v4147
    %v4149 = vpop.f32.mrf.mxu0
    %v4150 = vadd.f32 %v4085, %v4149
    %v4151 = vand.u32 %v3029, 4294901760
    %4152 = vmatmul.f32.gmra.mxu0 %v4151
    %v4153 = vpop.f32.mrf.mxu0
    %v4154 = vadd.f32 %v4089, %v4153
    %v4155 = vand.u32 %v3033, 4294901760
    %4156 = vmatmul.f32.gmra.mxu0 %v4155
    %v4157 = vpop.f32.mrf.mxu0
    %v4158 = vadd.f32 %v4093, %v4157
    %v4159 = vand.u32 %v3037, 4294901760
    %4160 = vmatmul.f32.gmra.mxu0 %v4159
    %v4161 = vpop.f32.mrf.mxu0
    %v4162 = vadd.f32 %v4097, %v4161
    %4163 = vdwg.mxu0
    %v4164 = vand.u32 %v2488, 4294901760
    %4165 = vmatpush.msra.mxu0 %v4164
    %v4166 = vand.u32 %v2484, 4294901760
    %4167 = vmatpush.msra.mxu0 %v4166
    %v4168 = vand.u32 %v2480, 4294901760
    %4169 = vmatpush.msra.mxu0 %v4168
    %v4170 = vand.u32 %v2476, 4294901760
    %4171 = vmatpush.msra.mxu0 %v4170
    %v4172 = vand.u32 %v2472, 4294901760
    %4173 = vmatpush.msra.mxu0 %v4172
    %v4174 = vand.u32 %v2468, 4294901760
    %4175 = vmatpush.msra.mxu0 %v4174
    %v4176 = vand.u32 %v2464, 4294901760
    %4177 = vmatpush.msra.mxu0 %v4176
    %v4178 = vand.u32 %v2460, 4294901760
    %4179 = vmatpush.msra.mxu0 %v4178
    %v4180 = vand.u32 %v2456, 4294901760
    %4181 = vmatpush.msra.mxu0 %v4180
    %v4182 = vand.u32 %v2452, 4294901760
    %4183 = vmatpush.msra.mxu0 %v4182
    %v4184 = vand.u32 %v2448, 4294901760
    %4185 = vmatpush.msra.mxu0 %v4184
    %v4186 = vand.u32 %v2444, 4294901760
    %4187 = vmatpush.msra.mxu0 %v4186
    %v4188 = vand.u32 %v2440, 4294901760
    %4189 = vmatpush.msra.mxu0 %v4188
    %v4190 = vand.u32 %v2436, 4294901760
    %4191 = vmatpush.msra.mxu0 %v4190
    %v4192 = vand.u32 %v2432, 4294901760
    %4193 = vmatpush.msra.mxu0 %v4192
    %v4194 = vand.u32 %v2428, 4294901760
    %4195 = vmatpush.msra.mxu0 %v4194
    %v4196 = vand.u32 %v3010, 4294901760
    %v4197 = vsub.f32 %v3010, %v4196
    %v4198 = vand.u32 %v4197, 4294901760
    %v4199 = vsub.f32 %v4197, %v4198
    %v4200 = vand.u32 %v4199, 4294901760
    %4201 = vmatmul.f32.gmra.mxu0 %v4200
    %v4202 = vpop.f32.mrf.mxu0
    %v4203 = vadd.f32 %v4134, %v4202
    %v4204 = vand.u32 %v3014, 4294901760
    %v4205 = vsub.f32 %v3014, %v4204
    %v4206 = vand.u32 %v4205, 4294901760
    %v4207 = vsub.f32 %v4205, %v4206
    %v4208 = vand.u32 %v4207, 4294901760
    %4209 = vmatmul.f32.gmra.mxu0 %v4208
    %v4210 = vpop.f32.mrf.mxu0
    %v4211 = vadd.f32 %v4138, %v4210
    %v4212 = vand.u32 %v3018, 4294901760
    %v4213 = vsub.f32 %v3018, %v4212
    %v4214 = vand.u32 %v4213, 4294901760
    %v4215 = vsub.f32 %v4213, %v4214
    %v4216 = vand.u32 %v4215, 4294901760
    %4217 = vmatmul.f32.gmra.mxu0 %v4216
    %v4218 = vpop.f32.mrf.mxu0
    %v4219 = vadd.f32 %v4142, %v4218
    %v4220 = vand.u32 %v3022, 4294901760
    %v4221 = vsub.f32 %v3022, %v4220
    %v4222 = vand.u32 %v4221, 4294901760
    %v4223 = vsub.f32 %v4221, %v4222
    %v4224 = vand.u32 %v4223, 4294901760
    %4225 = vmatmul.f32.gmra.mxu0 %v4224
    %v4226 = vpop.f32.mrf.mxu0
    %v4227 = vadd.f32 %v4146, %v4226
    %v4228 = vand.u32 %v3026, 4294901760
    %v4229 = vsub.f32 %v3026, %v4228
    %v4230 = vand.u32 %v4229, 4294901760
    %v4231 = vsub.f32 %v4229, %v4230
    %v4232 = vand.u32 %v4231, 4294901760
    %4233 = vmatmul.f32.gmra.mxu0 %v4232
    %v4234 = vpop.f32.mrf.mxu0
    %v4235 = vadd.f32 %v4150, %v4234
    %v4236 = vand.u32 %v3030, 4294901760
    %v4237 = vsub.f32 %v3030, %v4236
    %v4238 = vand.u32 %v4237, 4294901760
    %v4239 = vsub.f32 %v4237, %v4238
    %v4240 = vand.u32 %v4239, 4294901760
    %4241 = vmatmul.f32.gmra.mxu0 %v4240
    %v4242 = vpop.f32.mrf.mxu0
    %v4243 = vadd.f32 %v4154, %v4242
    %v4244 = vand.u32 %v3034, 4294901760
    %v4245 = vsub.f32 %v3034, %v4244
    %v4246 = vand.u32 %v4245, 4294901760
    %v4247 = vsub.f32 %v4245, %v4246
    %v4248 = vand.u32 %v4247, 4294901760
    %4249 = vmatmul.f32.gmra.mxu0 %v4248
    %v4250 = vpop.f32.mrf.mxu0
    %v4251 = vadd.f32 %v4158, %v4250
    %v4252 = vand.u32 %v3038, 4294901760
    %v4253 = vsub.f32 %v3038, %v4252
    %v4254 = vand.u32 %v4253, 4294901760
    %v4255 = vsub.f32 %v4253, %v4254
    %v4256 = vand.u32 %v4255, 4294901760
    %4257 = vmatmul.f32.gmra.mxu0 %v4256
    %v4258 = vpop.f32.mrf.mxu0
    %v4259 = vadd.f32 %v4162, %v4258
    %4260 = vdwg.mxu0
    %v4261 = vand.u32 %v2488, 4294901760
    %v4262 = vsub.f32 %v2488, %v4261
    %v4263 = vand.u32 %v4262, 4294901760
    %v4264 = vsub.f32 %v4262, %v4263
    %v4265 = vand.u32 %v4264, 4294901760
    %4266 = vmatpush.msra.mxu0 %v4265
    %v4267 = vand.u32 %v2484, 4294901760
    %v4268 = vsub.f32 %v2484, %v4267
    %v4269 = vand.u32 %v4268, 4294901760
    %v4270 = vsub.f32 %v4268, %v4269
    %v4271 = vand.u32 %v4270, 4294901760
    %4272 = vmatpush.msra.mxu0 %v4271
    %v4273 = vand.u32 %v2480, 4294901760
    %v4274 = vsub.f32 %v2480, %v4273
    %v4275 = vand.u32 %v4274, 4294901760
    %v4276 = vsub.f32 %v4274, %v4275
    %v4277 = vand.u32 %v4276, 4294901760
    %4278 = vmatpush.msra.mxu0 %v4277
    %v4279 = vand.u32 %v2476, 4294901760
    %v4280 = vsub.f32 %v2476, %v4279
    %v4281 = vand.u32 %v4280, 4294901760
    %v4282 = vsub.f32 %v4280, %v4281
    %v4283 = vand.u32 %v4282, 4294901760
    %4284 = vmatpush.msra.mxu0 %v4283
    %v4285 = vand.u32 %v2472, 4294901760
    %v4286 = vsub.f32 %v2472, %v4285
    %v4287 = vand.u32 %v4286, 4294901760
    %v4288 = vsub.f32 %v4286, %v4287
    %v4289 = vand.u32 %v4288, 4294901760
    %4290 = vmatpush.msra.mxu0 %v4289
    %v4291 = vand.u32 %v2468, 4294901760
    %v4292 = vsub.f32 %v2468, %v4291
    %v4293 = vand.u32 %v4292, 4294901760
    %v4294 = vsub.f32 %v4292, %v4293
    %v4295 = vand.u32 %v4294, 4294901760
    %4296 = vmatpush.msra.mxu0 %v4295
    %v4297 = vand.u32 %v2464, 4294901760
    %v4298 = vsub.f32 %v2464, %v4297
    %v4299 = vand.u32 %v4298, 4294901760
    %v4300 = vsub.f32 %v4298, %v4299
    %v4301 = vand.u32 %v4300, 4294901760
    %4302 = vmatpush.msra.mxu0 %v4301
    %v4303 = vand.u32 %v2460, 4294901760
    %v4304 = vsub.f32 %v2460, %v4303
    %v4305 = vand.u32 %v4304, 4294901760
    %v4306 = vsub.f32 %v4304, %v4305
    %v4307 = vand.u32 %v4306, 4294901760
    %4308 = vmatpush.msra.mxu0 %v4307
    %v4309 = vand.u32 %v2456, 4294901760
    %v4310 = vsub.f32 %v2456, %v4309
    %v4311 = vand.u32 %v4310, 4294901760
    %v4312 = vsub.f32 %v4310, %v4311
    %v4313 = vand.u32 %v4312, 4294901760
    %4314 = vmatpush.msra.mxu0 %v4313
    %v4315 = vand.u32 %v2452, 4294901760
    %v4316 = vsub.f32 %v2452, %v4315
    %v4317 = vand.u32 %v4316, 4294901760
    %v4318 = vsub.f32 %v4316, %v4317
    %v4319 = vand.u32 %v4318, 4294901760
    %4320 = vmatpush.msra.mxu0 %v4319
    %v4321 = vand.u32 %v2448, 4294901760
    %v4322 = vsub.f32 %v2448, %v4321
    %v4323 = vand.u32 %v4322, 4294901760
    %v4324 = vsub.f32 %v4322, %v4323
    %v4325 = vand.u32 %v4324, 4294901760
    %4326 = vmatpush.msra.mxu0 %v4325
    %v4327 = vand.u32 %v2444, 4294901760
    %v4328 = vsub.f32 %v2444, %v4327
    %v4329 = vand.u32 %v4328, 4294901760
    %v4330 = vsub.f32 %v4328, %v4329
    %v4331 = vand.u32 %v4330, 4294901760
    %4332 = vmatpush.msra.mxu0 %v4331
    %v4333 = vand.u32 %v2440, 4294901760
    %v4334 = vsub.f32 %v2440, %v4333
    %v4335 = vand.u32 %v4334, 4294901760
    %v4336 = vsub.f32 %v4334, %v4335
    %v4337 = vand.u32 %v4336, 4294901760
    %4338 = vmatpush.msra.mxu0 %v4337
    %v4339 = vand.u32 %v2436, 4294901760
    %v4340 = vsub.f32 %v2436, %v4339
    %v4341 = vand.u32 %v4340, 4294901760
    %v4342 = vsub.f32 %v4340, %v4341
    %v4343 = vand.u32 %v4342, 4294901760
    %4344 = vmatpush.msra.mxu0 %v4343
    %v4345 = vand.u32 %v2432, 4294901760
    %v4346 = vsub.f32 %v2432, %v4345
    %v4347 = vand.u32 %v4346, 4294901760
    %v4348 = vsub.f32 %v4346, %v4347
    %v4349 = vand.u32 %v4348, 4294901760
    %4350 = vmatpush.msra.mxu0 %v4349
    %v4351 = vand.u32 %v2428, 4294901760
    %v4352 = vsub.f32 %v2428, %v4351
    %v4353 = vand.u32 %v4352, 4294901760
    %v4354 = vsub.f32 %v4352, %v4353
    %v4355 = vand.u32 %v4354, 4294901760
    %4356 = vmatpush.msra.mxu0 %v4355
    %v4357 = vand.u32 %v3010, 4294901760
    %4358 = vmatmul.f32.gmra.mxu0 %v4357
    %v4359 = vpop.f32.mrf.mxu0
    %v4360 = vadd.f32 %v4203, %v4359
    %v4361 = vand.u32 %v3014, 4294901760
    %4362 = vmatmul.f32.gmra.mxu0 %v4361
    %v4363 = vpop.f32.mrf.mxu0
    %v4364 = vadd.f32 %v4211, %v4363
    %v4365 = vand.u32 %v3018, 4294901760
    %4366 = vmatmul.f32.gmra.mxu0 %v4365
    %v4367 = vpop.f32.mrf.mxu0
    %v4368 = vadd.f32 %v4219, %v4367
    %v4369 = vand.u32 %v3022, 4294901760
    %4370 = vmatmul.f32.gmra.mxu0 %v4369
    %v4371 = vpop.f32.mrf.mxu0
    %v4372 = vadd.f32 %v4227, %v4371
    %v4373 = vand.u32 %v3026, 4294901760
    %4374 = vmatmul.f32.gmra.mxu0 %v4373
    %v4375 = vpop.f32.mrf.mxu0
    %v4376 = vadd.f32 %v4235, %v4375
    %v4377 = vand.u32 %v3030, 4294901760
    %4378 = vmatmul.f32.gmra.mxu0 %v4377
    %v4379 = vpop.f32.mrf.mxu0
    %v4380 = vadd.f32 %v4243, %v4379
    %v4381 = vand.u32 %v3034, 4294901760
    %4382 = vmatmul.f32.gmra.mxu0 %v4381
    %v4383 = vpop.f32.mrf.mxu0
    %v4384 = vadd.f32 %v4251, %v4383
    %v4385 = vand.u32 %v3038, 4294901760
    %4386 = vmatmul.f32.gmra.mxu0 %v4385
    %v4387 = vpop.f32.mrf.mxu0
    %v4388 = vadd.f32 %v4259, %v4387
    %4389 = vdwg.mxu0
    %v4390 = vand.u32 %v2488, 4294901760
    %v4391 = vsub.f32 %v2488, %v4390
    %4392 = vmatpush.msra.mxu0 %v4391
    %v4393 = vand.u32 %v2484, 4294901760
    %v4394 = vsub.f32 %v2484, %v4393
    %4395 = vmatpush.msra.mxu0 %v4394
    %v4396 = vand.u32 %v2480, 4294901760
    %v4397 = vsub.f32 %v2480, %v4396
    %4398 = vmatpush.msra.mxu0 %v4397
    %v4399 = vand.u32 %v2476, 4294901760
    %v4400 = vsub.f32 %v2476, %v4399
    %4401 = vmatpush.msra.mxu0 %v4400
    %v4402 = vand.u32 %v2472, 4294901760
    %v4403 = vsub.f32 %v2472, %v4402
    %4404 = vmatpush.msra.mxu0 %v4403
    %v4405 = vand.u32 %v2468, 4294901760
    %v4406 = vsub.f32 %v2468, %v4405
    %4407 = vmatpush.msra.mxu0 %v4406
    %v4408 = vand.u32 %v2464, 4294901760
    %v4409 = vsub.f32 %v2464, %v4408
    %4410 = vmatpush.msra.mxu0 %v4409
    %v4411 = vand.u32 %v2460, 4294901760
    %v4412 = vsub.f32 %v2460, %v4411
    %4413 = vmatpush.msra.mxu0 %v4412
    %v4414 = vand.u32 %v2456, 4294901760
    %v4415 = vsub.f32 %v2456, %v4414
    %4416 = vmatpush.msra.mxu0 %v4415
    %v4417 = vand.u32 %v2452, 4294901760
    %v4418 = vsub.f32 %v2452, %v4417
    %4419 = vmatpush.msra.mxu0 %v4418
    %v4420 = vand.u32 %v2448, 4294901760
    %v4421 = vsub.f32 %v2448, %v4420
    %4422 = vmatpush.msra.mxu0 %v4421
    %v4423 = vand.u32 %v2444, 4294901760
    %v4424 = vsub.f32 %v2444, %v4423
    %4425 = vmatpush.msra.mxu0 %v4424
    %v4426 = vand.u32 %v2440, 4294901760
    %v4427 = vsub.f32 %v2440, %v4426
    %4428 = vmatpush.msra.mxu0 %v4427
    %v4429 = vand.u32 %v2436, 4294901760
    %v4430 = vsub.f32 %v2436, %v4429
    %4431 = vmatpush.msra.mxu0 %v4430
    %v4432 = vand.u32 %v2432, 4294901760
    %v4433 = vsub.f32 %v2432, %v4432
    %4434 = vmatpush.msra.mxu0 %v4433
    %v4435 = vand.u32 %v2428, 4294901760
    %v4436 = vsub.f32 %v2428, %v4435
    %4437 = vmatpush.msra.mxu0 %v4436
    %v4438 = vand.u32 %v3010, 4294901760
    %v4439 = vsub.f32 %v3010, %v4438
    %4440 = vmatmul.f32.gmra.mxu0 %v4439
    %v4441 = vpop.f32.mrf.mxu0
    %v4442 = vadd.f32 %v4360, %v4441
    %v4443 = vand.u32 %v3014, 4294901760
    %v4444 = vsub.f32 %v3014, %v4443
    %4445 = vmatmul.f32.gmra.mxu0 %v4444
    %v4446 = vpop.f32.mrf.mxu0
    %v4447 = vadd.f32 %v4364, %v4446
    %v4448 = vand.u32 %v3018, 4294901760
    %v4449 = vsub.f32 %v3018, %v4448
    %4450 = vmatmul.f32.gmra.mxu0 %v4449
    %v4451 = vpop.f32.mrf.mxu0
    %v4452 = vadd.f32 %v4368, %v4451
    %v4453 = vand.u32 %v3022, 4294901760
    %v4454 = vsub.f32 %v3022, %v4453
    %4455 = vmatmul.f32.gmra.mxu0 %v4454
    %v4456 = vpop.f32.mrf.mxu0
    %v4457 = vadd.f32 %v4372, %v4456
    %v4458 = vand.u32 %v3026, 4294901760
    %v4459 = vsub.f32 %v3026, %v4458
    %4460 = vmatmul.f32.gmra.mxu0 %v4459
    %v4461 = vpop.f32.mrf.mxu0
    %v4462 = vadd.f32 %v4376, %v4461
    %v4463 = vand.u32 %v3030, 4294901760
    %v4464 = vsub.f32 %v3030, %v4463
    %4465 = vmatmul.f32.gmra.mxu0 %v4464
    %v4466 = vpop.f32.mrf.mxu0
    %v4467 = vadd.f32 %v4380, %v4466
    %v4468 = vand.u32 %v3034, 4294901760
    %v4469 = vsub.f32 %v3034, %v4468
    %4470 = vmatmul.f32.gmra.mxu0 %v4469
    %v4471 = vpop.f32.mrf.mxu0
    %v4472 = vadd.f32 %v4384, %v4471
    %v4473 = vand.u32 %v3038, 4294901760
    %v4474 = vsub.f32 %v3038, %v4473
    %4475 = vmatmul.f32.gmra.mxu0 %v4474
    %v4476 = vpop.f32.mrf.mxu0
    %v4477 = vadd.f32 %v4388, %v4476
    %4478 = vdwg.mxu0
    %v4479 = vand.u32 %v2488, 4294901760
    %4480 = vmatpush.msra.mxu0 %v4479
    %v4481 = vand.u32 %v2484, 4294901760
    %4482 = vmatpush.msra.mxu0 %v4481
    %v4483 = vand.u32 %v2480, 4294901760
    %4484 = vmatpush.msra.mxu0 %v4483
    %v4485 = vand.u32 %v2476, 4294901760
    %4486 = vmatpush.msra.mxu0 %v4485
    %v4487 = vand.u32 %v2472, 4294901760
    %4488 = vmatpush.msra.mxu0 %v4487
    %v4489 = vand.u32 %v2468, 4294901760
    %4490 = vmatpush.msra.mxu0 %v4489
    %v4491 = vand.u32 %v2464, 4294901760
    %4492 = vmatpush.msra.mxu0 %v4491
    %v4493 = vand.u32 %v2460, 4294901760
    %4494 = vmatpush.msra.mxu0 %v4493
    %v4495 = vand.u32 %v2456, 4294901760
    %4496 = vmatpush.msra.mxu0 %v4495
    %v4497 = vand.u32 %v2452, 4294901760
    %4498 = vmatpush.msra.mxu0 %v4497
    %v4499 = vand.u32 %v2448, 4294901760
    %4500 = vmatpush.msra.mxu0 %v4499
    %v4501 = vand.u32 %v2444, 4294901760
    %4502 = vmatpush.msra.mxu0 %v4501
    %v4503 = vand.u32 %v2440, 4294901760
    %4504 = vmatpush.msra.mxu0 %v4503
    %v4505 = vand.u32 %v2436, 4294901760
    %4506 = vmatpush.msra.mxu0 %v4505
    %v4507 = vand.u32 %v2432, 4294901760
    %4508 = vmatpush.msra.mxu0 %v4507
    %v4509 = vand.u32 %v2428, 4294901760
    %4510 = vmatpush.msra.mxu0 %v4509
    %v4511 = vand.u32 %v3010, 4294901760
    %v4512 = vsub.f32 %v3010, %v4511
    %v4513 = vand.u32 %v4512, 4294901760
    %4514 = vmatmul.f32.gmra.mxu0 %v4513
    %v4515 = vpop.f32.mrf.mxu0
    %v4516 = vadd.f32 %v4442, %v4515
    %v4517 = vand.u32 %v3014, 4294901760
    %v4518 = vsub.f32 %v3014, %v4517
    %v4519 = vand.u32 %v4518, 4294901760
    %4520 = vmatmul.f32.gmra.mxu0 %v4519
    %v4521 = vpop.f32.mrf.mxu0
    %v4522 = vadd.f32 %v4447, %v4521
    %v4523 = vand.u32 %v3018, 4294901760
    %v4524 = vsub.f32 %v3018, %v4523
    %v4525 = vand.u32 %v4524, 4294901760
    %4526 = vmatmul.f32.gmra.mxu0 %v4525
    %v4527 = vpop.f32.mrf.mxu0
    %v4528 = vadd.f32 %v4452, %v4527
    %v4529 = vand.u32 %v3022, 4294901760
    %v4530 = vsub.f32 %v3022, %v4529
    %v4531 = vand.u32 %v4530, 4294901760
    %4532 = vmatmul.f32.gmra.mxu0 %v4531
    %v4533 = vpop.f32.mrf.mxu0
    %v4534 = vadd.f32 %v4457, %v4533
    %v4535 = vand.u32 %v3026, 4294901760
    %v4536 = vsub.f32 %v3026, %v4535
    %v4537 = vand.u32 %v4536, 4294901760
    %4538 = vmatmul.f32.gmra.mxu0 %v4537
    %v4539 = vpop.f32.mrf.mxu0
    %v4540 = vadd.f32 %v4462, %v4539
    %v4541 = vand.u32 %v3030, 4294901760
    %v4542 = vsub.f32 %v3030, %v4541
    %v4543 = vand.u32 %v4542, 4294901760
    %4544 = vmatmul.f32.gmra.mxu0 %v4543
    %v4545 = vpop.f32.mrf.mxu0
    %v4546 = vadd.f32 %v4467, %v4545
    %v4547 = vand.u32 %v3034, 4294901760
    %v4548 = vsub.f32 %v3034, %v4547
    %v4549 = vand.u32 %v4548, 4294901760
    %4550 = vmatmul.f32.gmra.mxu0 %v4549
    %v4551 = vpop.f32.mrf.mxu0
    %v4552 = vadd.f32 %v4472, %v4551
    %v4553 = vand.u32 %v3038, 4294901760
    %v4554 = vsub.f32 %v3038, %v4553
    %v4555 = vand.u32 %v4554, 4294901760
    %4556 = vmatmul.f32.gmra.mxu0 %v4555
    %v4557 = vpop.f32.mrf.mxu0
    %v4558 = vadd.f32 %v4477, %v4557
    %4559 = vdwg.mxu0
    %v4560 = vand.u32 %v2488, 4294901760
    %v4561 = vsub.f32 %v2488, %v4560
    %v4562 = vand.u32 %v4561, 4294901760
    %4563 = vmatpush.msra.mxu0 %v4562
    %v4564 = vand.u32 %v2484, 4294901760
    %v4565 = vsub.f32 %v2484, %v4564
    %v4566 = vand.u32 %v4565, 4294901760
    %4567 = vmatpush.msra.mxu0 %v4566
    %v4568 = vand.u32 %v2480, 4294901760
    %v4569 = vsub.f32 %v2480, %v4568
    %v4570 = vand.u32 %v4569, 4294901760
    %4571 = vmatpush.msra.mxu0 %v4570
    %v4572 = vand.u32 %v2476, 4294901760
    %v4573 = vsub.f32 %v2476, %v4572
    %v4574 = vand.u32 %v4573, 4294901760
    %4575 = vmatpush.msra.mxu0 %v4574
    %v4576 = vand.u32 %v2472, 4294901760
    %v4577 = vsub.f32 %v2472, %v4576
    %v4578 = vand.u32 %v4577, 4294901760
    %4579 = vmatpush.msra.mxu0 %v4578
    %v4580 = vand.u32 %v2468, 4294901760
    %v4581 = vsub.f32 %v2468, %v4580
    %v4582 = vand.u32 %v4581, 4294901760
    %4583 = vmatpush.msra.mxu0 %v4582
    %v4584 = vand.u32 %v2464, 4294901760
    %v4585 = vsub.f32 %v2464, %v4584
    %v4586 = vand.u32 %v4585, 4294901760
    %4587 = vmatpush.msra.mxu0 %v4586
    %v4588 = vand.u32 %v2460, 4294901760
    %v4589 = vsub.f32 %v2460, %v4588
    %v4590 = vand.u32 %v4589, 4294901760
    %4591 = vmatpush.msra.mxu0 %v4590
    %v4592 = vand.u32 %v2456, 4294901760
    %v4593 = vsub.f32 %v2456, %v4592
    %v4594 = vand.u32 %v4593, 4294901760
    %4595 = vmatpush.msra.mxu0 %v4594
    %v4596 = vand.u32 %v2452, 4294901760
    %v4597 = vsub.f32 %v2452, %v4596
    %v4598 = vand.u32 %v4597, 4294901760
    %4599 = vmatpush.msra.mxu0 %v4598
    %v4600 = vand.u32 %v2448, 4294901760
    %v4601 = vsub.f32 %v2448, %v4600
    %v4602 = vand.u32 %v4601, 4294901760
    %4603 = vmatpush.msra.mxu0 %v4602
    %v4604 = vand.u32 %v2444, 4294901760
    %v4605 = vsub.f32 %v2444, %v4604
    %v4606 = vand.u32 %v4605, 4294901760
    %4607 = vmatpush.msra.mxu0 %v4606
    %v4608 = vand.u32 %v2440, 4294901760
    %v4609 = vsub.f32 %v2440, %v4608
    %v4610 = vand.u32 %v4609, 4294901760
    %4611 = vmatpush.msra.mxu0 %v4610
    %v4612 = vand.u32 %v2436, 4294901760
    %v4613 = vsub.f32 %v2436, %v4612
    %v4614 = vand.u32 %v4613, 4294901760
    %4615 = vmatpush.msra.mxu0 %v4614
    %v4616 = vand.u32 %v2432, 4294901760
    %v4617 = vsub.f32 %v2432, %v4616
    %v4618 = vand.u32 %v4617, 4294901760
    %4619 = vmatpush.msra.mxu0 %v4618
    %v4620 = vand.u32 %v2428, 4294901760
    %v4621 = vsub.f32 %v2428, %v4620
    %v4622 = vand.u32 %v4621, 4294901760
    %4623 = vmatpush.msra.mxu0 %v4622
    %v4624 = vand.u32 %v3010, 4294901760
    %4625 = vmatmul.f32.gmra.mxu0 %v4624
    %v4626 = vpop.f32.mrf.mxu0
    %v4627 = vadd.f32 %v4516, %v4626
    %v4628 = vand.u32 %v3014, 4294901760
    %4629 = vmatmul.f32.gmra.mxu0 %v4628
    %v4630 = vpop.f32.mrf.mxu0
    %v4631 = vadd.f32 %v4522, %v4630
    %v4632 = vand.u32 %v3018, 4294901760
    %4633 = vmatmul.f32.gmra.mxu0 %v4632
    %v4634 = vpop.f32.mrf.mxu0
    %v4635 = vadd.f32 %v4528, %v4634
    %v4636 = vand.u32 %v3022, 4294901760
    %4637 = vmatmul.f32.gmra.mxu0 %v4636
    %v4638 = vpop.f32.mrf.mxu0
    %v4639 = vadd.f32 %v4534, %v4638
    %v4640 = vand.u32 %v3026, 4294901760
    %4641 = vmatmul.f32.gmra.mxu0 %v4640
    %v4642 = vpop.f32.mrf.mxu0
    %v4643 = vadd.f32 %v4540, %v4642
    %v4644 = vand.u32 %v3030, 4294901760
    %4645 = vmatmul.f32.gmra.mxu0 %v4644
    %v4646 = vpop.f32.mrf.mxu0
    %v4647 = vadd.f32 %v4546, %v4646
    %v4648 = vand.u32 %v3034, 4294901760
    %4649 = vmatmul.f32.gmra.mxu0 %v4648
    %v4650 = vpop.f32.mrf.mxu0
    %v4651 = vadd.f32 %v4552, %v4650
    %v4652 = vand.u32 %v3038, 4294901760
    %4653 = vmatmul.f32.gmra.mxu0 %v4652
    %v4654 = vpop.f32.mrf.mxu0
    %v4655 = vadd.f32 %v4558, %v4654
    %4656 = vdwg.mxu0
    %v4657 = vand.u32 %v2488, 4294901760
    %4658 = vmatpush.msra.mxu0 %v4657
    %v4659 = vand.u32 %v2484, 4294901760
    %4660 = vmatpush.msra.mxu0 %v4659
    %v4661 = vand.u32 %v2480, 4294901760
    %4662 = vmatpush.msra.mxu0 %v4661
    %v4663 = vand.u32 %v2476, 4294901760
    %4664 = vmatpush.msra.mxu0 %v4663
    %v4665 = vand.u32 %v2472, 4294901760
    %4666 = vmatpush.msra.mxu0 %v4665
    %v4667 = vand.u32 %v2468, 4294901760
    %4668 = vmatpush.msra.mxu0 %v4667
    %v4669 = vand.u32 %v2464, 4294901760
    %4670 = vmatpush.msra.mxu0 %v4669
    %v4671 = vand.u32 %v2460, 4294901760
    %4672 = vmatpush.msra.mxu0 %v4671
    %v4673 = vand.u32 %v2456, 4294901760
    %4674 = vmatpush.msra.mxu0 %v4673
    %v4675 = vand.u32 %v2452, 4294901760
    %4676 = vmatpush.msra.mxu0 %v4675
    %v4677 = vand.u32 %v2448, 4294901760
    %4678 = vmatpush.msra.mxu0 %v4677
    %v4679 = vand.u32 %v2444, 4294901760
    %4680 = vmatpush.msra.mxu0 %v4679
    %v4681 = vand.u32 %v2440, 4294901760
    %4682 = vmatpush.msra.mxu0 %v4681
    %v4683 = vand.u32 %v2436, 4294901760
    %4684 = vmatpush.msra.mxu0 %v4683
    %v4685 = vand.u32 %v2432, 4294901760
    %4686 = vmatpush.msra.mxu0 %v4685
    %v4687 = vand.u32 %v2428, 4294901760
    %4688 = vmatpush.msra.mxu0 %v4687
    %v4689 = vand.u32 %v3010, 4294901760
    %4690 = vmatmul.f32.gmra.mxu0 %v4689
    %v4691 = vpop.f32.mrf.mxu0
    %v4692 = vadd.f32 %v4627, %v4691
    %v4693 = vand.u32 %v3014, 4294901760
    %4694 = vmatmul.f32.gmra.mxu0 %v4693
    %v4695 = vpop.f32.mrf.mxu0
    %v4696 = vadd.f32 %v4631, %v4695
    %v4697 = vand.u32 %v3018, 4294901760
    %4698 = vmatmul.f32.gmra.mxu0 %v4697
    %v4699 = vpop.f32.mrf.mxu0
    %v4700 = vadd.f32 %v4635, %v4699
    %v4701 = vand.u32 %v3022, 4294901760
    %4702 = vmatmul.f32.gmra.mxu0 %v4701
    %v4703 = vpop.f32.mrf.mxu0
    %v4704 = vadd.f32 %v4639, %v4703
    %v4705 = vand.u32 %v3026, 4294901760
    %4706 = vmatmul.f32.gmra.mxu0 %v4705
    %v4707 = vpop.f32.mrf.mxu0
    %v4708 = vadd.f32 %v4643, %v4707
    %v4709 = vand.u32 %v3030, 4294901760
    %4710 = vmatmul.f32.gmra.mxu0 %v4709
    %v4711 = vpop.f32.mrf.mxu0
    %v4712 = vadd.f32 %v4647, %v4711
    %v4713 = vand.u32 %v3034, 4294901760
    %4714 = vmatmul.f32.gmra.mxu0 %v4713
    %v4715 = vpop.f32.mrf.mxu0
    %v4716 = vadd.f32 %v4651, %v4715
    %v4717 = vand.u32 %v3038, 4294901760
    %4718 = vmatmul.f32.gmra.mxu0 %v4717
    %v4719 = vpop.f32.mrf.mxu0
    %v4720 = vadd.f32 %v4655, %v4719
    %4721 = vdwg.mxu0
    %v4722 = vand.u32 %v2552, 4294901760
    %4723 = vmatpush.msra.mxu0 %v4722
    %v4724 = vand.u32 %v2548, 4294901760
    %4725 = vmatpush.msra.mxu0 %v4724
    %v4726 = vand.u32 %v2544, 4294901760
    %4727 = vmatpush.msra.mxu0 %v4726
    %v4728 = vand.u32 %v2540, 4294901760
    %4729 = vmatpush.msra.mxu0 %v4728
    %v4730 = vand.u32 %v2536, 4294901760
    %4731 = vmatpush.msra.mxu0 %v4730
    %v4732 = vand.u32 %v2532, 4294901760
    %4733 = vmatpush.msra.mxu0 %v4732
    %v4734 = vand.u32 %v2528, 4294901760
    %4735 = vmatpush.msra.mxu0 %v4734
    %v4736 = vand.u32 %v2524, 4294901760
    %4737 = vmatpush.msra.mxu0 %v4736
    %v4738 = vand.u32 %v2520, 4294901760
    %4739 = vmatpush.msra.mxu0 %v4738
    %v4740 = vand.u32 %v2516, 4294901760
    %4741 = vmatpush.msra.mxu0 %v4740
    %v4742 = vand.u32 %v2512, 4294901760
    %4743 = vmatpush.msra.mxu0 %v4742
    %v4744 = vand.u32 %v2508, 4294901760
    %4745 = vmatpush.msra.mxu0 %v4744
    %v4746 = vand.u32 %v2504, 4294901760
    %4747 = vmatpush.msra.mxu0 %v4746
    %v4748 = vand.u32 %v2500, 4294901760
    %4749 = vmatpush.msra.mxu0 %v4748
    %v4750 = vand.u32 %v2496, 4294901760
    %4751 = vmatpush.msra.mxu0 %v4750
    %v4752 = vand.u32 %v2492, 4294901760
    %4753 = vmatpush.msra.mxu0 %v4752
    %v4754 = vand.u32 %v3011, 4294901760
    %v4755 = vsub.f32 %v3011, %v4754
    %v4756 = vand.u32 %v4755, 4294901760
    %v4757 = vsub.f32 %v4755, %v4756
    %v4758 = vand.u32 %v4757, 4294901760
    %4759 = vmatmul.f32.gmra.mxu0 %v4758
    %v4760 = vpop.f32.mrf.mxu0
    %v4761 = vadd.f32 %v4692, %v4760
    %v4762 = vand.u32 %v3015, 4294901760
    %v4763 = vsub.f32 %v3015, %v4762
    %v4764 = vand.u32 %v4763, 4294901760
    %v4765 = vsub.f32 %v4763, %v4764
    %v4766 = vand.u32 %v4765, 4294901760
    %4767 = vmatmul.f32.gmra.mxu0 %v4766
    %v4768 = vpop.f32.mrf.mxu0
    %v4769 = vadd.f32 %v4696, %v4768
    %v4770 = vand.u32 %v3019, 4294901760
    %v4771 = vsub.f32 %v3019, %v4770
    %v4772 = vand.u32 %v4771, 4294901760
    %v4773 = vsub.f32 %v4771, %v4772
    %v4774 = vand.u32 %v4773, 4294901760
    %4775 = vmatmul.f32.gmra.mxu0 %v4774
    %v4776 = vpop.f32.mrf.mxu0
    %v4777 = vadd.f32 %v4700, %v4776
    %v4778 = vand.u32 %v3023, 4294901760
    %v4779 = vsub.f32 %v3023, %v4778
    %v4780 = vand.u32 %v4779, 4294901760
    %v4781 = vsub.f32 %v4779, %v4780
    %v4782 = vand.u32 %v4781, 4294901760
    %4783 = vmatmul.f32.gmra.mxu0 %v4782
    %v4784 = vpop.f32.mrf.mxu0
    %v4785 = vadd.f32 %v4704, %v4784
    %v4786 = vand.u32 %v3027, 4294901760
    %v4787 = vsub.f32 %v3027, %v4786
    %v4788 = vand.u32 %v4787, 4294901760
    %v4789 = vsub.f32 %v4787, %v4788
    %v4790 = vand.u32 %v4789, 4294901760
    %4791 = vmatmul.f32.gmra.mxu0 %v4790
    %v4792 = vpop.f32.mrf.mxu0
    %v4793 = vadd.f32 %v4708, %v4792
    %v4794 = vand.u32 %v3031, 4294901760
    %v4795 = vsub.f32 %v3031, %v4794
    %v4796 = vand.u32 %v4795, 4294901760
    %v4797 = vsub.f32 %v4795, %v4796
    %v4798 = vand.u32 %v4797, 4294901760
    %4799 = vmatmul.f32.gmra.mxu0 %v4798
    %v4800 = vpop.f32.mrf.mxu0
    %v4801 = vadd.f32 %v4712, %v4800
    %v4802 = vand.u32 %v3035, 4294901760
    %v4803 = vsub.f32 %v3035, %v4802
    %v4804 = vand.u32 %v4803, 4294901760
    %v4805 = vsub.f32 %v4803, %v4804
    %v4806 = vand.u32 %v4805, 4294901760
    %4807 = vmatmul.f32.gmra.mxu0 %v4806
    %v4808 = vpop.f32.mrf.mxu0
    %v4809 = vadd.f32 %v4716, %v4808
    %v4810 = vand.u32 %v3039, 4294901760
    %v4811 = vsub.f32 %v3039, %v4810
    %v4812 = vand.u32 %v4811, 4294901760
    %v4813 = vsub.f32 %v4811, %v4812
    %v4814 = vand.u32 %v4813, 4294901760
    %4815 = vmatmul.f32.gmra.mxu0 %v4814
    %v4816 = vpop.f32.mrf.mxu0
    %v4817 = vadd.f32 %v4720, %v4816
    %4818 = vdwg.mxu0
    %v4819 = vand.u32 %v2552, 4294901760
    %v4820 = vsub.f32 %v2552, %v4819
    %v4821 = vand.u32 %v4820, 4294901760
    %v4822 = vsub.f32 %v4820, %v4821
    %v4823 = vand.u32 %v4822, 4294901760
    %4824 = vmatpush.msra.mxu0 %v4823
    %v4825 = vand.u32 %v2548, 4294901760
    %v4826 = vsub.f32 %v2548, %v4825
    %v4827 = vand.u32 %v4826, 4294901760
    %v4828 = vsub.f32 %v4826, %v4827
    %v4829 = vand.u32 %v4828, 4294901760
    %4830 = vmatpush.msra.mxu0 %v4829
    %v4831 = vand.u32 %v2544, 4294901760
    %v4832 = vsub.f32 %v2544, %v4831
    %v4833 = vand.u32 %v4832, 4294901760
    %v4834 = vsub.f32 %v4832, %v4833
    %v4835 = vand.u32 %v4834, 4294901760
    %4836 = vmatpush.msra.mxu0 %v4835
    %v4837 = vand.u32 %v2540, 4294901760
    %v4838 = vsub.f32 %v2540, %v4837
    %v4839 = vand.u32 %v4838, 4294901760
    %v4840 = vsub.f32 %v4838, %v4839
    %v4841 = vand.u32 %v4840, 4294901760
    %4842 = vmatpush.msra.mxu0 %v4841
    %v4843 = vand.u32 %v2536, 4294901760
    %v4844 = vsub.f32 %v2536, %v4843
    %v4845 = vand.u32 %v4844, 4294901760
    %v4846 = vsub.f32 %v4844, %v4845
    %v4847 = vand.u32 %v4846, 4294901760
    %4848 = vmatpush.msra.mxu0 %v4847
    %v4849 = vand.u32 %v2532, 4294901760
    %v4850 = vsub.f32 %v2532, %v4849
    %v4851 = vand.u32 %v4850, 4294901760
    %v4852 = vsub.f32 %v4850, %v4851
    %v4853 = vand.u32 %v4852, 4294901760
    %4854 = vmatpush.msra.mxu0 %v4853
    %v4855 = vand.u32 %v2528, 4294901760
    %v4856 = vsub.f32 %v2528, %v4855
    %v4857 = vand.u32 %v4856, 4294901760
    %v4858 = vsub.f32 %v4856, %v4857
    %v4859 = vand.u32 %v4858, 4294901760
    %4860 = vmatpush.msra.mxu0 %v4859
    %v4861 = vand.u32 %v2524, 4294901760
    %v4862 = vsub.f32 %v2524, %v4861
    %v4863 = vand.u32 %v4862, 4294901760
    %v4864 = vsub.f32 %v4862, %v4863
    %v4865 = vand.u32 %v4864, 4294901760
    %4866 = vmatpush.msra.mxu0 %v4865
    %v4867 = vand.u32 %v2520, 4294901760
    %v4868 = vsub.f32 %v2520, %v4867
    %v4869 = vand.u32 %v4868, 4294901760
    %v4870 = vsub.f32 %v4868, %v4869
    %v4871 = vand.u32 %v4870, 4294901760
    %4872 = vmatpush.msra.mxu0 %v4871
    %v4873 = vand.u32 %v2516, 4294901760
    %v4874 = vsub.f32 %v2516, %v4873
    %v4875 = vand.u32 %v4874, 4294901760
    %v4876 = vsub.f32 %v4874, %v4875
    %v4877 = vand.u32 %v4876, 4294901760
    %4878 = vmatpush.msra.mxu0 %v4877
    %v4879 = vand.u32 %v2512, 4294901760
    %v4880 = vsub.f32 %v2512, %v4879
    %v4881 = vand.u32 %v4880, 4294901760
    %v4882 = vsub.f32 %v4880, %v4881
    %v4883 = vand.u32 %v4882, 4294901760
    %4884 = vmatpush.msra.mxu0 %v4883
    %v4885 = vand.u32 %v2508, 4294901760
    %v4886 = vsub.f32 %v2508, %v4885
    %v4887 = vand.u32 %v4886, 4294901760
    %v4888 = vsub.f32 %v4886, %v4887
    %v4889 = vand.u32 %v4888, 4294901760
    %4890 = vmatpush.msra.mxu0 %v4889
    %v4891 = vand.u32 %v2504, 4294901760
    %v4892 = vsub.f32 %v2504, %v4891
    %v4893 = vand.u32 %v4892, 4294901760
    %v4894 = vsub.f32 %v4892, %v4893
    %v4895 = vand.u32 %v4894, 4294901760
    %4896 = vmatpush.msra.mxu0 %v4895
    %v4897 = vand.u32 %v2500, 4294901760
    %v4898 = vsub.f32 %v2500, %v4897
    %v4899 = vand.u32 %v4898, 4294901760
    %v4900 = vsub.f32 %v4898, %v4899
    %v4901 = vand.u32 %v4900, 4294901760
    %4902 = vmatpush.msra.mxu0 %v4901
    %v4903 = vand.u32 %v2496, 4294901760
    %v4904 = vsub.f32 %v2496, %v4903
    %v4905 = vand.u32 %v4904, 4294901760
    %v4906 = vsub.f32 %v4904, %v4905
    %v4907 = vand.u32 %v4906, 4294901760
    %4908 = vmatpush.msra.mxu0 %v4907
    %v4909 = vand.u32 %v2492, 4294901760
    %v4910 = vsub.f32 %v2492, %v4909
    %v4911 = vand.u32 %v4910, 4294901760
    %v4912 = vsub.f32 %v4910, %v4911
    %v4913 = vand.u32 %v4912, 4294901760
    %4914 = vmatpush.msra.mxu0 %v4913
    %v4915 = vand.u32 %v3011, 4294901760
    %4916 = vmatmul.f32.gmra.mxu0 %v4915
    %v4917 = vpop.f32.mrf.mxu0
    %v4918 = vadd.f32 %v4761, %v4917
    %v4919 = vand.u32 %v3015, 4294901760
    %4920 = vmatmul.f32.gmra.mxu0 %v4919
    %v4921 = vpop.f32.mrf.mxu0
    %v4922 = vadd.f32 %v4769, %v4921
    %v4923 = vand.u32 %v3019, 4294901760
    %4924 = vmatmul.f32.gmra.mxu0 %v4923
    %v4925 = vpop.f32.mrf.mxu0
    %v4926 = vadd.f32 %v4777, %v4925
    %v4927 = vand.u32 %v3023, 4294901760
    %4928 = vmatmul.f32.gmra.mxu0 %v4927
    %v4929 = vpop.f32.mrf.mxu0
    %v4930 = vadd.f32 %v4785, %v4929
    %v4931 = vand.u32 %v3027, 4294901760
    %4932 = vmatmul.f32.gmra.mxu0 %v4931
    %v4933 = vpop.f32.mrf.mxu0
    %v4934 = vadd.f32 %v4793, %v4933
    %v4935 = vand.u32 %v3031, 4294901760
    %4936 = vmatmul.f32.gmra.mxu0 %v4935
    %v4937 = vpop.f32.mrf.mxu0
    %v4938 = vadd.f32 %v4801, %v4937
    %v4939 = vand.u32 %v3035, 4294901760
    %4940 = vmatmul.f32.gmra.mxu0 %v4939
    %v4941 = vpop.f32.mrf.mxu0
    %v4942 = vadd.f32 %v4809, %v4941
    %v4943 = vand.u32 %v3039, 4294901760
    %4944 = vmatmul.f32.gmra.mxu0 %v4943
    %v4945 = vpop.f32.mrf.mxu0
    %v4946 = vadd.f32 %v4817, %v4945
    %4947 = vdwg.mxu0
    %v4948 = vand.u32 %v2552, 4294901760
    %v4949 = vsub.f32 %v2552, %v4948
    %4950 = vmatpush.msra.mxu0 %v4949
    %v4951 = vand.u32 %v2548, 4294901760
    %v4952 = vsub.f32 %v2548, %v4951
    %4953 = vmatpush.msra.mxu0 %v4952
    %v4954 = vand.u32 %v2544, 4294901760
    %v4955 = vsub.f32 %v2544, %v4954
    %4956 = vmatpush.msra.mxu0 %v4955
    %v4957 = vand.u32 %v2540, 4294901760
    %v4958 = vsub.f32 %v2540, %v4957
    %4959 = vmatpush.msra.mxu0 %v4958
    %v4960 = vand.u32 %v2536, 4294901760
    %v4961 = vsub.f32 %v2536, %v4960
    %4962 = vmatpush.msra.mxu0 %v4961
    %v4963 = vand.u32 %v2532, 4294901760
    %v4964 = vsub.f32 %v2532, %v4963
    %4965 = vmatpush.msra.mxu0 %v4964
    %v4966 = vand.u32 %v2528, 4294901760
    %v4967 = vsub.f32 %v2528, %v4966
    %4968 = vmatpush.msra.mxu0 %v4967
    %v4969 = vand.u32 %v2524, 4294901760
    %v4970 = vsub.f32 %v2524, %v4969
    %4971 = vmatpush.msra.mxu0 %v4970
    %v4972 = vand.u32 %v2520, 4294901760
    %v4973 = vsub.f32 %v2520, %v4972
    %4974 = vmatpush.msra.mxu0 %v4973
    %v4975 = vand.u32 %v2516, 4294901760
    %v4976 = vsub.f32 %v2516, %v4975
    %4977 = vmatpush.msra.mxu0 %v4976
    %v4978 = vand.u32 %v2512, 4294901760
    %v4979 = vsub.f32 %v2512, %v4978
    %4980 = vmatpush.msra.mxu0 %v4979
    %v4981 = vand.u32 %v2508, 4294901760
    %v4982 = vsub.f32 %v2508, %v4981
    %4983 = vmatpush.msra.mxu0 %v4982
    %v4984 = vand.u32 %v2504, 4294901760
    %v4985 = vsub.f32 %v2504, %v4984
    %4986 = vmatpush.msra.mxu0 %v4985
    %v4987 = vand.u32 %v2500, 4294901760
    %v4988 = vsub.f32 %v2500, %v4987
    %4989 = vmatpush.msra.mxu0 %v4988
    %v4990 = vand.u32 %v2496, 4294901760
    %v4991 = vsub.f32 %v2496, %v4990
    %4992 = vmatpush.msra.mxu0 %v4991
    %v4993 = vand.u32 %v2492, 4294901760
    %v4994 = vsub.f32 %v2492, %v4993
    %4995 = vmatpush.msra.mxu0 %v4994
    %v4996 = vand.u32 %v3011, 4294901760
    %v4997 = vsub.f32 %v3011, %v4996
    %4998 = vmatmul.f32.gmra.mxu0 %v4997
    %v4999 = vpop.f32.mrf.mxu0
    %v5000 = vadd.f32 %v4918, %v4999
    %v5001 = vand.u32 %v3015, 4294901760
    %v5002 = vsub.f32 %v3015, %v5001
    %5003 = vmatmul.f32.gmra.mxu0 %v5002
    %v5004 = vpop.f32.mrf.mxu0
    %v5005 = vadd.f32 %v4922, %v5004
    %v5006 = vand.u32 %v3019, 4294901760
    %v5007 = vsub.f32 %v3019, %v5006
    %5008 = vmatmul.f32.gmra.mxu0 %v5007
    %v5009 = vpop.f32.mrf.mxu0
    %v5010 = vadd.f32 %v4926, %v5009
    %v5011 = vand.u32 %v3023, 4294901760
    %v5012 = vsub.f32 %v3023, %v5011
    %5013 = vmatmul.f32.gmra.mxu0 %v5012
    %v5014 = vpop.f32.mrf.mxu0
    %v5015 = vadd.f32 %v4930, %v5014
    %v5016 = vand.u32 %v3027, 4294901760
    %v5017 = vsub.f32 %v3027, %v5016
    %5018 = vmatmul.f32.gmra.mxu0 %v5017
    %v5019 = vpop.f32.mrf.mxu0
    %v5020 = vadd.f32 %v4934, %v5019
    %v5021 = vand.u32 %v3031, 4294901760
    %v5022 = vsub.f32 %v3031, %v5021
    %5023 = vmatmul.f32.gmra.mxu0 %v5022
    %v5024 = vpop.f32.mrf.mxu0
    %v5025 = vadd.f32 %v4938, %v5024
    %v5026 = vand.u32 %v3035, 4294901760
    %v5027 = vsub.f32 %v3035, %v5026
    %5028 = vmatmul.f32.gmra.mxu0 %v5027
    %v5029 = vpop.f32.mrf.mxu0
    %v5030 = vadd.f32 %v4942, %v5029
    %v5031 = vand.u32 %v3039, 4294901760
    %v5032 = vsub.f32 %v3039, %v5031
    %5033 = vmatmul.f32.gmra.mxu0 %v5032
    %v5034 = vpop.f32.mrf.mxu0
    %v5035 = vadd.f32 %v4946, %v5034
    %5036 = vdwg.mxu0
    %v5037 = vand.u32 %v2552, 4294901760
    %5038 = vmatpush.msra.mxu0 %v5037
    %v5039 = vand.u32 %v2548, 4294901760
    %5040 = vmatpush.msra.mxu0 %v5039
    %v5041 = vand.u32 %v2544, 4294901760
    %5042 = vmatpush.msra.mxu0 %v5041
    %v5043 = vand.u32 %v2540, 4294901760
    %5044 = vmatpush.msra.mxu0 %v5043
    %v5045 = vand.u32 %v2536, 4294901760
    %5046 = vmatpush.msra.mxu0 %v5045
    %v5047 = vand.u32 %v2532, 4294901760
    %5048 = vmatpush.msra.mxu0 %v5047
    %v5049 = vand.u32 %v2528, 4294901760
    %5050 = vmatpush.msra.mxu0 %v5049
    %v5051 = vand.u32 %v2524, 4294901760
    %5052 = vmatpush.msra.mxu0 %v5051
    %v5053 = vand.u32 %v2520, 4294901760
    %5054 = vmatpush.msra.mxu0 %v5053
    %v5055 = vand.u32 %v2516, 4294901760
    %5056 = vmatpush.msra.mxu0 %v5055
    %v5057 = vand.u32 %v2512, 4294901760
    %5058 = vmatpush.msra.mxu0 %v5057
    %v5059 = vand.u32 %v2508, 4294901760
    %5060 = vmatpush.msra.mxu0 %v5059
    %v5061 = vand.u32 %v2504, 4294901760
    %5062 = vmatpush.msra.mxu0 %v5061
    %v5063 = vand.u32 %v2500, 4294901760
    %5064 = vmatpush.msra.mxu0 %v5063
    %v5065 = vand.u32 %v2496, 4294901760
    %5066 = vmatpush.msra.mxu0 %v5065
    %v5067 = vand.u32 %v2492, 4294901760
    %5068 = vmatpush.msra.mxu0 %v5067
    %v5069 = vand.u32 %v3011, 4294901760
    %v5070 = vsub.f32 %v3011, %v5069
    %v5071 = vand.u32 %v5070, 4294901760
    %5072 = vmatmul.f32.gmra.mxu0 %v5071
    %v5073 = vpop.f32.mrf.mxu0
    %v5074 = vadd.f32 %v5000, %v5073
    %v5075 = vand.u32 %v3015, 4294901760
    %v5076 = vsub.f32 %v3015, %v5075
    %v5077 = vand.u32 %v5076, 4294901760
    %5078 = vmatmul.f32.gmra.mxu0 %v5077
    %v5079 = vpop.f32.mrf.mxu0
    %v5080 = vadd.f32 %v5005, %v5079
    %v5081 = vand.u32 %v3019, 4294901760
    %v5082 = vsub.f32 %v3019, %v5081
    %v5083 = vand.u32 %v5082, 4294901760
    %5084 = vmatmul.f32.gmra.mxu0 %v5083
    %v5085 = vpop.f32.mrf.mxu0
    %v5086 = vadd.f32 %v5010, %v5085
    %v5087 = vand.u32 %v3023, 4294901760
    %v5088 = vsub.f32 %v3023, %v5087
    %v5089 = vand.u32 %v5088, 4294901760
    %5090 = vmatmul.f32.gmra.mxu0 %v5089
    %v5091 = vpop.f32.mrf.mxu0
    %v5092 = vadd.f32 %v5015, %v5091
    %v5093 = vand.u32 %v3027, 4294901760
    %v5094 = vsub.f32 %v3027, %v5093
    %v5095 = vand.u32 %v5094, 4294901760
    %5096 = vmatmul.f32.gmra.mxu0 %v5095
    %v5097 = vpop.f32.mrf.mxu0
    %v5098 = vadd.f32 %v5020, %v5097
    %v5099 = vand.u32 %v3031, 4294901760
    %v5100 = vsub.f32 %v3031, %v5099
    %v5101 = vand.u32 %v5100, 4294901760
    %5102 = vmatmul.f32.gmra.mxu0 %v5101
    %v5103 = vpop.f32.mrf.mxu0
    %v5104 = vadd.f32 %v5025, %v5103
    %v5105 = vand.u32 %v3035, 4294901760
    %v5106 = vsub.f32 %v3035, %v5105
    %v5107 = vand.u32 %v5106, 4294901760
    %5108 = vmatmul.f32.gmra.mxu0 %v5107
    %v5109 = vpop.f32.mrf.mxu0
    %v5110 = vadd.f32 %v5030, %v5109
    %v5111 = vand.u32 %v3039, 4294901760
    %v5112 = vsub.f32 %v3039, %v5111
    %v5113 = vand.u32 %v5112, 4294901760
    %5114 = vmatmul.f32.gmra.mxu0 %v5113
    %v5115 = vpop.f32.mrf.mxu0
    %v5116 = vadd.f32 %v5035, %v5115
    %5117 = vdwg.mxu0
    %v5118 = vand.u32 %v2552, 4294901760
    %v5119 = vsub.f32 %v2552, %v5118
    %v5120 = vand.u32 %v5119, 4294901760
    %5121 = vmatpush.msra.mxu0 %v5120
    %v5122 = vand.u32 %v2548, 4294901760
    %v5123 = vsub.f32 %v2548, %v5122
    %v5124 = vand.u32 %v5123, 4294901760
    %5125 = vmatpush.msra.mxu0 %v5124
    %v5126 = vand.u32 %v2544, 4294901760
    %v5127 = vsub.f32 %v2544, %v5126
    %v5128 = vand.u32 %v5127, 4294901760
    %5129 = vmatpush.msra.mxu0 %v5128
    %v5130 = vand.u32 %v2540, 4294901760
    %v5131 = vsub.f32 %v2540, %v5130
    %v5132 = vand.u32 %v5131, 4294901760
    %5133 = vmatpush.msra.mxu0 %v5132
    %v5134 = vand.u32 %v2536, 4294901760
    %v5135 = vsub.f32 %v2536, %v5134
    %v5136 = vand.u32 %v5135, 4294901760
    %5137 = vmatpush.msra.mxu0 %v5136
    %v5138 = vand.u32 %v2532, 4294901760
    %v5139 = vsub.f32 %v2532, %v5138
    %v5140 = vand.u32 %v5139, 4294901760
    %5141 = vmatpush.msra.mxu0 %v5140
    %v5142 = vand.u32 %v2528, 4294901760
    %v5143 = vsub.f32 %v2528, %v5142
    %v5144 = vand.u32 %v5143, 4294901760
    %5145 = vmatpush.msra.mxu0 %v5144
    %v5146 = vand.u32 %v2524, 4294901760
    %v5147 = vsub.f32 %v2524, %v5146
    %v5148 = vand.u32 %v5147, 4294901760
    %5149 = vmatpush.msra.mxu0 %v5148
    %v5150 = vand.u32 %v2520, 4294901760
    %v5151 = vsub.f32 %v2520, %v5150
    %v5152 = vand.u32 %v5151, 4294901760
    %5153 = vmatpush.msra.mxu0 %v5152
    %v5154 = vand.u32 %v2516, 4294901760
    %v5155 = vsub.f32 %v2516, %v5154
    %v5156 = vand.u32 %v5155, 4294901760
    %5157 = vmatpush.msra.mxu0 %v5156
    %v5158 = vand.u32 %v2512, 4294901760
    %v5159 = vsub.f32 %v2512, %v5158
    %v5160 = vand.u32 %v5159, 4294901760
    %5161 = vmatpush.msra.mxu0 %v5160
    %v5162 = vand.u32 %v2508, 4294901760
    %v5163 = vsub.f32 %v2508, %v5162
    %v5164 = vand.u32 %v5163, 4294901760
    %5165 = vmatpush.msra.mxu0 %v5164
    %v5166 = vand.u32 %v2504, 4294901760
    %v5167 = vsub.f32 %v2504, %v5166
    %v5168 = vand.u32 %v5167, 4294901760
    %5169 = vmatpush.msra.mxu0 %v5168
    %v5170 = vand.u32 %v2500, 4294901760
    %v5171 = vsub.f32 %v2500, %v5170
    %v5172 = vand.u32 %v5171, 4294901760
    %5173 = vmatpush.msra.mxu0 %v5172
    %v5174 = vand.u32 %v2496, 4294901760
    %v5175 = vsub.f32 %v2496, %v5174
    %v5176 = vand.u32 %v5175, 4294901760
    %5177 = vmatpush.msra.mxu0 %v5176
    %v5178 = vand.u32 %v2492, 4294901760
    %v5179 = vsub.f32 %v2492, %v5178
    %v5180 = vand.u32 %v5179, 4294901760
    %5181 = vmatpush.msra.mxu0 %v5180
    %v5182 = vand.u32 %v3011, 4294901760
    %5183 = vmatmul.f32.gmra.mxu0 %v5182
    %v5184 = vpop.f32.mrf.mxu0
    %v5185 = vadd.f32 %v5074, %v5184
    %v5186 = vand.u32 %v3015, 4294901760
    %5187 = vmatmul.f32.gmra.mxu0 %v5186
    %v5188 = vpop.f32.mrf.mxu0
    %v5189 = vadd.f32 %v5080, %v5188
    %v5190 = vand.u32 %v3019, 4294901760
    %5191 = vmatmul.f32.gmra.mxu0 %v5190
    %v5192 = vpop.f32.mrf.mxu0
    %v5193 = vadd.f32 %v5086, %v5192
    %v5194 = vand.u32 %v3023, 4294901760
    %5195 = vmatmul.f32.gmra.mxu0 %v5194
    %v5196 = vpop.f32.mrf.mxu0
    %v5197 = vadd.f32 %v5092, %v5196
    %v5198 = vand.u32 %v3027, 4294901760
    %5199 = vmatmul.f32.gmra.mxu0 %v5198
    %v5200 = vpop.f32.mrf.mxu0
    %v5201 = vadd.f32 %v5098, %v5200
    %v5202 = vand.u32 %v3031, 4294901760
    %5203 = vmatmul.f32.gmra.mxu0 %v5202
    %v5204 = vpop.f32.mrf.mxu0
    %v5205 = vadd.f32 %v5104, %v5204
    %v5206 = vand.u32 %v3035, 4294901760
    %5207 = vmatmul.f32.gmra.mxu0 %v5206
    %v5208 = vpop.f32.mrf.mxu0
    %v5209 = vadd.f32 %v5110, %v5208
    %v5210 = vand.u32 %v3039, 4294901760
    %5211 = vmatmul.f32.gmra.mxu0 %v5210
    %v5212 = vpop.f32.mrf.mxu0
    %v5213 = vadd.f32 %v5116, %v5212
    %5214 = vdwg.mxu0
    %v5215 = vand.u32 %v2552, 4294901760
    %5216 = vmatpush.msra.mxu0 %v5215
    %v5217 = vand.u32 %v2548, 4294901760
    %5218 = vmatpush.msra.mxu0 %v5217
    %v5219 = vand.u32 %v2544, 4294901760
    %5220 = vmatpush.msra.mxu0 %v5219
    %v5221 = vand.u32 %v2540, 4294901760
    %5222 = vmatpush.msra.mxu0 %v5221
    %v5223 = vand.u32 %v2536, 4294901760
    %5224 = vmatpush.msra.mxu0 %v5223
    %v5225 = vand.u32 %v2532, 4294901760
    %5226 = vmatpush.msra.mxu0 %v5225
    %v5227 = vand.u32 %v2528, 4294901760
    %5228 = vmatpush.msra.mxu0 %v5227
    %v5229 = vand.u32 %v2524, 4294901760
    %5230 = vmatpush.msra.mxu0 %v5229
    %v5231 = vand.u32 %v2520, 4294901760
    %5232 = vmatpush.msra.mxu0 %v5231
    %v5233 = vand.u32 %v2516, 4294901760
    %5234 = vmatpush.msra.mxu0 %v5233
    %v5235 = vand.u32 %v2512, 4294901760
    %5236 = vmatpush.msra.mxu0 %v5235
    %v5237 = vand.u32 %v2508, 4294901760
    %5238 = vmatpush.msra.mxu0 %v5237
    %v5239 = vand.u32 %v2504, 4294901760
    %5240 = vmatpush.msra.mxu0 %v5239
    %v5241 = vand.u32 %v2500, 4294901760
    %5242 = vmatpush.msra.mxu0 %v5241
    %v5243 = vand.u32 %v2496, 4294901760
    %5244 = vmatpush.msra.mxu0 %v5243
    %v5245 = vand.u32 %v2492, 4294901760
    %5246 = vmatpush.msra.mxu0 %v5245
    %v5247 = vand.u32 %v3011, 4294901760
    %5248 = vmatmul.f32.gmra.mxu0 %v5247
    %v5249 = vpop.f32.mrf.mxu0
    %v5250 = vadd.f32 %v5185, %v5249
    %v5251 = vand.u32 %v3015, 4294901760
    %5252 = vmatmul.f32.gmra.mxu0 %v5251
    %v5253 = vpop.f32.mrf.mxu0
    %v5254 = vadd.f32 %v5189, %v5253
    %v5255 = vand.u32 %v3019, 4294901760
    %5256 = vmatmul.f32.gmra.mxu0 %v5255
    %v5257 = vpop.f32.mrf.mxu0
    %v5258 = vadd.f32 %v5193, %v5257
    %v5259 = vand.u32 %v3023, 4294901760
    %5260 = vmatmul.f32.gmra.mxu0 %v5259
    %v5261 = vpop.f32.mrf.mxu0
    %v5262 = vadd.f32 %v5197, %v5261
    %v5263 = vand.u32 %v3027, 4294901760
    %5264 = vmatmul.f32.gmra.mxu0 %v5263
    %v5265 = vpop.f32.mrf.mxu0
    %v5266 = vadd.f32 %v5201, %v5265
    %v5267 = vand.u32 %v3031, 4294901760
    %5268 = vmatmul.f32.gmra.mxu0 %v5267
    %v5269 = vpop.f32.mrf.mxu0
    %v5270 = vadd.f32 %v5205, %v5269
    %v5271 = vand.u32 %v3035, 4294901760
    %5272 = vmatmul.f32.gmra.mxu0 %v5271
    %v5273 = vpop.f32.mrf.mxu0
    %v5274 = vadd.f32 %v5209, %v5273
    %v5275 = vand.u32 %v3039, 4294901760
    %5276 = vmatmul.f32.gmra.mxu0 %v5275
    %v5277 = vpop.f32.mrf.mxu0
    %v5278 = vadd.f32 %v5213, %v5277
    %5279 = vdwg.mxu0
    %v5280 = vadd.f32 %v3040, %v5250
    %v5281 = vadd.f32 %v3041, %v5254
    %v5282 = vadd.f32 %v3042, %v5258
    %v5283 = vadd.f32 %v3043, %v5262
    %v5284 = vadd.f32 %v3044, %v5266
    %v5285 = vadd.f32 %v3045, %v5270
    %v5286 = vadd.f32 %v3046, %v5274
    %v5287 = vadd.f32 %v3047, %v5278
    %5288 = vst [vmem:[#allocation10] sm:$0xff] %v5280
    %5289 = vst [vmem:[#allocation10 + $0x8] sm:$0xff] %v5281
    %5290 = vst [vmem:[#allocation10 + $0x10] sm:$0xff] %v5282
    %5291 = vst [vmem:[#allocation10 + $0x18] sm:$0xff] %v5283
    %5292 = vst [vmem:[#allocation10 + $0x20] sm:$0xff] %v5284
    %5293 = vst [vmem:[#allocation10 + $0x28] sm:$0xff] %v5285
    %5294 = vst [vmem:[#allocation10 + $0x30] sm:$0xff] %v5286
    %5295 = vst [vmem:[#allocation10 + $0x38] sm:$0xff] %v5287
    // Predicated region
    $region38: #{tpu_custom_call.1} parent=1 // pred_check
      _
    $region39: #{tpu_custom_call.1} parent=1 // pred_check_branch
      %5297 = sbr.rel (0) target = $region41
    $region40: #{tpu_custom_call.1} parent=1 // pred_region
      %5299 = vsyncadd [#allocation4], 0
      %s5300 = sshll.u32 [#allocation10], 4
      %s5301 = int_to_ptr.vmem [resolvable:$true] %s5300
      %s5302 = sshll.u32 %s4, 4
      %s5303 = int_to_ptr.hbm [resolvable:$true] %s5302
      %5308 = dma.vmem_to_hbm [thread:$0]  %s5301, 1024, %s5303, [#allocation4], 128, 128, 8
    $region41: #{tpu_custom_call.1} parent=1 // pred_fallthru
      _
    // Predicated region
    $region42: #{tpu_custom_call.1} parent=1 // pred_check
      _
    $region43: #{tpu_custom_call.1} parent=1 // pred_check_branch
      %5310 = sbr.rel (0) target = $region45
    $region44: #{tpu_custom_call.1} parent=1 // pred_region
      %5312 = dma.done [#allocation4], 1024
    $region45: #{tpu_custom_call.1} parent=1 // pred_fallthru
      _
    %5313 = vsyncpa [#allocation3], 1
    %5314 = vsyncpa [#allocation6], 1
    %5315 = vsyncpa [#allocation9], 1
    %5316 = vsyncpa [#allocation4], 1

</llo_original>
